<compile_context>
chip_gen: v7x
topology: tpu7x:2x2x1
jax: 0.10.0
libtpu: 0.0.40
codegen_flags: <defaults>
</compile_context>

<pallas_src>
import numpy as np
import jax
import jax.numpy as jnp
from jax.experimental import pallas as pl
from jax.experimental.pallas import tpu as pltpu

H = 256            # linear_size
NEG_SLOPE = 0.01   # nn.LeakyReLU default
BN_EPS = 1e-5      # nn.BatchNorm1d default
BLR_TANHLIMIT = 0.2

DIN_PAD = 128      # branch MLP input widths (93 / 111 / 93 / 93) padded lane-dense
DOUT_PAD = 128     # branch MLP output widths (60 / 9 / "hid" / 3) padded lane-dense
NUM_BRANCHES = 4   # BA, BL, RT_R, RT_T  (in this order on the stacked axis)
BR_BLK = 2         # branches per grid step
N_HIDDEN = 4       # 2 "Linear" stages x 2 inner (Linear+BN+LReLU) each
N_BN = 5           # total BatchNorm layers per branch

# ---------------------------------------------------------------------------
# Skeleton (H36M 16 joints / 15 bones, PoseAug/AdaptPose convention)
# ---------------------------------------------------------------------------
BONE_PARENTS = np.array([0, 1, 2, 0, 4, 5, 0, 7, 8, 8, 10, 11, 8, 13, 14])
BONE_CHILDREN = np.arange(1, 16)

# bones -> joints path matrix (inverse of the bone-vector map, root at origin)
_M = np.zeros((15, 16), np.float32)
for _b in range(15):
    _child = _b + 1
    _parent = BONE_PARENTS[_b]
    _M[:, _child] = _M[:, _parent]
    _M[_b, _child] = 1.0
BONES_TO_POSE = jnp.asarray(_M)

# 9 bone-length-ratio params -> 15 bones (symmetric limbs share a ratio)
BLR_9TO15 = np.array([0, 1, 2, 0, 1, 2, 3, 4, 5, 6, 7, 8, 6, 7, 8])


# ---------------------------------------------------------------------------
# Pallas kernel: fused 4-branch generator MLP, 2 branches per grid step
# ---------------------------------------------------------------------------
def _fused_mlp_kernel(x_ref, w1_ref, b1_ref, ws_ref, bs_ref, g_ref, bt_ref,
                      w2_ref, b2_ref, out_ref):
    def bn_lrelu(y, gamma, beta):
        # training-mode BatchNorm1d (per-call batch stats, biased variance),
        # single pass with folded affine; clamp var against f32 cancellation.
        m = jnp.mean(y, axis=0, keepdims=True)
        m2 = jnp.mean(y * y, axis=0, keepdims=True)
        var = jnp.maximum(m2 - m * m, 0.0)
        scale = gamma * jax.lax.rsqrt(var + BN_EPS)
        shift = beta - m * scale
        y = y * scale + shift
        y = jnp.maximum(y, NEG_SLOPE * y)            # LeakyReLU
        return y.astype(jnp.bfloat16)                # bf16 inter-layer activations

    def mm(a_bf16, w_bf16):
        # bf16 MXU matmul, f32 accumulation
        return jnp.dot(a_bf16, w_bf16, preferred_element_type=jnp.float32)

    for i in range(BR_BLK):                          # static unroll over local branches
        y = mm(x_ref[i].astype(jnp.bfloat16), w1_ref[i]) + b1_ref[i]
        y = bn_lrelu(y, g_ref[i, 0], bt_ref[i, 0])
        for j in range(N_HIDDEN):                    # static unroll
            y = mm(y, ws_ref[i, j]) + bs_ref[i, j]
            y = bn_lrelu(y, g_ref[i, j + 1], bt_ref[i, j + 1])

        if i == 0:
            # Global branch = 2*program_id + 0: BA (step 0) or RT_R (step 1).
            # The torch forward never applies w2_R to the RT_R hidden, so for
            # that branch we emit the hidden features (first DOUT_PAD cols)
            # and skip the w2 matmul entirely.
            is_rt_r = pl.program_id(0) == 1

            @pl.when(is_rt_r)
            def _(y=y):
                out_ref[0] = y[:, :DOUT_PAD].astype(out_ref.dtype)

            @pl.when(jnp.logical_not(is_rt_r))
            def _(y=y):
                out_ref[0] = (mm(y, w2_ref[0]) + b2_ref[0]).astype(out_ref.dtype)
        else:
            # Global branch = 2*program_id + 1: BL (step 0) or RT_T (step 1).
            out_ref[i] = (mm(y, w2_ref[i]) + b2_ref[i]).astype(out_ref.dtype)


def run_fused_mlp(x_all, pk):
    """x_all: (4, B, DIN_PAD) f32. Returns out (4, B, DOUT_PAD) f32.

    Branch 2 (RT_R) row holds the post-MLP hidden features (w2_R never used);
    other rows hold the w2 projection (padded to DOUT_PAD lanes)."""
    b = x_all.shape[1]

    def spec(*shape):
        nd = len(shape)
        return pl.BlockSpec((BR_BLK,) + shape,
                            lambda g, _nd=nd: (g,) + (0,) * _nd)

    flops = (2 * NUM_BRANCHES * b * (DIN_PAD * H + N_HIDDEN * H * H)
             + 2 * (NUM_BRANCHES - 1) * b * H * DOUT_PAD)
    bytes_accessed = int(
        (pk['w1'].size + pk['ws'].size + pk['w2'].size) * 2             # bf16 weights
        + (pk['b1'].size + pk['bs'].size + pk['gamma'].size
           + pk['beta'].size + pk['b2'].size) * 4                       # f32 affine params
        + (x_all.size + NUM_BRANCHES * b * DOUT_PAD) * 4)               # f32 activations

    out = pl.pallas_call(
        _fused_mlp_kernel,
        out_shape=jax.ShapeDtypeStruct((NUM_BRANCHES, b, DOUT_PAD), jnp.float32),
        grid=(NUM_BRANCHES // BR_BLK,),
        in_specs=[spec(b, DIN_PAD),
                  spec(DIN_PAD, H), spec(1, H),
                  spec(N_HIDDEN, H, H), spec(N_HIDDEN, 1, H),
                  spec(N_BN, 1, H), spec(N_BN, 1, H),
                  spec(H, DOUT_PAD), spec(1, DOUT_PAD)],
        out_specs=spec(b, DOUT_PAD),
        compiler_params=pltpu.CompilerParams(
            dimension_semantics=("parallel",)),       # 2 steps; 1 per TC on v7x
        cost_estimate=pl.CostEstimate(flops=flops,
                                      transcendentals=NUM_BRANCHES * N_BN * H,
                                      bytes_accessed=bytes_accessed),
    )(x_all, pk['w1'], pk['b1'], pk['ws'], pk['bs'], pk['gamma'], pk['beta'],
      pk['w2'], pk['b2'])
    return out


# ---------------------------------------------------------------------------
# Plain-JAX geometry glue (bone helpers, Rodrigues rotation)
# ---------------------------------------------------------------------------
def get_bone_vec(x):          # (..., 16, 3) -> (..., 15, 3)
    return x[..., BONE_CHILDREN, :] - x[..., BONE_PARENTS, :]


def get_bone_length(x):       # (..., 16, 3) -> (..., 15, 1)
    return jnp.linalg.norm(get_bone_vec(x), axis=-1, keepdims=True)


def get_bone_unit(x):         # (..., 16, 3) -> (..., 15, 3)
    bv = get_bone_vec(x)
    return bv / jnp.linalg.norm(bv, axis=-1, keepdims=True)


def get_pose_by_bone_vec(bones):   # (..., 15, 3) -> (..., 16, 3), root at 0
    return jnp.einsum('bj,...bc->...jc', BONES_TO_POSE, bones)


def _safe_normalize(v, axis=-1):
    # torch would NaN on an exactly-zero row; guard is a no-op otherwise
    n = jnp.linalg.norm(v, axis=axis, keepdims=True)
    return v / jnp.where(n < 1e-8, 1.0, n)


def axis_angle_to_matrix(aa):
    """Rodrigues formula, equivalent to pytorch3d.axis_angle_to_matrix."""
    angle = jnp.linalg.norm(aa, axis=-1, keepdims=True)
    ax = aa / jnp.where(angle < 1e-8, 1.0, angle)
    x, y, z = ax[..., 0], ax[..., 1], ax[..., 2]
    a = angle[..., 0]
    c, s = jnp.cos(a), jnp.sin(a)
    C = 1.0 - c
    r0 = jnp.stack([c + x * x * C, x * y * C - z * s, x * z * C + y * s], -1)
    r1 = jnp.stack([y * x * C + z * s, c + y * y * C, y * z * C - x * s], -1)
    r2 = jnp.stack([z * x * C - y * s, z * y * C + x * s, c + z * z * C], -1)
    return jnp.stack([r0, r1, r2], axis=-2)


def blaugment9to15(x, bl, blr):
    """x: (B,T,16,3), bl: (B,T,15,1), blr: (B,T,9,1) -> (B,T,16,3)."""
    blr15 = blr[..., BLR_9TO15, :]
    bl15 = bl * (1.0 + blr15)
    modified = get_bone_unit(x) * bl15
    return get_pose_by_bone_vec(modified) + x[..., :1, :]


# ---------------------------------------------------------------------------
# Full generator forward (all four branch MLPs in one fused Pallas call)
# ---------------------------------------------------------------------------
def pose_generator_forward(inputs_3d, target_2d, packed, key):
    del target_2d  # unused by the torch forward as well
    k_ba, k_bl, k_r, k_raxis, k_t = jax.random.split(key, 5)

    x5 = inputs_3d[:, 0]                          # (B, T, 16, 3)
    B, T = x5.shape[0], x5.shape[1]
    mid = (T - 1) // 2
    root = x5[:, :, :1, :]
    x = x5 - root                                 # root-relative per frame

    # --- branch MLP inputs: derive from inputs_3d + fresh noise only ---
    x_mid = x[:, mid].reshape(B, -1)              # (B, 48)
    bl_mid = get_bone_length(x)[:, mid, :, 0]     # (B, 15)

    noise_ba = jax.random.normal(k_ba, (B, 45), jnp.float32)
    noise_bl = jax.random.normal(k_bl, (B, 48), jnp.float32)
    noise_r = jax.random.normal(k_r, (B, 45), jnp.float32)
    noise_t = jax.random.normal(k_t, (B, 45), jnp.float32)

    def pad_lanes(a):
        return jnp.pad(a, ((0, 0), (0, DIN_PAD - a.shape[-1])))

    x_all = jnp.stack([
        pad_lanes(jnp.concatenate([x_mid, noise_ba], axis=-1)),            # BA   (93)
        pad_lanes(jnp.concatenate([x_mid, bl_mid, noise_bl], axis=-1)),    # BL   (111)
        pad_lanes(jnp.concatenate([x_mid, noise_r], axis=-1)),             # RT_R (93)
        pad_lanes(jnp.concatenate([x_mid, noise_t], axis=-1)),             # RT_T (93)
    ])                                            # (4, B, DIN_PAD)

    # The pallas_call only depends on x_all; geometry below does not depend on
    # it until the branch outputs are consumed, so XLA can overlap the two.
    out_all = run_fused_mlp(x_all, packed)

    # --- BA branch geometry ---
    bones_unit = get_bone_unit(x)                 # (B,T,15,3)
    bones_length = get_bone_length(x)             # (B,T,15,1)
    y = out_all[0, :, :60].reshape(B, -1, 4)      # (B,15,4)
    y_axis = _safe_normalize(y[:, :, :3])
    y_axis = jnp.broadcast_to(y_axis[:, None], (B, T, 15, 3))
    y_theta = y[:, :, 3:4][:, None] / T           # (B,1,15,1)
    t_idx = jnp.arange(T, dtype=jnp.float32)[None, :, None, None]
    y_theta = y_theta * t_idx                     # (B,T,15,1)
    rM = axis_angle_to_matrix(y_axis * y_theta)   # (B,T,15,3,3)
    modified_unit = jnp.matmul(rM, bones_unit[..., None])[..., 0]
    mask = jnp.ones((15,), jnp.float32).at[np.array([6, 7])].set(0.0)
    mask = mask[None, None, :, None]
    modified_unit = modified_unit * mask + bones_unit * (1.0 - mask)
    ba_diff = 1.0 - jnp.sum(modified_unit * bones_unit, axis=-1)
    pose_ba = get_pose_by_bone_vec(modified_unit * bones_length) + root

    # --- BL branch geometry ---
    mask9 = jnp.array([[1, 1, 1, 1, 0, 1, 1, 1, 1]], jnp.float32)
    blr = jnp.tanh(out_all[1, :, :9] * mask9) * BLR_TANHLIMIT
    blr_t = jnp.broadcast_to(blr[:, None], (B, T, 9))
    pose_bl = blaugment9to15(pose_ba, get_bone_length(pose_ba), blr_t[..., None])

    # --- RT branch geometry ---
    # TODO(synk): torch returns the full 256-dim RT_R hidden in rt[0]; per the
    # perf review we only materialize its first DOUT_PAD=128 columns (only
    # columns 0..6 are consumed by the forward pass).
    r = out_all[2]                                # (B, DOUT_PAD)
    r_mean = r[:, :3]
    r_std = r[:, 3:6] * r[:, 3:6]
    r_axis = r_mean + r_std * jax.random.normal(k_raxis, (B, 3), jnp.float32)
    r_axis = _safe_normalize(r_axis) * r[:, 6:7]
    rM_rt = axis_angle_to_matrix(r_axis)          # (B,3,3)

    t = out_all[3, :, :3]
    t = t.at[:, 2].set(t[:, 2] * t[:, 2])
    t = t.reshape(B, 1, 3)
    t_rep = jnp.broadcast_to(t[:, None], (B, T, 1, 3))

    augx0 = pose_bl - pose_bl[:, :, :1, :]
    augx_p = jnp.swapaxes(augx0, 2, 3)            # (B,T,3,16)
    rM_rep = jnp.broadcast_to(rM_rt[:, None], (B, T, 3, 3))
    augx_r = jnp.swapaxes(jnp.matmul(rM_rep, augx_p), 2, 3)
    pose_rt = augx_r + t_rep

    return {'pose_ba': pose_ba, 'ba_diff': ba_diff, 'pose_bl': pose_bl,
            'blr': blr_t, 'pose_rt': pose_rt, 'rt': (r, t_rep)}


# ---------------------------------------------------------------------------
# Deterministic parameter init (synthetic; matches module shapes) + packing
# ---------------------------------------------------------------------------
def init_mlp_params(key, din, dout):
    ks = jax.random.split(key, 8)
    p = {
        'w1': jax.random.normal(ks[0], (din, H)) / np.sqrt(din),
        'b1': 0.01 * jax.random.normal(ks[1], (1, H)),
        'ws': jax.random.normal(ks[2], (N_HIDDEN, H, H)) / np.sqrt(H),
        'bs': 0.01 * jax.random.normal(ks[3], (N_HIDDEN, 1, H)),
        'gamma': 1.0 + 0.01 * jax.random.normal(ks[4], (N_BN, 1, H)),
        'beta': 0.01 * jax.random.normal(ks[5], (N_BN, 1, H)),
        'w2': jax.random.normal(ks[6], (H, dout)) / np.sqrt(H),
        'b2': 0.01 * jax.random.normal(ks[7], (1, dout)),
    }
    return jax.tree.map(lambda a: a.astype(jnp.float32), p)


def pack_params(per_branch):
    """Stack BA/BL/RT_R/RT_T params, zero-pad din->128 / dout->128, weights->bf16."""
    order = ('BA', 'BL', 'RT_R', 'RT_T')
    ps = [per_branch[k] for k in order]

    def pad_axis(a, axis, size):
        pad = size - a.shape[axis]
        if pad == 0:
            return a
        widths = [(0, 0)] * a.ndim
        widths[axis] = (0, pad)
        return jnp.pad(a, widths)

    return {
        'w1': jnp.stack([pad_axis(p['w1'], 0, DIN_PAD) for p in ps]).astype(jnp.bfloat16),
        'b1': jnp.stack([p['b1'] for p in ps]),
        'ws': jnp.stack([p['ws'] for p in ps]).astype(jnp.bfloat16),
        'bs': jnp.stack([p['bs'] for p in ps]),
        'gamma': jnp.stack([p['gamma'] for p in ps]),
        'beta': jnp.stack([p['beta'] for p in ps]),
        'w2': jnp.stack([pad_axis(p['w2'], 1, DOUT_PAD) for p in ps]).astype(jnp.bfloat16),
        'b2': jnp.stack([pad_axis(p['b2'], 1, DOUT_PAD) for p in ps]),
    }


if __name__ == "__main__":
    key = jax.random.PRNGKey(0)
    k_in, k_2d, k_ba, k_bl, k_r, k_t, k_noise = jax.random.split(key, 7)

    B, T = 4, 5   # small shapes: batch=4, 5 frames (odd -> middle frame 2)
    inputs_3d = 0.1 * jax.random.normal(k_in, (B, 1, T, 16, 3), jnp.float32)
    target_2d = jax.random.normal(k_2d, (B, 1, T, 16, 2), jnp.float32)

    params = {
        'BA':   init_mlp_params(k_ba, 48 + 45, 60),        # w2: 48 - 3 + 15
        'BL':   init_mlp_params(k_bl, 48 + 15 + 48, 9),
        'RT_R': init_mlp_params(k_r, 48 + 45, 7),          # w2_R unused (as in torch)
        'RT_T': init_mlp_params(k_t, 48 + 45, 3),
    }
    packed = pack_params(params)

    fwd = jax.jit(pose_generator_forward)
    out = fwd(inputs_3d, target_2d, packed, k_noise)
    jax.block_until_ready(out)

    assert out['pose_ba'].shape == (B, T, 16, 3)
    assert out['ba_diff'].shape == (B, T, 15)
    assert out['pose_bl'].shape == (B, T, 16, 3)
    assert out['blr'].shape == (B, T, 9)
    assert out['pose_rt'].shape == (B, T, 16, 3)
    assert out['rt'][0].shape == (B, DOUT_PAD) and out['rt'][1].shape == (B, T, 1, 3)
    assert all(bool(jnp.all(jnp.isfinite(v)))
               for v in (out['pose_ba'], out['pose_bl'], out['pose_rt']))
    print("KERNEL_OK")
</pallas_src>

<mosaic_0001>
module attributes {stable_mosaic.version = 11 : i64} {
  func.func @_fused_mlp_kernel(%arg0: i32, %arg1: memref<2x4x128xf32, #tpu.memory_space<vmem>>, %arg2: memref<2x128x256xbf16, #tpu.memory_space<vmem>>, %arg3: memref<2x1x256xf32, #tpu.memory_space<vmem>>, %arg4: memref<2x4x256x256xbf16, #tpu.memory_space<vmem>>, %arg5: memref<2x4x1x256xf32, #tpu.memory_space<vmem>>, %arg6: memref<2x5x1x256xf32, #tpu.memory_space<vmem>>, %arg7: memref<2x5x1x256xf32, #tpu.memory_space<vmem>>, %arg8: memref<2x256x128xbf16, #tpu.memory_space<vmem>>, %arg9: memref<2x1x128xf32, #tpu.memory_space<vmem>>, %arg10: memref<2x4x128xf32, #tpu.memory_space<vmem>>) attributes {dimension_semantics = [#tpu.dimension_semantics<parallel>], iteration_bounds = array<i64: 2>, scalar_prefetch = 0 : i64, scratch_operands = 0 : i64, tpu.core_type = #tpu.core_type<tc>, window_params = [{transform_indices = @transform_0, window_bounds = array<i64: 2, 4, 128>}, {transform_indices = @transform_1, window_bounds = array<i64: 2, 128, 256>}, {transform_indices = @transform_2, window_bounds = array<i64: 2, 1, 256>}, {transform_indices = @transform_3, window_bounds = array<i64: 2, 4, 256, 256>}, {transform_indices = @transform_4, window_bounds = array<i64: 2, 4, 1, 256>}, {transform_indices = @transform_5, window_bounds = array<i64: 2, 5, 1, 256>}, {transform_indices = @transform_6, window_bounds = array<i64: 2, 5, 1, 256>}, {transform_indices = @transform_7, window_bounds = array<i64: 2, 256, 128>}, {transform_indices = @transform_8, window_bounds = array<i64: 2, 1, 128>}, {transform_indices = @transform_9, window_bounds = array<i64: 2, 4, 128>}]} {
    %c0 = arith.constant 0 : index
    %c0_0 = arith.constant 0 : index
    %c0_1 = arith.constant 0 : index
    %0 = vector.load %arg1[%c0, %c0_0, %c0_1] : memref<2x4x128xf32, #tpu.memory_space<vmem>>, vector<1x4x128xf32>
    %1 = vector.shape_cast %0 : vector<1x4x128xf32> to vector<4x128xf32>
    %2 = arith.truncf %1 : vector<4x128xf32> to vector<4x128xbf16>
    %c0_2 = arith.constant 0 : index
    %c0_3 = arith.constant 0 : index
    %c0_4 = arith.constant 0 : index
    %3 = vector.load %arg2[%c0_2, %c0_3, %c0_4] : memref<2x128x256xbf16, #tpu.memory_space<vmem>>, vector<1x128x256xbf16>
    %4 = vector.shape_cast %3 : vector<1x128x256xbf16> to vector<128x256xbf16>
    %cst = arith.constant dense<0.000000e+00> : vector<4x256xf32>
    %5 = tpu.matmul %2, %4, %cst {dimension_numbers = #tpu.dot_dimension_numbers<[1], [0], [0], [1], [0, 0, 1, 1], [], []>} : vector<4x128xbf16>, vector<128x256xbf16>, vector<4x256xf32> -> vector<4x256xf32>
    %c0_5 = arith.constant 0 : index
    %c0_6 = arith.constant 0 : index
    %c0_7 = arith.constant 0 : index
    %6 = vector.load %arg3[%c0_5, %c0_6, %c0_7] : memref<2x1x256xf32, #tpu.memory_space<vmem>>, vector<1x1x256xf32>
    %7 = vector.shape_cast %6 : vector<1x1x256xf32> to vector<1x256xf32>
    %8 = vector.broadcast %7 : vector<1x256xf32> to vector<4x256xf32>
    %9 = arith.addf %5, %8 : vector<4x256xf32>
    %c0_8 = arith.constant 0 : index
    %c0_9 = arith.constant 0 : index
    %c0_10 = arith.constant 0 : index
    %c0_11 = arith.constant 0 : index
    %10 = vector.load %arg6[%c0_8, %c0_9, %c0_10, %c0_11] : memref<2x5x1x256xf32, #tpu.memory_space<vmem>>, vector<1x1x1x256xf32>
    %11 = vector.shape_cast %10 : vector<1x1x1x256xf32> to vector<1x256xf32>
    %c0_12 = arith.constant 0 : index
    %c0_13 = arith.constant 0 : index
    %c0_14 = arith.constant 0 : index
    %c0_15 = arith.constant 0 : index
    %12 = vector.load %arg7[%c0_12, %c0_13, %c0_14, %c0_15] : memref<2x5x1x256xf32, #tpu.memory_space<vmem>>, vector<1x1x1x256xf32>
    %13 = vector.shape_cast %12 : vector<1x1x1x256xf32> to vector<1x256xf32>
    %cst_16 = arith.constant dense<0.000000e+00> : vector<256xf32>
    %14 = vector.multi_reduction <add>, %9, %cst_16 [0] : vector<4x256xf32> to vector<256xf32>
    %15 = vector.shape_cast %14 : vector<256xf32> to vector<1x256xf32>
    %cst_17 = arith.constant 4.000000e+00 : f32
    %16 = vector.broadcast %cst_17 : f32 to vector<1x256xf32>
    %17 = arith.divf %15, %16 : vector<1x256xf32>
    %18 = arith.mulf %9, %9 : vector<4x256xf32>
    %cst_18 = arith.constant dense<0.000000e+00> : vector<256xf32>
    %19 = vector.multi_reduction <add>, %18, %cst_18 [0] : vector<4x256xf32> to vector<256xf32>
    %20 = vector.shape_cast %19 : vector<256xf32> to vector<1x256xf32>
    %cst_19 = arith.constant 4.000000e+00 : f32
    %21 = vector.broadcast %cst_19 : f32 to vector<1x256xf32>
    %22 = arith.divf %20, %21 : vector<1x256xf32>
    %23 = arith.mulf %17, %17 : vector<1x256xf32>
    %24 = arith.subf %22, %23 : vector<1x256xf32>
    %cst_20 = arith.constant 0.000000e+00 : f32
    %25 = vector.broadcast %cst_20 : f32 to vector<1x256xf32>
    %26 = arith.maximumf %24, %25 : vector<1x256xf32>
    %cst_21 = arith.constant 9.99999974E-6 : f32
    %27 = vector.broadcast %cst_21 : f32 to vector<1x256xf32>
    %28 = arith.addf %26, %27 : vector<1x256xf32>
    %29 = math.rsqrt %28 : vector<1x256xf32>
    %30 = arith.mulf %11, %29 : vector<1x256xf32>
    %31 = arith.mulf %17, %30 : vector<1x256xf32>
    %32 = arith.subf %13, %31 : vector<1x256xf32>
    %33 = vector.broadcast %30 : vector<1x256xf32> to vector<4x256xf32>
    %34 = arith.mulf %9, %33 : vector<4x256xf32>
    %35 = vector.broadcast %32 : vector<1x256xf32> to vector<4x256xf32>
    %36 = arith.addf %34, %35 : vector<4x256xf32>
    %cst_22 = arith.constant 0.00999999977 : f32
    %37 = vector.broadcast %cst_22 : f32 to vector<4x256xf32>
    %38 = arith.mulf %37, %36 : vector<4x256xf32>
    %39 = arith.maximumf %36, %38 : vector<4x256xf32>
    %40 = arith.truncf %39 : vector<4x256xf32> to vector<4x256xbf16>
    %c0_23 = arith.constant 0 : index
    %c0_24 = arith.constant 0 : index
    %c0_25 = arith.constant 0 : index
    %c0_26 = arith.constant 0 : index
    %41 = vector.load %arg4[%c0_23, %c0_24, %c0_25, %c0_26] : memref<2x4x256x256xbf16, #tpu.memory_space<vmem>>, vector<1x1x256x256xbf16>
    %42 = vector.shape_cast %41 : vector<1x1x256x256xbf16> to vector<256x256xbf16>
    %cst_27 = arith.constant dense<0.000000e+00> : vector<4x256xf32>
    %43 = tpu.matmul %40, %42, %cst_27 {dimension_numbers = #tpu.dot_dimension_numbers<[1], [0], [0], [1], [0, 0, 1, 1], [], []>} : vector<4x256xbf16>, vector<256x256xbf16>, vector<4x256xf32> -> vector<4x256xf32>
    %c0_28 = arith.constant 0 : index
    %c0_29 = arith.constant 0 : index
    %c0_30 = arith.constant 0 : index
    %c0_31 = arith.constant 0 : index
    %44 = vector.load %arg5[%c0_28, %c0_29, %c0_30, %c0_31] : memref<2x4x1x256xf32, #tpu.memory_space<vmem>>, vector<1x1x1x256xf32>
    %45 = vector.shape_cast %44 : vector<1x1x1x256xf32> to vector<1x256xf32>
    %46 = vector.broadcast %45 : vector<1x256xf32> to vector<4x256xf32>
    %47 = arith.addf %43, %46 : vector<4x256xf32>
    %c0_32 = arith.constant 0 : index
    %c1 = arith.constant 1 : index
    %c0_33 = arith.constant 0 : index
    %c0_34 = arith.constant 0 : index
    %48 = vector.load %arg6[%c0_32, %c1, %c0_33, %c0_34] : memref<2x5x1x256xf32, #tpu.memory_space<vmem>>, vector<1x1x1x256xf32>
    %49 = vector.shape_cast %48 : vector<1x1x1x256xf32> to vector<1x256xf32>
    %c0_35 = arith.constant 0 : index
    %c1_36 = arith.constant 1 : index
    %c0_37 = arith.constant 0 : index
    %c0_38 = arith.constant 0 : index
    %50 = vector.load %arg7[%c0_35, %c1_36, %c0_37, %c0_38] : memref<2x5x1x256xf32, #tpu.memory_space<vmem>>, vector<1x1x1x256xf32>
    %51 = vector.shape_cast %50 : vector<1x1x1x256xf32> to vector<1x256xf32>
    %cst_39 = arith.constant dense<0.000000e+00> : vector<256xf32>
    %52 = vector.multi_reduction <add>, %47, %cst_39 [0] : vector<4x256xf32> to vector<256xf32>
    %53 = vector.shape_cast %52 : vector<256xf32> to vector<1x256xf32>
    %cst_40 = arith.constant 4.000000e+00 : f32
    %54 = vector.broadcast %cst_40 : f32 to vector<1x256xf32>
    %55 = arith.divf %53, %54 : vector<1x256xf32>
    %56 = arith.mulf %47, %47 : vector<4x256xf32>
    %cst_41 = arith.constant dense<0.000000e+00> : vector<256xf32>
    %57 = vector.multi_reduction <add>, %56, %cst_41 [0] : vector<4x256xf32> to vector<256xf32>
    %58 = vector.shape_cast %57 : vector<256xf32> to vector<1x256xf32>
    %cst_42 = arith.constant 4.000000e+00 : f32
    %59 = vector.broadcast %cst_42 : f32 to vector<1x256xf32>
    %60 = arith.divf %58, %59 : vector<1x256xf32>
    %61 = arith.mulf %55, %55 : vector<1x256xf32>
    %62 = arith.subf %60, %61 : vector<1x256xf32>
    %cst_43 = arith.constant 0.000000e+00 : f32
    %63 = vector.broadcast %cst_43 : f32 to vector<1x256xf32>
    %64 = arith.maximumf %62, %63 : vector<1x256xf32>
    %cst_44 = arith.constant 9.99999974E-6 : f32
    %65 = vector.broadcast %cst_44 : f32 to vector<1x256xf32>
    %66 = arith.addf %64, %65 : vector<1x256xf32>
    %67 = math.rsqrt %66 : vector<1x256xf32>
    %68 = arith.mulf %49, %67 : vector<1x256xf32>
    %69 = arith.mulf %55, %68 : vector<1x256xf32>
    %70 = arith.subf %51, %69 : vector<1x256xf32>
    %71 = vector.broadcast %68 : vector<1x256xf32> to vector<4x256xf32>
    %72 = arith.mulf %47, %71 : vector<4x256xf32>
    %73 = vector.broadcast %70 : vector<1x256xf32> to vector<4x256xf32>
    %74 = arith.addf %72, %73 : vector<4x256xf32>
    %cst_45 = arith.constant 0.00999999977 : f32
    %75 = vector.broadcast %cst_45 : f32 to vector<4x256xf32>
    %76 = arith.mulf %75, %74 : vector<4x256xf32>
    %77 = arith.maximumf %74, %76 : vector<4x256xf32>
    %78 = arith.truncf %77 : vector<4x256xf32> to vector<4x256xbf16>
    %c0_46 = arith.constant 0 : index
    %c1_47 = arith.constant 1 : index
    %c0_48 = arith.constant 0 : index
    %c0_49 = arith.constant 0 : index
    %79 = vector.load %arg4[%c0_46, %c1_47, %c0_48, %c0_49] : memref<2x4x256x256xbf16, #tpu.memory_space<vmem>>, vector<1x1x256x256xbf16>
    %80 = vector.shape_cast %79 : vector<1x1x256x256xbf16> to vector<256x256xbf16>
    %cst_50 = arith.constant dense<0.000000e+00> : vector<4x256xf32>
    %81 = tpu.matmul %78, %80, %cst_50 {dimension_numbers = #tpu.dot_dimension_numbers<[1], [0], [0], [1], [0, 0, 1, 1], [], []>} : vector<4x256xbf16>, vector<256x256xbf16>, vector<4x256xf32> -> vector<4x256xf32>
    %c0_51 = arith.constant 0 : index
    %c1_52 = arith.constant 1 : index
    %c0_53 = arith.constant 0 : index
    %c0_54 = arith.constant 0 : index
    %82 = vector.load %arg5[%c0_51, %c1_52, %c0_53, %c0_54] : memref<2x4x1x256xf32, #tpu.memory_space<vmem>>, vector<1x1x1x256xf32>
    %83 = vector.shape_cast %82 : vector<1x1x1x256xf32> to vector<1x256xf32>
    %84 = vector.broadcast %83 : vector<1x256xf32> to vector<4x256xf32>
    %85 = arith.addf %81, %84 : vector<4x256xf32>
    %c0_55 = arith.constant 0 : index
    %c2 = arith.constant 2 : index
    %c0_56 = arith.constant 0 : index
    %c0_57 = arith.constant 0 : index
    %86 = vector.load %arg6[%c0_55, %c2, %c0_56, %c0_57] : memref<2x5x1x256xf32, #tpu.memory_space<vmem>>, vector<1x1x1x256xf32>
    %87 = vector.shape_cast %86 : vector<1x1x1x256xf32> to vector<1x256xf32>
    %c0_58 = arith.constant 0 : index
    %c2_59 = arith.constant 2 : index
    %c0_60 = arith.constant 0 : index
    %c0_61 = arith.constant 0 : index
    %88 = vector.load %arg7[%c0_58, %c2_59, %c0_60, %c0_61] : memref<2x5x1x256xf32, #tpu.memory_space<vmem>>, vector<1x1x1x256xf32>
    %89 = vector.shape_cast %88 : vector<1x1x1x256xf32> to vector<1x256xf32>
    %cst_62 = arith.constant dense<0.000000e+00> : vector<256xf32>
    %90 = vector.multi_reduction <add>, %85, %cst_62 [0] : vector<4x256xf32> to vector<256xf32>
    %91 = vector.shape_cast %90 : vector<256xf32> to vector<1x256xf32>
    %cst_63 = arith.constant 4.000000e+00 : f32
    %92 = vector.broadcast %cst_63 : f32 to vector<1x256xf32>
    %93 = arith.divf %91, %92 : vector<1x256xf32>
    %94 = arith.mulf %85, %85 : vector<4x256xf32>
    %cst_64 = arith.constant dense<0.000000e+00> : vector<256xf32>
    %95 = vector.multi_reduction <add>, %94, %cst_64 [0] : vector<4x256xf32> to vector<256xf32>
    %96 = vector.shape_cast %95 : vector<256xf32> to vector<1x256xf32>
    %cst_65 = arith.constant 4.000000e+00 : f32
    %97 = vector.broadcast %cst_65 : f32 to vector<1x256xf32>
    %98 = arith.divf %96, %97 : vector<1x256xf32>
    %99 = arith.mulf %93, %93 : vector<1x256xf32>
    %100 = arith.subf %98, %99 : vector<1x256xf32>
    %cst_66 = arith.constant 0.000000e+00 : f32
    %101 = vector.broadcast %cst_66 : f32 to vector<1x256xf32>
    %102 = arith.maximumf %100, %101 : vector<1x256xf32>
    %cst_67 = arith.constant 9.99999974E-6 : f32
    %103 = vector.broadcast %cst_67 : f32 to vector<1x256xf32>
    %104 = arith.addf %102, %103 : vector<1x256xf32>
    %105 = math.rsqrt %104 : vector<1x256xf32>
    %106 = arith.mulf %87, %105 : vector<1x256xf32>
    %107 = arith.mulf %93, %106 : vector<1x256xf32>
    %108 = arith.subf %89, %107 : vector<1x256xf32>
    %109 = vector.broadcast %106 : vector<1x256xf32> to vector<4x256xf32>
    %110 = arith.mulf %85, %109 : vector<4x256xf32>
    %111 = vector.broadcast %108 : vector<1x256xf32> to vector<4x256xf32>
    %112 = arith.addf %110, %111 : vector<4x256xf32>
    %cst_68 = arith.constant 0.00999999977 : f32
    %113 = vector.broadcast %cst_68 : f32 to vector<4x256xf32>
    %114 = arith.mulf %113, %112 : vector<4x256xf32>
    %115 = arith.maximumf %112, %114 : vector<4x256xf32>
    %116 = arith.truncf %115 : vector<4x256xf32> to vector<4x256xbf16>
    %c0_69 = arith.constant 0 : index
    %c2_70 = arith.constant 2 : index
    %c0_71 = arith.constant 0 : index
    %c0_72 = arith.constant 0 : index
    %117 = vector.load %arg4[%c0_69, %c2_70, %c0_71, %c0_72] : memref<2x4x256x256xbf16, #tpu.memory_space<vmem>>, vector<1x1x256x256xbf16>
    %118 = vector.shape_cast %117 : vector<1x1x256x256xbf16> to vector<256x256xbf16>
    %cst_73 = arith.constant dense<0.000000e+00> : vector<4x256xf32>
    %119 = tpu.matmul %116, %118, %cst_73 {dimension_numbers = #tpu.dot_dimension_numbers<[1], [0], [0], [1], [0, 0, 1, 1], [], []>} : vector<4x256xbf16>, vector<256x256xbf16>, vector<4x256xf32> -> vector<4x256xf32>
    %c0_74 = arith.constant 0 : index
    %c2_75 = arith.constant 2 : index
    %c0_76 = arith.constant 0 : index
    %c0_77 = arith.constant 0 : index
    %120 = vector.load %arg5[%c0_74, %c2_75, %c0_76, %c0_77] : memref<2x4x1x256xf32, #tpu.memory_space<vmem>>, vector<1x1x1x256xf32>
    %121 = vector.shape_cast %120 : vector<1x1x1x256xf32> to vector<1x256xf32>
    %122 = vector.broadcast %121 : vector<1x256xf32> to vector<4x256xf32>
    %123 = arith.addf %119, %122 : vector<4x256xf32>
    %c0_78 = arith.constant 0 : index
    %c3 = arith.constant 3 : index
    %c0_79 = arith.constant 0 : index
    %c0_80 = arith.constant 0 : index
    %124 = vector.load %arg6[%c0_78, %c3, %c0_79, %c0_80] : memref<2x5x1x256xf32, #tpu.memory_space<vmem>>, vector<1x1x1x256xf32>
    %125 = vector.shape_cast %124 : vector<1x1x1x256xf32> to vector<1x256xf32>
    %c0_81 = arith.constant 0 : index
    %c3_82 = arith.constant 3 : index
    %c0_83 = arith.constant 0 : index
    %c0_84 = arith.constant 0 : index
    %126 = vector.load %arg7[%c0_81, %c3_82, %c0_83, %c0_84] : memref<2x5x1x256xf32, #tpu.memory_space<vmem>>, vector<1x1x1x256xf32>
    %127 = vector.shape_cast %126 : vector<1x1x1x256xf32> to vector<1x256xf32>
    %cst_85 = arith.constant dense<0.000000e+00> : vector<256xf32>
    %128 = vector.multi_reduction <add>, %123, %cst_85 [0] : vector<4x256xf32> to vector<256xf32>
    %129 = vector.shape_cast %128 : vector<256xf32> to vector<1x256xf32>
    %cst_86 = arith.constant 4.000000e+00 : f32
    %130 = vector.broadcast %cst_86 : f32 to vector<1x256xf32>
    %131 = arith.divf %129, %130 : vector<1x256xf32>
    %132 = arith.mulf %123, %123 : vector<4x256xf32>
    %cst_87 = arith.constant dense<0.000000e+00> : vector<256xf32>
    %133 = vector.multi_reduction <add>, %132, %cst_87 [0] : vector<4x256xf32> to vector<256xf32>
    %134 = vector.shape_cast %133 : vector<256xf32> to vector<1x256xf32>
    %cst_88 = arith.constant 4.000000e+00 : f32
    %135 = vector.broadcast %cst_88 : f32 to vector<1x256xf32>
    %136 = arith.divf %134, %135 : vector<1x256xf32>
    %137 = arith.mulf %131, %131 : vector<1x256xf32>
    %138 = arith.subf %136, %137 : vector<1x256xf32>
    %cst_89 = arith.constant 0.000000e+00 : f32
    %139 = vector.broadcast %cst_89 : f32 to vector<1x256xf32>
    %140 = arith.maximumf %138, %139 : vector<1x256xf32>
    %cst_90 = arith.constant 9.99999974E-6 : f32
    %141 = vector.broadcast %cst_90 : f32 to vector<1x256xf32>
    %142 = arith.addf %140, %141 : vector<1x256xf32>
    %143 = math.rsqrt %142 : vector<1x256xf32>
    %144 = arith.mulf %125, %143 : vector<1x256xf32>
    %145 = arith.mulf %131, %144 : vector<1x256xf32>
    %146 = arith.subf %127, %145 : vector<1x256xf32>
    %147 = vector.broadcast %144 : vector<1x256xf32> to vector<4x256xf32>
    %148 = arith.mulf %123, %147 : vector<4x256xf32>
    %149 = vector.broadcast %146 : vector<1x256xf32> to vector<4x256xf32>
    %150 = arith.addf %148, %149 : vector<4x256xf32>
    %cst_91 = arith.constant 0.00999999977 : f32
    %151 = vector.broadcast %cst_91 : f32 to vector<4x256xf32>
    %152 = arith.mulf %151, %150 : vector<4x256xf32>
    %153 = arith.maximumf %150, %152 : vector<4x256xf32>
    %154 = arith.truncf %153 : vector<4x256xf32> to vector<4x256xbf16>
    %c0_92 = arith.constant 0 : index
    %c3_93 = arith.constant 3 : index
    %c0_94 = arith.constant 0 : index
    %c0_95 = arith.constant 0 : index
    %155 = vector.load %arg4[%c0_92, %c3_93, %c0_94, %c0_95] : memref<2x4x256x256xbf16, #tpu.memory_space<vmem>>, vector<1x1x256x256xbf16>
    %156 = vector.shape_cast %155 : vector<1x1x256x256xbf16> to vector<256x256xbf16>
    %cst_96 = arith.constant dense<0.000000e+00> : vector<4x256xf32>
    %157 = tpu.matmul %154, %156, %cst_96 {dimension_numbers = #tpu.dot_dimension_numbers<[1], [0], [0], [1], [0, 0, 1, 1], [], []>} : vector<4x256xbf16>, vector<256x256xbf16>, vector<4x256xf32> -> vector<4x256xf32>
    %c0_97 = arith.constant 0 : index
    %c3_98 = arith.constant 3 : index
    %c0_99 = arith.constant 0 : index
    %c0_100 = arith.constant 0 : index
    %158 = vector.load %arg5[%c0_97, %c3_98, %c0_99, %c0_100] : memref<2x4x1x256xf32, #tpu.memory_space<vmem>>, vector<1x1x1x256xf32>
    %159 = vector.shape_cast %158 : vector<1x1x1x256xf32> to vector<1x256xf32>
    %160 = vector.broadcast %159 : vector<1x256xf32> to vector<4x256xf32>
    %161 = arith.addf %157, %160 : vector<4x256xf32>
    %c0_101 = arith.constant 0 : index
    %c4 = arith.constant 4 : index
    %c0_102 = arith.constant 0 : index
    %c0_103 = arith.constant 0 : index
    %162 = vector.load %arg6[%c0_101, %c4, %c0_102, %c0_103] : memref<2x5x1x256xf32, #tpu.memory_space<vmem>>, vector<1x1x1x256xf32>
    %163 = vector.shape_cast %162 : vector<1x1x1x256xf32> to vector<1x256xf32>
    %c0_104 = arith.constant 0 : index
    %c4_105 = arith.constant 4 : index
    %c0_106 = arith.constant 0 : index
    %c0_107 = arith.constant 0 : index
    %164 = vector.load %arg7[%c0_104, %c4_105, %c0_106, %c0_107] : memref<2x5x1x256xf32, #tpu.memory_space<vmem>>, vector<1x1x1x256xf32>
    %165 = vector.shape_cast %164 : vector<1x1x1x256xf32> to vector<1x256xf32>
    %cst_108 = arith.constant dense<0.000000e+00> : vector<256xf32>
    %166 = vector.multi_reduction <add>, %161, %cst_108 [0] : vector<4x256xf32> to vector<256xf32>
    %167 = vector.shape_cast %166 : vector<256xf32> to vector<1x256xf32>
    %cst_109 = arith.constant 4.000000e+00 : f32
    %168 = vector.broadcast %cst_109 : f32 to vector<1x256xf32>
    %169 = arith.divf %167, %168 : vector<1x256xf32>
    %170 = arith.mulf %161, %161 : vector<4x256xf32>
    %cst_110 = arith.constant dense<0.000000e+00> : vector<256xf32>
    %171 = vector.multi_reduction <add>, %170, %cst_110 [0] : vector<4x256xf32> to vector<256xf32>
    %172 = vector.shape_cast %171 : vector<256xf32> to vector<1x256xf32>
    %cst_111 = arith.constant 4.000000e+00 : f32
    %173 = vector.broadcast %cst_111 : f32 to vector<1x256xf32>
    %174 = arith.divf %172, %173 : vector<1x256xf32>
    %175 = arith.mulf %169, %169 : vector<1x256xf32>
    %176 = arith.subf %174, %175 : vector<1x256xf32>
    %cst_112 = arith.constant 0.000000e+00 : f32
    %177 = vector.broadcast %cst_112 : f32 to vector<1x256xf32>
    %178 = arith.maximumf %176, %177 : vector<1x256xf32>
    %cst_113 = arith.constant 9.99999974E-6 : f32
    %179 = vector.broadcast %cst_113 : f32 to vector<1x256xf32>
    %180 = arith.addf %178, %179 : vector<1x256xf32>
    %181 = math.rsqrt %180 : vector<1x256xf32>
    %182 = arith.mulf %163, %181 : vector<1x256xf32>
    %183 = arith.mulf %169, %182 : vector<1x256xf32>
    %184 = arith.subf %165, %183 : vector<1x256xf32>
    %185 = vector.broadcast %182 : vector<1x256xf32> to vector<4x256xf32>
    %186 = arith.mulf %161, %185 : vector<4x256xf32>
    %187 = vector.broadcast %184 : vector<1x256xf32> to vector<4x256xf32>
    %188 = arith.addf %186, %187 : vector<4x256xf32>
    %cst_114 = arith.constant 0.00999999977 : f32
    %189 = vector.broadcast %cst_114 : f32 to vector<4x256xf32>
    %190 = arith.mulf %189, %188 : vector<4x256xf32>
    %191 = arith.maximumf %188, %190 : vector<4x256xf32>
    %192 = arith.truncf %191 : vector<4x256xf32> to vector<4x256xbf16>
    %c1_i32 = arith.constant 1 : i32
    %193 = arith.cmpi eq, %arg0, %c1_i32 : i32
    %194 = arith.extui %193 : i1 to i32
    %c0_i32 = arith.constant 0 : i32
    %195 = arith.cmpi ne, %194, %c0_i32 : i32
    scf.if %195 {
      %402 = vector.extract_strided_slice %192 {offsets = [0, 0], sizes = [4, 128], strides = [1, 1]} : vector<4x256xbf16> to vector<4x128xbf16>
      %403 = arith.extf %402 : vector<4x128xbf16> to vector<4x128xf32>
      %c0_247 = arith.constant 0 : index
      %c0_248 = arith.constant 0 : index
      %c0_249 = arith.constant 0 : index
      %404 = vector.load %arg10[%c0_247, %c0_248, %c0_249] : memref<2x4x128xf32, #tpu.memory_space<vmem>>, vector<1x4x128xf32>
      %405 = vector.shape_cast %404 : vector<1x4x128xf32> to vector<4x128xf32>
      %406 = vector.shape_cast %403 : vector<4x128xf32> to vector<1x4x128xf32>
      tpu.vector_store %arg10[%c0_247, %c0_248, %c0_249], %406 {strides = array<i32>} : memref<2x4x128xf32, #tpu.memory_space<vmem>>, vector<1x4x128xf32>,
    } else {
    }
    %true = arith.constant true
    %196 = arith.xori %193, %true : i1
    %197 = arith.extui %196 : i1 to i32
    %c0_i32_115 = arith.constant 0 : i32
    %198 = arith.cmpi ne, %197, %c0_i32_115 : i32
    scf.if %198 {
      %c0_247 = arith.constant 0 : index
      %c0_248 = arith.constant 0 : index
      %c0_249 = arith.constant 0 : index
      %402 = vector.load %arg8[%c0_247, %c0_248, %c0_249] : memref<2x256x128xbf16, #tpu.memory_space<vmem>>, vector<1x256x128xbf16>
      %403 = vector.shape_cast %402 : vector<1x256x128xbf16> to vector<256x128xbf16>
      %cst_250 = arith.constant dense<0.000000e+00> : vector<4x128xf32>
      %404 = tpu.matmul %192, %403, %cst_250 {dimension_numbers = #tpu.dot_dimension_numbers<[1], [0], [0], [1], [0, 0, 1, 1], [], []>} : vector<4x256xbf16>, vector<256x128xbf16>, vector<4x128xf32> -> vector<4x128xf32>
      %c0_251 = arith.constant 0 : index
      %c0_252 = arith.constant 0 : index
      %c0_253 = arith.constant 0 : index
      %405 = vector.load %arg9[%c0_251, %c0_252, %c0_253] : memref<2x1x128xf32, #tpu.memory_space<vmem>>, vector<1x1x128xf32>
      %406 = vector.shape_cast %405 : vector<1x1x128xf32> to vector<1x128xf32>
      %407 = vector.broadcast %406 : vector<1x128xf32> to vector<4x128xf32>
      %408 = arith.addf %404, %407 : vector<4x128xf32>
      %c0_254 = arith.constant 0 : index
      %c0_255 = arith.constant 0 : index
      %c0_256 = arith.constant 0 : index
      %409 = vector.load %arg10[%c0_254, %c0_255, %c0_256] : memref<2x4x128xf32, #tpu.memory_space<vmem>>, vector<1x4x128xf32>
      %410 = vector.shape_cast %409 : vector<1x4x128xf32> to vector<4x128xf32>
      %411 = vector.shape_cast %408 : vector<4x128xf32> to vector<1x4x128xf32>
      tpu.vector_store %arg10[%c0_254, %c0_255, %c0_256], %411 {strides = array<i32>} : memref<2x4x128xf32, #tpu.memory_space<vmem>>, vector<1x4x128xf32>,
    } else {
    }
    %c1_116 = arith.constant 1 : index
    %c0_117 = arith.constant 0 : index
    %c0_118 = arith.constant 0 : index
    %199 = vector.load %arg1[%c1_116, %c0_117, %c0_118] : memref<2x4x128xf32, #tpu.memory_space<vmem>>, vector<1x4x128xf32>
    %200 = vector.shape_cast %199 : vector<1x4x128xf32> to vector<4x128xf32>
    %201 = arith.truncf %200 : vector<4x128xf32> to vector<4x128xbf16>
    %c1_119 = arith.constant 1 : index
    %c0_120 = arith.constant 0 : index
    %c0_121 = arith.constant 0 : index
    %202 = vector.load %arg2[%c1_119, %c0_120, %c0_121] : memref<2x128x256xbf16, #tpu.memory_space<vmem>>, vector<1x128x256xbf16>
    %203 = vector.shape_cast %202 : vector<1x128x256xbf16> to vector<128x256xbf16>
    %cst_122 = arith.constant dense<0.000000e+00> : vector<4x256xf32>
    %204 = tpu.matmul %201, %203, %cst_122 {dimension_numbers = #tpu.dot_dimension_numbers<[1], [0], [0], [1], [0, 0, 1, 1], [], []>} : vector<4x128xbf16>, vector<128x256xbf16>, vector<4x256xf32> -> vector<4x256xf32>
    %c1_123 = arith.constant 1 : index
    %c0_124 = arith.constant 0 : index
    %c0_125 = arith.constant 0 : index
    %205 = vector.load %arg3[%c1_123, %c0_124, %c0_125] : memref<2x1x256xf32, #tpu.memory_space<vmem>>, vector<1x1x256xf32>
    %206 = vector.shape_cast %205 : vector<1x1x256xf32> to vector<1x256xf32>
    %207 = vector.broadcast %206 : vector<1x256xf32> to vector<4x256xf32>
    %208 = arith.addf %204, %207 : vector<4x256xf32>
    %c1_126 = arith.constant 1 : index
    %c0_127 = arith.constant 0 : index
    %c0_128 = arith.constant 0 : index
    %c0_129 = arith.constant 0 : index
    %209 = vector.load %arg6[%c1_126, %c0_127, %c0_128, %c0_129] : memref<2x5x1x256xf32, #tpu.memory_space<vmem>>, vector<1x1x1x256xf32>
    %210 = vector.shape_cast %209 : vector<1x1x1x256xf32> to vector<1x256xf32>
    %c1_130 = arith.constant 1 : index
    %c0_131 = arith.constant 0 : index
    %c0_132 = arith.constant 0 : index
    %c0_133 = arith.constant 0 : index
    %211 = vector.load %arg7[%c1_130, %c0_131, %c0_132, %c0_133] : memref<2x5x1x256xf32, #tpu.memory_space<vmem>>, vector<1x1x1x256xf32>
    %212 = vector.shape_cast %211 : vector<1x1x1x256xf32> to vector<1x256xf32>
    %cst_134 = arith.constant dense<0.000000e+00> : vector<256xf32>
    %213 = vector.multi_reduction <add>, %208, %cst_134 [0] : vector<4x256xf32> to vector<256xf32>
    %214 = vector.shape_cast %213 : vector<256xf32> to vector<1x256xf32>
    %cst_135 = arith.constant 4.000000e+00 : f32
    %215 = vector.broadcast %cst_135 : f32 to vector<1x256xf32>
    %216 = arith.divf %214, %215 : vector<1x256xf32>
    %217 = arith.mulf %208, %208 : vector<4x256xf32>
    %cst_136 = arith.constant dense<0.000000e+00> : vector<256xf32>
    %218 = vector.multi_reduction <add>, %217, %cst_136 [0] : vector<4x256xf32> to vector<256xf32>
    %219 = vector.shape_cast %218 : vector<256xf32> to vector<1x256xf32>
    %cst_137 = arith.constant 4.000000e+00 : f32
    %220 = vector.broadcast %cst_137 : f32 to vector<1x256xf32>
    %221 = arith.divf %219, %220 : vector<1x256xf32>
    %222 = arith.mulf %216, %216 : vector<1x256xf32>
    %223 = arith.subf %221, %222 : vector<1x256xf32>
    %cst_138 = arith.constant 0.000000e+00 : f32
    %224 = vector.broadcast %cst_138 : f32 to vector<1x256xf32>
    %225 = arith.maximumf %223, %224 : vector<1x256xf32>
    %cst_139 = arith.constant 9.99999974E-6 : f32
    %226 = vector.broadcast %cst_139 : f32 to vector<1x256xf32>
    %227 = arith.addf %225, %226 : vector<1x256xf32>
    %228 = math.rsqrt %227 : vector<1x256xf32>
    %229 = arith.mulf %210, %228 : vector<1x256xf32>
    %230 = arith.mulf %216, %229 : vector<1x256xf32>
    %231 = arith.subf %212, %230 : vector<1x256xf32>
    %232 = vector.broadcast %229 : vector<1x256xf32> to vector<4x256xf32>
    %233 = arith.mulf %208, %232 : vector<4x256xf32>
    %234 = vector.broadcast %231 : vector<1x256xf32> to vector<4x256xf32>
    %235 = arith.addf %233, %234 : vector<4x256xf32>
    %cst_140 = arith.constant 0.00999999977 : f32
    %236 = vector.broadcast %cst_140 : f32 to vector<4x256xf32>
    %237 = arith.mulf %236, %235 : vector<4x256xf32>
    %238 = arith.maximumf %235, %237 : vector<4x256xf32>
    %239 = arith.truncf %238 : vector<4x256xf32> to vector<4x256xbf16>
    %c1_141 = arith.constant 1 : index
    %c0_142 = arith.constant 0 : index
    %c0_143 = arith.constant 0 : index
    %c0_144 = arith.constant 0 : index
    %240 = vector.load %arg4[%c1_141, %c0_142, %c0_143, %c0_144] : memref<2x4x256x256xbf16, #tpu.memory_space<vmem>>, vector<1x1x256x256xbf16>
    %241 = vector.shape_cast %240 : vector<1x1x256x256xbf16> to vector<256x256xbf16>
    %cst_145 = arith.constant dense<0.000000e+00> : vector<4x256xf32>
    %242 = tpu.matmul %239, %241, %cst_145 {dimension_numbers = #tpu.dot_dimension_numbers<[1], [0], [0], [1], [0, 0, 1, 1], [], []>} : vector<4x256xbf16>, vector<256x256xbf16>, vector<4x256xf32> -> vector<4x256xf32>
    %c1_146 = arith.constant 1 : index
    %c0_147 = arith.constant 0 : index
    %c0_148 = arith.constant 0 : index
    %c0_149 = arith.constant 0 : index
    %243 = vector.load %arg5[%c1_146, %c0_147, %c0_148, %c0_149] : memref<2x4x1x256xf32, #tpu.memory_space<vmem>>, vector<1x1x1x256xf32>
    %244 = vector.shape_cast %243 : vector<1x1x1x256xf32> to vector<1x256xf32>
    %245 = vector.broadcast %244 : vector<1x256xf32> to vector<4x256xf32>
    %246 = arith.addf %242, %245 : vector<4x256xf32>
    %c1_150 = arith.constant 1 : index
    %c1_151 = arith.constant 1 : index
    %c0_152 = arith.constant 0 : index
    %c0_153 = arith.constant 0 : index
    %247 = vector.load %arg6[%c1_150, %c1_151, %c0_152, %c0_153] : memref<2x5x1x256xf32, #tpu.memory_space<vmem>>, vector<1x1x1x256xf32>
    %248 = vector.shape_cast %247 : vector<1x1x1x256xf32> to vector<1x256xf32>
    %c1_154 = arith.constant 1 : index
    %c1_155 = arith.constant 1 : index
    %c0_156 = arith.constant 0 : index
    %c0_157 = arith.constant 0 : index
    %249 = vector.load %arg7[%c1_154, %c1_155, %c0_156, %c0_157] : memref<2x5x1x256xf32, #tpu.memory_space<vmem>>, vector<1x1x1x256xf32>
    %250 = vector.shape_cast %249 : vector<1x1x1x256xf32> to vector<1x256xf32>
    %cst_158 = arith.constant dense<0.000000e+00> : vector<256xf32>
    %251 = vector.multi_reduction <add>, %246, %cst_158 [0] : vector<4x256xf32> to vector<256xf32>
    %252 = vector.shape_cast %251 : vector<256xf32> to vector<1x256xf32>
    %cst_159 = arith.constant 4.000000e+00 : f32
    %253 = vector.broadcast %cst_159 : f32 to vector<1x256xf32>
    %254 = arith.divf %252, %253 : vector<1x256xf32>
    %255 = arith.mulf %246, %246 : vector<4x256xf32>
    %cst_160 = arith.constant dense<0.000000e+00> : vector<256xf32>
    %256 = vector.multi_reduction <add>, %255, %cst_160 [0] : vector<4x256xf32> to vector<256xf32>
    %257 = vector.shape_cast %256 : vector<256xf32> to vector<1x256xf32>
    %cst_161 = arith.constant 4.000000e+00 : f32
    %258 = vector.broadcast %cst_161 : f32 to vector<1x256xf32>
    %259 = arith.divf %257, %258 : vector<1x256xf32>
    %260 = arith.mulf %254, %254 : vector<1x256xf32>
    %261 = arith.subf %259, %260 : vector<1x256xf32>
    %cst_162 = arith.constant 0.000000e+00 : f32
    %262 = vector.broadcast %cst_162 : f32 to vector<1x256xf32>
    %263 = arith.maximumf %261, %262 : vector<1x256xf32>
    %cst_163 = arith.constant 9.99999974E-6 : f32
    %264 = vector.broadcast %cst_163 : f32 to vector<1x256xf32>
    %265 = arith.addf %263, %264 : vector<1x256xf32>
    %266 = math.rsqrt %265 : vector<1x256xf32>
    %267 = arith.mulf %248, %266 : vector<1x256xf32>
    %268 = arith.mulf %254, %267 : vector<1x256xf32>
    %269 = arith.subf %250, %268 : vector<1x256xf32>
    %270 = vector.broadcast %267 : vector<1x256xf32> to vector<4x256xf32>
    %271 = arith.mulf %246, %270 : vector<4x256xf32>
    %272 = vector.broadcast %269 : vector<1x256xf32> to vector<4x256xf32>
    %273 = arith.addf %271, %272 : vector<4x256xf32>
    %cst_164 = arith.constant 0.00999999977 : f32
    %274 = vector.broadcast %cst_164 : f32 to vector<4x256xf32>
    %275 = arith.mulf %274, %273 : vector<4x256xf32>
    %276 = arith.maximumf %273, %275 : vector<4x256xf32>
    %277 = arith.truncf %276 : vector<4x256xf32> to vector<4x256xbf16>
    %c1_165 = arith.constant 1 : index
    %c1_166 = arith.constant 1 : index
    %c0_167 = arith.constant 0 : index
    %c0_168 = arith.constant 0 : index
    %278 = vector.load %arg4[%c1_165, %c1_166, %c0_167, %c0_168] : memref<2x4x256x256xbf16, #tpu.memory_space<vmem>>, vector<1x1x256x256xbf16>
    %279 = vector.shape_cast %278 : vector<1x1x256x256xbf16> to vector<256x256xbf16>
    %cst_169 = arith.constant dense<0.000000e+00> : vector<4x256xf32>
    %280 = tpu.matmul %277, %279, %cst_169 {dimension_numbers = #tpu.dot_dimension_numbers<[1], [0], [0], [1], [0, 0, 1, 1], [], []>} : vector<4x256xbf16>, vector<256x256xbf16>, vector<4x256xf32> -> vector<4x256xf32>
    %c1_170 = arith.constant 1 : index
    %c1_171 = arith.constant 1 : index
    %c0_172 = arith.constant 0 : index
    %c0_173 = arith.constant 0 : index
    %281 = vector.load %arg5[%c1_170, %c1_171, %c0_172, %c0_173] : memref<2x4x1x256xf32, #tpu.memory_space<vmem>>, vector<1x1x1x256xf32>
    %282 = vector.shape_cast %281 : vector<1x1x1x256xf32> to vector<1x256xf32>
    %283 = vector.broadcast %282 : vector<1x256xf32> to vector<4x256xf32>
    %284 = arith.addf %280, %283 : vector<4x256xf32>
    %c1_174 = arith.constant 1 : index
    %c2_175 = arith.constant 2 : index
    %c0_176 = arith.constant 0 : index
    %c0_177 = arith.constant 0 : index
    %285 = vector.load %arg6[%c1_174, %c2_175, %c0_176, %c0_177] : memref<2x5x1x256xf32, #tpu.memory_space<vmem>>, vector<1x1x1x256xf32>
    %286 = vector.shape_cast %285 : vector<1x1x1x256xf32> to vector<1x256xf32>
    %c1_178 = arith.constant 1 : index
    %c2_179 = arith.constant 2 : index
    %c0_180 = arith.constant 0 : index
    %c0_181 = arith.constant 0 : index
    %287 = vector.load %arg7[%c1_178, %c2_179, %c0_180, %c0_181] : memref<2x5x1x256xf32, #tpu.memory_space<vmem>>, vector<1x1x1x256xf32>
    %288 = vector.shape_cast %287 : vector<1x1x1x256xf32> to vector<1x256xf32>
    %cst_182 = arith.constant dense<0.000000e+00> : vector<256xf32>
    %289 = vector.multi_reduction <add>, %284, %cst_182 [0] : vector<4x256xf32> to vector<256xf32>
    %290 = vector.shape_cast %289 : vector<256xf32> to vector<1x256xf32>
    %cst_183 = arith.constant 4.000000e+00 : f32
    %291 = vector.broadcast %cst_183 : f32 to vector<1x256xf32>
    %292 = arith.divf %290, %291 : vector<1x256xf32>
    %293 = arith.mulf %284, %284 : vector<4x256xf32>
    %cst_184 = arith.constant dense<0.000000e+00> : vector<256xf32>
    %294 = vector.multi_reduction <add>, %293, %cst_184 [0] : vector<4x256xf32> to vector<256xf32>
    %295 = vector.shape_cast %294 : vector<256xf32> to vector<1x256xf32>
    %cst_185 = arith.constant 4.000000e+00 : f32
    %296 = vector.broadcast %cst_185 : f32 to vector<1x256xf32>
    %297 = arith.divf %295, %296 : vector<1x256xf32>
    %298 = arith.mulf %292, %292 : vector<1x256xf32>
    %299 = arith.subf %297, %298 : vector<1x256xf32>
    %cst_186 = arith.constant 0.000000e+00 : f32
    %300 = vector.broadcast %cst_186 : f32 to vector<1x256xf32>
    %301 = arith.maximumf %299, %300 : vector<1x256xf32>
    %cst_187 = arith.constant 9.99999974E-6 : f32
    %302 = vector.broadcast %cst_187 : f32 to vector<1x256xf32>
    %303 = arith.addf %301, %302 : vector<1x256xf32>
    %304 = math.rsqrt %303 : vector<1x256xf32>
    %305 = arith.mulf %286, %304 : vector<1x256xf32>
    %306 = arith.mulf %292, %305 : vector<1x256xf32>
    %307 = arith.subf %288, %306 : vector<1x256xf32>
    %308 = vector.broadcast %305 : vector<1x256xf32> to vector<4x256xf32>
    %309 = arith.mulf %284, %308 : vector<4x256xf32>
    %310 = vector.broadcast %307 : vector<1x256xf32> to vector<4x256xf32>
    %311 = arith.addf %309, %310 : vector<4x256xf32>
    %cst_188 = arith.constant 0.00999999977 : f32
    %312 = vector.broadcast %cst_188 : f32 to vector<4x256xf32>
    %313 = arith.mulf %312, %311 : vector<4x256xf32>
    %314 = arith.maximumf %311, %313 : vector<4x256xf32>
    %315 = arith.truncf %314 : vector<4x256xf32> to vector<4x256xbf16>
    %c1_189 = arith.constant 1 : index
    %c2_190 = arith.constant 2 : index
    %c0_191 = arith.constant 0 : index
    %c0_192 = arith.constant 0 : index
    %316 = vector.load %arg4[%c1_189, %c2_190, %c0_191, %c0_192] : memref<2x4x256x256xbf16, #tpu.memory_space<vmem>>, vector<1x1x256x256xbf16>
    %317 = vector.shape_cast %316 : vector<1x1x256x256xbf16> to vector<256x256xbf16>
    %cst_193 = arith.constant dense<0.000000e+00> : vector<4x256xf32>
    %318 = tpu.matmul %315, %317, %cst_193 {dimension_numbers = #tpu.dot_dimension_numbers<[1], [0], [0], [1], [0, 0, 1, 1], [], []>} : vector<4x256xbf16>, vector<256x256xbf16>, vector<4x256xf32> -> vector<4x256xf32>
    %c1_194 = arith.constant 1 : index
    %c2_195 = arith.constant 2 : index
    %c0_196 = arith.constant 0 : index
    %c0_197 = arith.constant 0 : index
    %319 = vector.load %arg5[%c1_194, %c2_195, %c0_196, %c0_197] : memref<2x4x1x256xf32, #tpu.memory_space<vmem>>, vector<1x1x1x256xf32>
    %320 = vector.shape_cast %319 : vector<1x1x1x256xf32> to vector<1x256xf32>
    %321 = vector.broadcast %320 : vector<1x256xf32> to vector<4x256xf32>
    %322 = arith.addf %318, %321 : vector<4x256xf32>
    %c1_198 = arith.constant 1 : index
    %c3_199 = arith.constant 3 : index
    %c0_200 = arith.constant 0 : index
    %c0_201 = arith.constant 0 : index
    %323 = vector.load %arg6[%c1_198, %c3_199, %c0_200, %c0_201] : memref<2x5x1x256xf32, #tpu.memory_space<vmem>>, vector<1x1x1x256xf32>
    %324 = vector.shape_cast %323 : vector<1x1x1x256xf32> to vector<1x256xf32>
    %c1_202 = arith.constant 1 : index
    %c3_203 = arith.constant 3 : index
    %c0_204 = arith.constant 0 : index
    %c0_205 = arith.constant 0 : index
    %325 = vector.load %arg7[%c1_202, %c3_203, %c0_204, %c0_205] : memref<2x5x1x256xf32, #tpu.memory_space<vmem>>, vector<1x1x1x256xf32>
    %326 = vector.shape_cast %325 : vector<1x1x1x256xf32> to vector<1x256xf32>
    %cst_206 = arith.constant dense<0.000000e+00> : vector<256xf32>
    %327 = vector.multi_reduction <add>, %322, %cst_206 [0] : vector<4x256xf32> to vector<256xf32>
    %328 = vector.shape_cast %327 : vector<256xf32> to vector<1x256xf32>
    %cst_207 = arith.constant 4.000000e+00 : f32
    %329 = vector.broadcast %cst_207 : f32 to vector<1x256xf32>
    %330 = arith.divf %328, %329 : vector<1x256xf32>
    %331 = arith.mulf %322, %322 : vector<4x256xf32>
    %cst_208 = arith.constant dense<0.000000e+00> : vector<256xf32>
    %332 = vector.multi_reduction <add>, %331, %cst_208 [0] : vector<4x256xf32> to vector<256xf32>
    %333 = vector.shape_cast %332 : vector<256xf32> to vector<1x256xf32>
    %cst_209 = arith.constant 4.000000e+00 : f32
    %334 = vector.broadcast %cst_209 : f32 to vector<1x256xf32>
    %335 = arith.divf %333, %334 : vector<1x256xf32>
    %336 = arith.mulf %330, %330 : vector<1x256xf32>
    %337 = arith.subf %335, %336 : vector<1x256xf32>
    %cst_210 = arith.constant 0.000000e+00 : f32
    %338 = vector.broadcast %cst_210 : f32 to vector<1x256xf32>
    %339 = arith.maximumf %337, %338 : vector<1x256xf32>
    %cst_211 = arith.constant 9.99999974E-6 : f32
    %340 = vector.broadcast %cst_211 : f32 to vector<1x256xf32>
    %341 = arith.addf %339, %340 : vector<1x256xf32>
    %342 = math.rsqrt %341 : vector<1x256xf32>
    %343 = arith.mulf %324, %342 : vector<1x256xf32>
    %344 = arith.mulf %330, %343 : vector<1x256xf32>
    %345 = arith.subf %326, %344 : vector<1x256xf32>
    %346 = vector.broadcast %343 : vector<1x256xf32> to vector<4x256xf32>
    %347 = arith.mulf %322, %346 : vector<4x256xf32>
    %348 = vector.broadcast %345 : vector<1x256xf32> to vector<4x256xf32>
    %349 = arith.addf %347, %348 : vector<4x256xf32>
    %cst_212 = arith.constant 0.00999999977 : f32
    %350 = vector.broadcast %cst_212 : f32 to vector<4x256xf32>
    %351 = arith.mulf %350, %349 : vector<4x256xf32>
    %352 = arith.maximumf %349, %351 : vector<4x256xf32>
    %353 = arith.truncf %352 : vector<4x256xf32> to vector<4x256xbf16>
    %c1_213 = arith.constant 1 : index
    %c3_214 = arith.constant 3 : index
    %c0_215 = arith.constant 0 : index
    %c0_216 = arith.constant 0 : index
    %354 = vector.load %arg4[%c1_213, %c3_214, %c0_215, %c0_216] : memref<2x4x256x256xbf16, #tpu.memory_space<vmem>>, vector<1x1x256x256xbf16>
    %355 = vector.shape_cast %354 : vector<1x1x256x256xbf16> to vector<256x256xbf16>
    %cst_217 = arith.constant dense<0.000000e+00> : vector<4x256xf32>
    %356 = tpu.matmul %353, %355, %cst_217 {dimension_numbers = #tpu.dot_dimension_numbers<[1], [0], [0], [1], [0, 0, 1, 1], [], []>} : vector<4x256xbf16>, vector<256x256xbf16>, vector<4x256xf32> -> vector<4x256xf32>
    %c1_218 = arith.constant 1 : index
    %c3_219 = arith.constant 3 : index
    %c0_220 = arith.constant 0 : index
    %c0_221 = arith.constant 0 : index
    %357 = vector.load %arg5[%c1_218, %c3_219, %c0_220, %c0_221] : memref<2x4x1x256xf32, #tpu.memory_space<vmem>>, vector<1x1x1x256xf32>
    %358 = vector.shape_cast %357 : vector<1x1x1x256xf32> to vector<1x256xf32>
    %359 = vector.broadcast %358 : vector<1x256xf32> to vector<4x256xf32>
    %360 = arith.addf %356, %359 : vector<4x256xf32>
    %c1_222 = arith.constant 1 : index
    %c4_223 = arith.constant 4 : index
    %c0_224 = arith.constant 0 : index
    %c0_225 = arith.constant 0 : index
    %361 = vector.load %arg6[%c1_222, %c4_223, %c0_224, %c0_225] : memref<2x5x1x256xf32, #tpu.memory_space<vmem>>, vector<1x1x1x256xf32>
    %362 = vector.shape_cast %361 : vector<1x1x1x256xf32> to vector<1x256xf32>
    %c1_226 = arith.constant 1 : index
    %c4_227 = arith.constant 4 : index
    %c0_228 = arith.constant 0 : index
    %c0_229 = arith.constant 0 : index
    %363 = vector.load %arg7[%c1_226, %c4_227, %c0_228, %c0_229] : memref<2x5x1x256xf32, #tpu.memory_space<vmem>>, vector<1x1x1x256xf32>
    %364 = vector.shape_cast %363 : vector<1x1x1x256xf32> to vector<1x256xf32>
    %cst_230 = arith.constant dense<0.000000e+00> : vector<256xf32>
    %365 = vector.multi_reduction <add>, %360, %cst_230 [0] : vector<4x256xf32> to vector<256xf32>
    %366 = vector.shape_cast %365 : vector<256xf32> to vector<1x256xf32>
    %cst_231 = arith.constant 4.000000e+00 : f32
    %367 = vector.broadcast %cst_231 : f32 to vector<1x256xf32>
    %368 = arith.divf %366, %367 : vector<1x256xf32>
    %369 = arith.mulf %360, %360 : vector<4x256xf32>
    %cst_232 = arith.constant dense<0.000000e+00> : vector<256xf32>
    %370 = vector.multi_reduction <add>, %369, %cst_232 [0] : vector<4x256xf32> to vector<256xf32>
    %371 = vector.shape_cast %370 : vector<256xf32> to vector<1x256xf32>
    %cst_233 = arith.constant 4.000000e+00 : f32
    %372 = vector.broadcast %cst_233 : f32 to vector<1x256xf32>
    %373 = arith.divf %371, %372 : vector<1x256xf32>
    %374 = arith.mulf %368, %368 : vector<1x256xf32>
    %375 = arith.subf %373, %374 : vector<1x256xf32>
    %cst_234 = arith.constant 0.000000e+00 : f32
    %376 = vector.broadcast %cst_234 : f32 to vector<1x256xf32>
    %377 = arith.maximumf %375, %376 : vector<1x256xf32>
    %cst_235 = arith.constant 9.99999974E-6 : f32
    %378 = vector.broadcast %cst_235 : f32 to vector<1x256xf32>
    %379 = arith.addf %377, %378 : vector<1x256xf32>
    %380 = math.rsqrt %379 : vector<1x256xf32>
    %381 = arith.mulf %362, %380 : vector<1x256xf32>
    %382 = arith.mulf %368, %381 : vector<1x256xf32>
    %383 = arith.subf %364, %382 : vector<1x256xf32>
    %384 = vector.broadcast %381 : vector<1x256xf32> to vector<4x256xf32>
    %385 = arith.mulf %360, %384 : vector<4x256xf32>
    %386 = vector.broadcast %383 : vector<1x256xf32> to vector<4x256xf32>
    %387 = arith.addf %385, %386 : vector<4x256xf32>
    %cst_236 = arith.constant 0.00999999977 : f32
    %388 = vector.broadcast %cst_236 : f32 to vector<4x256xf32>
    %389 = arith.mulf %388, %387 : vector<4x256xf32>
    %390 = arith.maximumf %387, %389 : vector<4x256xf32>
    %391 = arith.truncf %390 : vector<4x256xf32> to vector<4x256xbf16>
    %c1_237 = arith.constant 1 : index
    %c0_238 = arith.constant 0 : index
    %c0_239 = arith.constant 0 : index
    %392 = vector.load %arg8[%c1_237, %c0_238, %c0_239] : memref<2x256x128xbf16, #tpu.memory_space<vmem>>, vector<1x256x128xbf16>
    %393 = vector.shape_cast %392 : vector<1x256x128xbf16> to vector<256x128xbf16>
    %cst_240 = arith.constant dense<0.000000e+00> : vector<4x128xf32>
    %394 = tpu.matmul %391, %393, %cst_240 {dimension_numbers = #tpu.dot_dimension_numbers<[1], [0], [0], [1], [0, 0, 1, 1], [], []>} : vector<4x256xbf16>, vector<256x128xbf16>, vector<4x128xf32> -> vector<4x128xf32>
    %c1_241 = arith.constant 1 : index
    %c0_242 = arith.constant 0 : index
    %c0_243 = arith.constant 0 : index
    %395 = vector.load %arg9[%c1_241, %c0_242, %c0_243] : memref<2x1x128xf32, #tpu.memory_space<vmem>>, vector<1x1x128xf32>
    %396 = vector.shape_cast %395 : vector<1x1x128xf32> to vector<1x128xf32>
    %397 = vector.broadcast %396 : vector<1x128xf32> to vector<4x128xf32>
    %398 = arith.addf %394, %397 : vector<4x128xf32>
    %c1_244 = arith.constant 1 : index
    %c0_245 = arith.constant 0 : index
    %c0_246 = arith.constant 0 : index
    %399 = vector.load %arg10[%c1_244, %c0_245, %c0_246] : memref<2x4x128xf32, #tpu.memory_space<vmem>>, vector<1x4x128xf32>
    %400 = vector.shape_cast %399 : vector<1x4x128xf32> to vector<4x128xf32>
    %401 = vector.shape_cast %398 : vector<4x128xf32> to vector<1x4x128xf32>
    tpu.vector_store %arg10[%c1_244, %c0_245, %c0_246], %401 {strides = array<i32>} : memref<2x4x128xf32, #tpu.memory_space<vmem>>, vector<1x4x128xf32>,
    return
  }
  func.func @transform_0(%arg0: i32) -> (i32, i32, i32) {
    %c0_i32 = arith.constant 0 : i32
    %c0_i32_0 = arith.constant 0 : i32
    %c0_i32_1 = arith.constant 0 : i32
    return %arg0, %c0_i32, %c0_i32_0 : i32, i32, i32
  }
  func.func @transform_1(%arg0: i32) -> (i32, i32, i32) {
    %c0_i32 = arith.constant 0 : i32
    %c0_i32_0 = arith.constant 0 : i32
    %c0_i32_1 = arith.constant 0 : i32
    return %arg0, %c0_i32, %c0_i32_0 : i32, i32, i32
  }
  func.func @transform_2(%arg0: i32) -> (i32, i32, i32) {
    %c0_i32 = arith.constant 0 : i32
    %c0_i32_0 = arith.constant 0 : i32
    %c0_i32_1 = arith.constant 0 : i32
    return %arg0, %c0_i32, %c0_i32_0 : i32, i32, i32
  }
  func.func @transform_3(%arg0: i32) -> (i32, i32, i32, i32) {
    %c0_i32 = arith.constant 0 : i32
    %c0_i32_0 = arith.constant 0 : i32
    %c0_i32_1 = arith.constant 0 : i32
    %c0_i32_2 = arith.constant 0 : i32
    return %arg0, %c0_i32, %c0_i32_0, %c0_i32_1 : i32, i32, i32, i32
  }
  func.func @transform_4(%arg0: i32) -> (i32, i32, i32, i32) {
    %c0_i32 = arith.constant 0 : i32
    %c0_i32_0 = arith.constant 0 : i32
    %c0_i32_1 = arith.constant 0 : i32
    %c0_i32_2 = arith.constant 0 : i32
    return %arg0, %c0_i32, %c0_i32_0, %c0_i32_1 : i32, i32, i32, i32
  }
  func.func @transform_5(%arg0: i32) -> (i32, i32, i32, i32) {
    %c0_i32 = arith.constant 0 : i32
    %c0_i32_0 = arith.constant 0 : i32
    %c0_i32_1 = arith.constant 0 : i32
    %c0_i32_2 = arith.constant 0 : i32
    return %arg0, %c0_i32, %c0_i32_0, %c0_i32_1 : i32, i32, i32, i32
  }
  func.func @transform_6(%arg0: i32) -> (i32, i32, i32, i32) {
    %c0_i32 = arith.constant 0 : i32
    %c0_i32_0 = arith.constant 0 : i32
    %c0_i32_1 = arith.constant 0 : i32
    %c0_i32_2 = arith.constant 0 : i32
    return %arg0, %c0_i32, %c0_i32_0, %c0_i32_1 : i32, i32, i32, i32
  }
  func.func @transform_7(%arg0: i32) -> (i32, i32, i32) {
    %c0_i32 = arith.constant 0 : i32
    %c0_i32_0 = arith.constant 0 : i32
    %c0_i32_1 = arith.constant 0 : i32
    return %arg0, %c0_i32, %c0_i32_0 : i32, i32, i32
  }
  func.func @transform_8(%arg0: i32) -> (i32, i32, i32) {
    %c0_i32 = arith.constant 0 : i32
    %c0_i32_0 = arith.constant 0 : i32
    %c0_i32_1 = arith.constant 0 : i32
    return %arg0, %c0_i32, %c0_i32_0 : i32, i32, i32
  }
  func.func @transform_9(%arg0: i32) -> (i32, i32, i32) {
    %c0_i32 = arith.constant 0 : i32
    %c0_i32_0 = arith.constant 0 : i32
    %c0_i32_1 = arith.constant 0 : i32
    return %arg0, %c0_i32, %c0_i32_0 : i32, i32, i32
  }
}

</mosaic_0001>

<llo_original>
// kernel: squeeze.47
$region0: #{squeeze.47}
  %s0 = inlined_call_operand.vmem [shape: f32[1,4,60], index: 0, kind: input, shape index: {}]
  %s1 = inlined_call_operand.vmem [shape: f32[4,15,4], index: 1, kind: output, shape index: {}]
  $region1: #{squeeze.47} parent=0
    #allocation0 [shape = 'u8[4096]{0}', space=vmem, size = 0x1000, scoped, tag = 'scoped mem for input reshape']
    %s3 = sshllo.u32 0, 4
    %v4 = vld [vmem:[%s0] sm:%s3]
    %5 = vst [vmem:[#allocation0] sm:%s3] %v4
    %v6 = vld [vmem:[#allocation0] sm:$0xf]
    %vm7 = vcmask 31744
    %8 = vst.msk [vmem:[%s1] ss:$16 sm:$0x3] %vm7, %v6
    %9 = vst.msk [vmem:[%s1] ss:$16 sm:$0xc] %vm7, %v6
    %v10 = vld [vmem:[#allocation0] sm:$0xf]
    %11 = vrot.lane.b32.xlu0 %v10, 124
    %v12 = vpop.permute.xlu0 %11
    %vm13 = vcmask 31744
    %s14 = scalar_lea.vmem %s1, 1
    %15 = vst.msk [vmem:[%s14] ss:$16 sm:$0x3] %vm13, %v12
    %s16 = scalar_lea.vmem %s1, 1
    %17 = vst.msk [vmem:[%s16] ss:$16 sm:$0xc] %vm13, %v12
    %v18 = vld [vmem:[#allocation0] sm:$0xf]
    %19 = vrot.lane.b32.xlu0 %v18, 120
    %v20 = vpop.permute.xlu0 %19
    %vm21 = vcmask 31744
    %s22 = scalar_lea.vmem %s1, 2
    %23 = vst.msk [vmem:[%s22] ss:$16 sm:$0x3] %vm21, %v20
    %s24 = scalar_lea.vmem %s1, 2
    %25 = vst.msk [vmem:[%s24] ss:$16 sm:$0xc] %vm21, %v20
    %v26 = vld [vmem:[#allocation0] sm:$0xf]
    %27 = vrot.lane.b32.xlu0 %v26, 116
    %v28 = vpop.permute.xlu0 %27
    %vm29 = vcmask 31744
    %s30 = scalar_lea.vmem %s1, 3
    %31 = vst.msk [vmem:[%s30] ss:$16 sm:$0x3] %vm29, %v28
    %s32 = scalar_lea.vmem %s1, 3
    %33 = vst.msk [vmem:[%s32] ss:$16 sm:$0xc] %vm29, %v28
    %v34 = vld [vmem:[#allocation0] sm:$0xf]
    %35 = vrot.lane.b32.xlu0 %v34, 112
    %v36 = vpop.permute.xlu0 %35
    %vm37 = vcmask 31744
    %s38 = scalar_lea.vmem %s1, 4
    %39 = vst.msk [vmem:[%s38] ss:$16 sm:$0x3] %vm37, %v36
    %s40 = scalar_lea.vmem %s1, 4
    %41 = vst.msk [vmem:[%s40] ss:$16 sm:$0xc] %vm37, %v36
    %v42 = vld [vmem:[#allocation0] sm:$0xf]
    %43 = vrot.lane.b32.xlu0 %v42, 108
    %v44 = vpop.permute.xlu0 %43
    %vm45 = vcmask 31744
    %s46 = scalar_lea.vmem %s1, 5
    %47 = vst.msk [vmem:[%s46] ss:$16 sm:$0x3] %vm45, %v44
    %s48 = scalar_lea.vmem %s1, 5
    %49 = vst.msk [vmem:[%s48] ss:$16 sm:$0xc] %vm45, %v44
    %v50 = vld [vmem:[#allocation0] sm:$0xf]
    %51 = vrot.lane.b32.xlu0 %v50, 104
    %v52 = vpop.permute.xlu0 %51
    %vm53 = vcmask 31744
    %s54 = scalar_lea.vmem %s1, 6
    %55 = vst.msk [vmem:[%s54] ss:$16 sm:$0x3] %vm53, %v52
    %s56 = scalar_lea.vmem %s1, 6
    %57 = vst.msk [vmem:[%s56] ss:$16 sm:$0xc] %vm53, %v52
    %v58 = vld [vmem:[#allocation0] sm:$0xf]
    %59 = vrot.lane.b32.xlu0 %v58, 100
    %v60 = vpop.permute.xlu0 %59
    %vm61 = vcmask 31744
    %s62 = scalar_lea.vmem %s1, 7
    %63 = vst.msk [vmem:[%s62] ss:$16 sm:$0x3] %vm61, %v60
    %s64 = scalar_lea.vmem %s1, 7
    %65 = vst.msk [vmem:[%s64] ss:$16 sm:$0xc] %vm61, %v60
    %v66 = vld [vmem:[#allocation0] sm:$0xf]
    %67 = vrot.lane.b32.xlu0 %v66, 96
    %v68 = vpop.permute.xlu0 %67
    %vm69 = vcmask 31744
    %s70 = scalar_lea.vmem %s1, 8
    %71 = vst.msk [vmem:[%s70] ss:$16 sm:$0x3] %vm69, %v68
    %s72 = scalar_lea.vmem %s1, 8
    %73 = vst.msk [vmem:[%s72] ss:$16 sm:$0xc] %vm69, %v68
    %v74 = vld [vmem:[#allocation0] sm:$0xf]
    %75 = vrot.lane.b32.xlu0 %v74, 92
    %v76 = vpop.permute.xlu0 %75
    %vm77 = vcmask 31744
    %s78 = scalar_lea.vmem %s1, 9
    %79 = vst.msk [vmem:[%s78] ss:$16 sm:$0x3] %vm77, %v76
    %s80 = scalar_lea.vmem %s1, 9
    %81 = vst.msk [vmem:[%s80] ss:$16 sm:$0xc] %vm77, %v76
    %v82 = vld [vmem:[#allocation0] sm:$0xf]
    %83 = vrot.lane.b32.xlu0 %v82, 88
    %v84 = vpop.permute.xlu0 %83
    %vm85 = vcmask 31744
    %s86 = scalar_lea.vmem %s1, 10
    %87 = vst.msk [vmem:[%s86] ss:$16 sm:$0x3] %vm85, %v84
    %s88 = scalar_lea.vmem %s1, 10
    %89 = vst.msk [vmem:[%s88] ss:$16 sm:$0xc] %vm85, %v84
    %v90 = vld [vmem:[#allocation0] sm:$0xf]
    %91 = vrot.lane.b32.xlu0 %v90, 84
    %v92 = vpop.permute.xlu0 %91
    %vm93 = vcmask 31744
    %s94 = scalar_lea.vmem %s1, 11
    %95 = vst.msk [vmem:[%s94] ss:$16 sm:$0x3] %vm93, %v92
    %s96 = scalar_lea.vmem %s1, 11
    %97 = vst.msk [vmem:[%s96] ss:$16 sm:$0xc] %vm93, %v92
    %v98 = vld [vmem:[#allocation0] sm:$0xf]
    %99 = vrot.lane.b32.xlu0 %v98, 80
    %v100 = vpop.permute.xlu0 %99
    %vm101 = vcmask 31744
    %s102 = scalar_lea.vmem %s1, 12
    %103 = vst.msk [vmem:[%s102] ss:$16 sm:$0x3] %vm101, %v100
    %s104 = scalar_lea.vmem %s1, 12
    %105 = vst.msk [vmem:[%s104] ss:$16 sm:$0xc] %vm101, %v100
    %v106 = vld [vmem:[#allocation0] sm:$0xf]
    %107 = vrot.lane.b32.xlu0 %v106, 76
    %v108 = vpop.permute.xlu0 %107
    %vm109 = vcmask 31744
    %s110 = scalar_lea.vmem %s1, 13
    %111 = vst.msk [vmem:[%s110] ss:$16 sm:$0x3] %vm109, %v108
    %s112 = scalar_lea.vmem %s1, 13
    %113 = vst.msk [vmem:[%s112] ss:$16 sm:$0xc] %vm109, %v108
    %v114 = vld [vmem:[#allocation0] sm:$0xf]
    %115 = vrot.lane.b32.xlu0 %v114, 72
    %v116 = vpop.permute.xlu0 %115
    %vm117 = vcmask 31744
    %s118 = scalar_lea.vmem %s1, 14
    %119 = vst.msk [vmem:[%s118] ss:$16 sm:$0x3] %vm117, %v116
    %s120 = scalar_lea.vmem %s1, 14
    %121 = vst.msk [vmem:[%s120] ss:$16 sm:$0xc] %vm117, %v116

// kernel: pose_generator_forward.3
$region0: #{pose_generator_forward.3}
  #allocation0 [shape = 'u32[]', space=smem, size = 0x4, offset = 0x4, fixed_abs, tag = 'smem constant byte address 0x4 - core index']
  #allocation1 [shape = 'u32[144,128]{1,0:T(1,128)}', space=vmem, size = 0x12000, scoped, tag = 'internal scratch']
  %s0 = inlined_call_operand.vmem [shape: f32[4,4,128], index: 0, kind: input, shape index: {}]
  %s1 = inlined_call_operand.hbm [shape: bf16[4,128,256], index: 1, kind: input, shape index: {}]
  %s2 = inlined_call_operand.vmem [shape: f32[4,1,256], index: 2, kind: input, shape index: {}]
  %s3 = inlined_call_operand.vmem [shape: bf16[4,4,256,256], index: 3, kind: input, shape index: {}]
  %s4 = inlined_call_operand.hbm [shape: f32[4,4,1,256], index: 4, kind: input, shape index: {}]
  %s5 = inlined_call_operand.vmem [shape: f32[4,5,1,256], index: 5, kind: input, shape index: {}]
  %s6 = inlined_call_operand.hbm [shape: f32[4,5,1,256], index: 6, kind: input, shape index: {}]
  %s7 = inlined_call_operand.hbm [shape: bf16[4,256,128], index: 7, kind: input, shape index: {}]
  %s8 = inlined_call_operand.vmem [shape: f32[4,1,128], index: 8, kind: input, shape index: {}]
  %s9 = inlined_call_operand.vmem [shape: f32[4,4,128], index: 9, kind: output, shape index: {}]
  %s10 = sld [smem:[#allocation0]]
  $region93: #{pose_generator_forward.3} parent=0
    _
  %s12 = ssub.s32 1, %s10
  %s13 = scalar_select 0, %s12, %s10
  $region1: #{pose_generator_forward.3} parent=0
    #allocation2 [shape = 'u8[262144]{0}', space=vmem, size = 0x40000, scoped, tag = 'input window, operand 1']
    #allocation3 [shape = 's32[2]{0}', space=sflag, size = 0x8, scoped, tag = 'scoped memory for pose_generator_forward.3']
    #allocation4 [shape = 'u8[16384]{0}', space=vmem, size = 0x4000, scoped, tag = 'input window, operand 4']
    #allocation5 [shape = 's32[2]{0}', space=sflag, size = 0x8, scoped, tag = 'scoped memory for pose_generator_forward.3']
    #allocation6 [shape = 'u8[20480]{0}', space=vmem, size = 0x5000, scoped, tag = 'input window, operand 6']
    #allocation7 [shape = 'u8[262144]{0}', space=vmem, size = 0x40000, scoped, tag = 'input window, operand 7']
    #allocation8 [shape = 's32[2]{0}', space=sflag, size = 0x8, scoped, tag = 'scoped memory for pose_generator_forward.3']
    %14 = vsyncpa [#allocation3], 0
    %s15 = scalar_lea.sflag [#allocation3], 1
    %16 = vsyncpa %s15, 0
    %17 = vsyncpa [#allocation5], 0
    %s18 = scalar_lea.sflag [#allocation5], 1
    %19 = vsyncpa %s18, 0
    %20 = vsyncpa [#allocation8], 0
    %s21 = scalar_lea.sflag [#allocation8], 1
    %22 = vsyncpa %s21, 0
    loop: start=0, step=1, limit=4
    $region2: #{pose_generator_forward.3} parent=1 // loop_pre_header
      _
    $region3: #{pose_generator_forward.3} parent=1 // loop_header
      %s24 = sphi 0, %s28
      %p25 = scmp.ge.s32.totalorder %s24, 4
      %s34 = sphi 0, %s36
      %s37 = sphi 0, %s34
      %s38 = sphi 0, %s37
      %s54 = sphi 0, %s38
      %s60 = sphi 0, %s62
      %s63 = sphi 0, %s60
      %s64 = sphi 0, %s63
      %s80 = sphi 0, %s64
      %s86 = sphi 0, %s88
      %s89 = sphi 0, %s86
      %s90 = sphi 0, %s89
      %s106 = sphi 0, %s90
      %s112 = sphi 0, %s114
      %s115 = sphi 0, %s112
      %s116 = sphi 0, %s115
      %s132 = sphi 0, %s116
      %s138 = sphi 0, %s140
      %s141 = sphi 0, %s138
      %s142 = sphi 0, %s141
      %s158 = sphi 0, %s142
      %s164 = sphi 0, %s166
      %s167 = sphi 0, %s164
      %s168 = sphi 0, %s167
      %s184 = sphi 0, %s168
      %s190 = sphi 0, %s192
      %s193 = sphi 0, %s190
      %s194 = sphi 0, %s193
      %s210 = sphi 0, %s194
      %s216 = sphi 0, %s218
      %s219 = sphi 0, %s216
      %s220 = sphi 0, %s219
      %s236 = sphi 0, %s220
      %s242 = sphi 0, %s244
      %s245 = sphi 0, %s242
      %s246 = sphi 0, %s245
      %s262 = sphi 0, %s246
      %s268 = sphi 0, %s270
      %s271 = sphi 0, %s268
      %s272 = sphi 0, %s271
      %s288 = sphi 0, %s272
    $region4: #{pose_generator_forward.3} parent=1 // loop_header_branch
      %27 = sbr.rel (%p25) target = $region8
    $region5: #{pose_generator_forward.3} parent=1 // loop_body
      %s29 = ssub.s32 %s24, 1
      %s30 = ssub.s32 %s24, 2
      %s31 = sadd.s32 %s24, 1
      %s32 = ssub.s32 %s24, %s31
      %p33 = scmp.eq.s32.totalorder %s32, 0
      %s35 = sadd.s32 %s34, 1
      %s36 = scalar_select %p33, %s34, %s35
      %p39 = pneg %p33
      %p40 = scmp.eq.s32.totalorder %s24, 1
      %p41 = por %p39, %p40
      %p42 = scmp.ne.s32.totalorder %s34, %s37
      %p43 = scmp.eq.s32.totalorder %s24, 0
      %p44 = por %p42, %p43
      %p45 = scmp.ne.s32.totalorder %s34, %s37
      %p46 = scmp.eq.s32.totalorder %s29, 1
      %p47 = por %p45, %p46
      %p48 = scmp.ne.s32.totalorder %s37, %s38
      %p49 = scmp.eq.s32.totalorder %s29, 0
      %p50 = por %p48, %p49
      %p51 = scmp.ne.s32.totalorder %s37, %s38
      %p52 = scmp.eq.s32.totalorder %s30, 1
      %p53 = por %p51, %p52
      %p55 = scmp.ne.s32.totalorder %s38, %s54
      %p56 = scmp.eq.s32.totalorder %s30, 0
      %p57 = por %p55, %p56
      %s58 = ssub.s32 %s24, %s31
      %p59 = scmp.eq.s32.totalorder %s58, 0
      %s61 = sadd.s32 %s60, 1
      %s62 = scalar_select %p59, %s60, %s61
      %p65 = pneg %p59
      %p66 = scmp.eq.s32.totalorder %s24, 1
      %p67 = por %p65, %p66
      %p68 = scmp.ne.s32.totalorder %s60, %s63
      %p69 = scmp.eq.s32.totalorder %s24, 0
      %p70 = por %p68, %p69
      %p71 = scmp.ne.s32.totalorder %s60, %s63
      %p72 = scmp.eq.s32.totalorder %s29, 1
      %p73 = por %p71, %p72
      %p74 = scmp.ne.s32.totalorder %s63, %s64
      %p75 = scmp.eq.s32.totalorder %s29, 0
      %p76 = por %p74, %p75
      %p77 = scmp.ne.s32.totalorder %s63, %s64
      %p78 = scmp.eq.s32.totalorder %s30, 1
      %p79 = por %p77, %p78
      %p81 = scmp.ne.s32.totalorder %s64, %s80
      %p82 = scmp.eq.s32.totalorder %s30, 0
      %p83 = por %p81, %p82
      %s84 = ssub.s32 %s24, %s31
      %p85 = scmp.eq.s32.totalorder %s84, 0
      %s87 = sadd.s32 %s86, 1
      %s88 = scalar_select %p85, %s86, %s87
      %p91 = pneg %p85
      %p92 = scmp.eq.s32.totalorder %s24, 1
      %p93 = por %p91, %p92
      %p94 = scmp.ne.s32.totalorder %s86, %s89
      %p95 = scmp.eq.s32.totalorder %s24, 0
      %p96 = por %p94, %p95
      %p97 = scmp.ne.s32.totalorder %s86, %s89
      %p98 = scmp.eq.s32.totalorder %s29, 1
      %p99 = por %p97, %p98
      %p100 = scmp.ne.s32.totalorder %s89, %s90
      %p101 = scmp.eq.s32.totalorder %s29, 0
      %p102 = por %p100, %p101
      %p103 = scmp.ne.s32.totalorder %s89, %s90
      %p104 = scmp.eq.s32.totalorder %s30, 1
      %p105 = por %p103, %p104
      %p107 = scmp.ne.s32.totalorder %s90, %s106
      %p108 = scmp.eq.s32.totalorder %s30, 0
      %p109 = por %p107, %p108
      %s110 = ssub.s32 %s24, %s31
      %p111 = scmp.eq.s32.totalorder %s110, 0
      %s113 = sadd.s32 %s112, 1
      %s114 = scalar_select %p111, %s112, %s113
      %p117 = pneg %p111
      %p118 = scmp.eq.s32.totalorder %s24, 1
      %p119 = por %p117, %p118
      %p120 = scmp.ne.s32.totalorder %s112, %s115
      %p121 = scmp.eq.s32.totalorder %s24, 0
      %p122 = por %p120, %p121
      %p123 = scmp.ne.s32.totalorder %s112, %s115
      %p124 = scmp.eq.s32.totalorder %s29, 1
      %p125 = por %p123, %p124
      %p126 = scmp.ne.s32.totalorder %s115, %s116
      %p127 = scmp.eq.s32.totalorder %s29, 0
      %p128 = por %p126, %p127
      %p129 = scmp.ne.s32.totalorder %s115, %s116
      %p130 = scmp.eq.s32.totalorder %s30, 1
      %p131 = por %p129, %p130
      %p133 = scmp.ne.s32.totalorder %s116, %s132
      %p134 = scmp.eq.s32.totalorder %s30, 0
      %p135 = por %p133, %p134
      %s136 = ssub.s32 %s24, %s31
      %p137 = scmp.eq.s32.totalorder %s136, 0
      %s139 = sadd.s32 %s138, 1
      %s140 = scalar_select %p137, %s138, %s139
      %p143 = pneg %p137
      %p144 = scmp.eq.s32.totalorder %s24, 1
      %p145 = por %p143, %p144
      %p146 = scmp.ne.s32.totalorder %s138, %s141
      %p147 = scmp.eq.s32.totalorder %s24, 0
      %p148 = por %p146, %p147
      %p149 = scmp.ne.s32.totalorder %s138, %s141
      %p150 = scmp.eq.s32.totalorder %s29, 1
      %p151 = por %p149, %p150
      %p152 = scmp.ne.s32.totalorder %s141, %s142
      %p153 = scmp.eq.s32.totalorder %s29, 0
      %p154 = por %p152, %p153
      %p155 = scmp.ne.s32.totalorder %s141, %s142
      %p156 = scmp.eq.s32.totalorder %s30, 1
      %p157 = por %p155, %p156
      %p159 = scmp.ne.s32.totalorder %s142, %s158
      %p160 = scmp.eq.s32.totalorder %s30, 0
      %p161 = por %p159, %p160
      %s162 = ssub.s32 %s24, %s31
      %p163 = scmp.eq.s32.totalorder %s162, 0
      %s165 = sadd.s32 %s164, 1
      %s166 = scalar_select %p163, %s164, %s165
      %p169 = pneg %p163
      %p170 = scmp.eq.s32.totalorder %s24, 1
      %p171 = por %p169, %p170
      %p172 = scmp.ne.s32.totalorder %s164, %s167
      %p173 = scmp.eq.s32.totalorder %s24, 0
      %p174 = por %p172, %p173
      %p175 = scmp.ne.s32.totalorder %s164, %s167
      %p176 = scmp.eq.s32.totalorder %s29, 1
      %p177 = por %p175, %p176
      %p178 = scmp.ne.s32.totalorder %s167, %s168
      %p179 = scmp.eq.s32.totalorder %s29, 0
      %p180 = por %p178, %p179
      %p181 = scmp.ne.s32.totalorder %s167, %s168
      %p182 = scmp.eq.s32.totalorder %s30, 1
      %p183 = por %p181, %p182
      %p185 = scmp.ne.s32.totalorder %s168, %s184
      %p186 = scmp.eq.s32.totalorder %s30, 0
      %p187 = por %p185, %p186
      %s188 = ssub.s32 %s24, %s31
      %p189 = scmp.eq.s32.totalorder %s188, 0
      %s191 = sadd.s32 %s190, 1
      %s192 = scalar_select %p189, %s190, %s191
      %p195 = pneg %p189
      %p196 = scmp.eq.s32.totalorder %s24, 1
      %p197 = por %p195, %p196
      %p198 = scmp.ne.s32.totalorder %s190, %s193
      %p199 = scmp.eq.s32.totalorder %s24, 0
      %p200 = por %p198, %p199
      %p201 = scmp.ne.s32.totalorder %s190, %s193
      %p202 = scmp.eq.s32.totalorder %s29, 1
      %p203 = por %p201, %p202
      %p204 = scmp.ne.s32.totalorder %s193, %s194
      %p205 = scmp.eq.s32.totalorder %s29, 0
      %p206 = por %p204, %p205
      %p207 = scmp.ne.s32.totalorder %s193, %s194
      %p208 = scmp.eq.s32.totalorder %s30, 1
      %p209 = por %p207, %p208
      %p211 = scmp.ne.s32.totalorder %s194, %s210
      %p212 = scmp.eq.s32.totalorder %s30, 0
      %p213 = por %p211, %p212
      %s214 = ssub.s32 %s24, %s31
      %p215 = scmp.eq.s32.totalorder %s214, 0
      %s217 = sadd.s32 %s216, 1
      %s218 = scalar_select %p215, %s216, %s217
      %p221 = pneg %p215
      %p222 = scmp.eq.s32.totalorder %s24, 1
      %p223 = por %p221, %p222
      %p224 = scmp.ne.s32.totalorder %s216, %s219
      %p225 = scmp.eq.s32.totalorder %s24, 0
      %p226 = por %p224, %p225
      %p227 = scmp.ne.s32.totalorder %s216, %s219
      %p228 = scmp.eq.s32.totalorder %s29, 1
      %p229 = por %p227, %p228
      %p230 = scmp.ne.s32.totalorder %s219, %s220
      %p231 = scmp.eq.s32.totalorder %s29, 0
      %p232 = por %p230, %p231
      %p233 = scmp.ne.s32.totalorder %s219, %s220
      %p234 = scmp.eq.s32.totalorder %s30, 1
      %p235 = por %p233, %p234
      %p237 = scmp.ne.s32.totalorder %s220, %s236
      %p238 = scmp.eq.s32.totalorder %s30, 0
      %p239 = por %p237, %p238
      %s240 = ssub.s32 %s24, %s31
      %p241 = scmp.eq.s32.totalorder %s240, 0
      %s243 = sadd.s32 %s242, 1
      %s244 = scalar_select %p241, %s242, %s243
      %p247 = pneg %p241
      %p248 = scmp.eq.s32.totalorder %s24, 1
      %p249 = por %p247, %p248
      %p250 = scmp.ne.s32.totalorder %s242, %s245
      %p251 = scmp.eq.s32.totalorder %s24, 0
      %p252 = por %p250, %p251
      %p253 = scmp.ne.s32.totalorder %s242, %s245
      %p254 = scmp.eq.s32.totalorder %s29, 1
      %p255 = por %p253, %p254
      %p256 = scmp.ne.s32.totalorder %s245, %s246
      %p257 = scmp.eq.s32.totalorder %s29, 0
      %p258 = por %p256, %p257
      %p259 = scmp.ne.s32.totalorder %s245, %s246
      %p260 = scmp.eq.s32.totalorder %s30, 1
      %p261 = por %p259, %p260
      %p263 = scmp.ne.s32.totalorder %s246, %s262
      %p264 = scmp.eq.s32.totalorder %s30, 0
      %p265 = por %p263, %p264
      %s266 = ssub.s32 %s24, %s31
      %p267 = scmp.eq.s32.totalorder %s266, 0
      %s269 = sadd.s32 %s268, 1
      %s270 = scalar_select %p267, %s268, %s269
      %p273 = pneg %p267
      %p274 = scmp.eq.s32.totalorder %s24, 1
      %p275 = por %p273, %p274
      %p276 = scmp.ne.s32.totalorder %s268, %s271
      %p277 = scmp.eq.s32.totalorder %s24, 0
      %p278 = por %p276, %p277
      %p279 = scmp.ne.s32.totalorder %s268, %s271
      %p280 = scmp.eq.s32.totalorder %s29, 1
      %p281 = por %p279, %p280
      %p282 = scmp.ne.s32.totalorder %s271, %s272
      %p283 = scmp.eq.s32.totalorder %s29, 0
      %p284 = por %p282, %p283
      %p285 = scmp.ne.s32.totalorder %s271, %s272
      %p286 = scmp.eq.s32.totalorder %s30, 1
      %p287 = por %p285, %p286
      %p289 = scmp.ne.s32.totalorder %s272, %s288
      %p290 = scmp.eq.s32.totalorder %s30, 0
      %p291 = por %p289, %p290
      %p292 = scmp.le.s32.totalorder 1, %s24
      %p293 = scmp.lt.s32.totalorder %s24, 3
      %p294 = pnand %p292, %p293
      %p295 = pneg %p294
      // Predicated region
      $region9: #{pose_generator_forward.3} parent=5 // pred_check
        _
      $region10: #{pose_generator_forward.3} parent=5 // pred_check_branch
        %297 = sbr.rel (%p294) target = $region12
      $region11: #{pose_generator_forward.3} parent=5 // pred_region
        %s298 = ssub.s32 %s24, 1
      $region12: #{pose_generator_forward.3} parent=5 // pred_fallthru
        _
      %p299 = scmp.lt.s32.totalorder %s24, 2
      // Predicated region
      $region13: #{pose_generator_forward.3} parent=5 // pred_check
        %p300 = pneg %p299
      $region14: #{pose_generator_forward.3} parent=5 // pred_check_branch
        %302 = sbr.rel (%p300) target = $region16
      $region15: #{pose_generator_forward.3} parent=5 // pred_region
        // Predicated region
        $region17: #{pose_generator_forward.3} parent=15 // pred_check
          %p303 = pneg %p44
        $region18: #{pose_generator_forward.3} parent=15 // pred_check_branch
          %305 = sbr.rel (%p303) target = $region20
        $region19: #{pose_generator_forward.3} parent=15 // pred_region
          %s306 = smul.u32 2, %s24
          %p307 = scmp.lt.s32.totalorder %s306, 3
          %s308 = scalar_select %p307, %s306, 3
          %s309 = smul.addr %s308, 4
          %s310 = scalar_lea.vmem %s0, %s309
          %s311 = smul.u32 2, %s24
        $region20: #{pose_generator_forward.3} parent=15 // pred_fallthru
          _
        // Predicated region
        $region21: #{pose_generator_forward.3} parent=15 // pred_check
          %p312 = pneg %p70
        $region22: #{pose_generator_forward.3} parent=15 // pred_check_branch
          %314 = sbr.rel (%p312) target = $region24
        $region23: #{pose_generator_forward.3} parent=15 // pred_region
          %s315 = sand.u32 %s60, 1
          %s316 = scalar_lea.sflag [#allocation3], %s315
          %s317 = sand.u32 %s60, 1
          %s318 = smul.addr %s317, 256
          %s319 = scalar_lea.vmem [#allocation2], %s318
          %s320 = smul.u32 2, %s24
          %s322 = ssub.s32 4096, 4096
          %323 = vsyncadd %s316, %s322
          %s324 = smul.addr %s320, 32
          %s325 = smul.addr %s324, 64
          %s326 = scalar_lea.hbm %s1, %s325
          %s327 = sshll.u32 %s319, 4
          %s328 = int_to_ptr.vmem [resolvable:$true] %s327
          %333 = dma.hbm_to_vmem [thread:$0]  %s326, 4096, %s328, %s316, 128, 128, 8
        $region24: #{pose_generator_forward.3} parent=15 // pred_fallthru
          _
        // Predicated region
        $region25: #{pose_generator_forward.3} parent=15 // pred_check
          %p334 = pneg %p96
        $region26: #{pose_generator_forward.3} parent=15 // pred_check_branch
          %336 = sbr.rel (%p334) target = $region28
        $region27: #{pose_generator_forward.3} parent=15 // pred_region
          %s337 = smul.u32 2, %s24
          %p338 = scmp.lt.s32.totalorder %s337, 3
          %s339 = scalar_select %p338, %s337, 3
          %s340 = smul.addr %s339, 2
          %s341 = scalar_lea.vmem %s2, %s340
          %s342 = smul.u32 2, %s24
        $region28: #{pose_generator_forward.3} parent=15 // pred_fallthru
          _
        // Predicated region
        $region29: #{pose_generator_forward.3} parent=15 // pred_check
          %p343 = pneg %p122
        $region30: #{pose_generator_forward.3} parent=15 // pred_check_branch
          %345 = sbr.rel (%p343) target = $region32
        $region31: #{pose_generator_forward.3} parent=15 // pred_region
          %s346 = smul.u32 2, %s24
          %p347 = scmp.lt.s32.totalorder %s346, 3
          %s348 = scalar_select %p347, %s346, 3
          %s349 = smul.addr %s348, 256
          %s350 = smul.addr %s349, 4
          %s351 = scalar_lea.vmem %s3, %s350
          %s352 = smul.u32 2, %s24
        $region32: #{pose_generator_forward.3} parent=15 // pred_fallthru
          _
        // Predicated region
        $region33: #{pose_generator_forward.3} parent=15 // pred_check
          %p353 = pneg %p148
        $region34: #{pose_generator_forward.3} parent=15 // pred_check_branch
          %355 = sbr.rel (%p353) target = $region36
        $region35: #{pose_generator_forward.3} parent=15 // pred_region
          %s356 = sand.u32 %s24, 1
          %s357 = scalar_lea.sflag [#allocation5], %s356
          %s358 = sand.u32 %s138, 1
          %s359 = smul.addr %s358, 16
          %s360 = scalar_lea.vmem [#allocation4], %s359
          %s361 = smul.u32 2, %s24
          %s363 = ssub.s32 256, 256
          %364 = vsyncadd %s357, %s363
          %s365 = smul.addr %s361, 8
          %s366 = smul.addr %s365, 16
          %s367 = scalar_lea.hbm %s4, %s366
          %s368 = sshll.u32 %s360, 4
          %s369 = int_to_ptr.vmem [resolvable:$true] %s368
          %374 = dma.hbm_to_vmem [thread:$0]  %s367, 256, %s369, %s357, 32, 32, 2
        $region36: #{pose_generator_forward.3} parent=15 // pred_fallthru
          _
        // Predicated region
        $region37: #{pose_generator_forward.3} parent=15 // pred_check
          %p375 = pneg %p174
        $region38: #{pose_generator_forward.3} parent=15 // pred_check_branch
          %377 = sbr.rel (%p375) target = $region40
        $region39: #{pose_generator_forward.3} parent=15 // pred_region
          %s378 = smul.u32 2, %s24
          %p379 = scmp.lt.s32.totalorder %s378, 3
          %s380 = scalar_select %p379, %s378, 3
          %s381 = smul.addr %s380, 10
          %s382 = scalar_lea.vmem %s5, %s381
          %s383 = smul.u32 2, %s24
        $region40: #{pose_generator_forward.3} parent=15 // pred_fallthru
          _
        // Predicated region
        $region41: #{pose_generator_forward.3} parent=15 // pred_check
          %p384 = pneg %p200
        $region42: #{pose_generator_forward.3} parent=15 // pred_check_branch
          %386 = sbr.rel (%p384) target = $region44
        $region43: #{pose_generator_forward.3} parent=15 // pred_region
          %s387 = sand.u32 %s24, 1
          %s388 = scalar_lea.sflag [#allocation5], %s387
          %s389 = sand.u32 %s190, 1
          %s390 = smul.addr %s389, 20
          %s391 = scalar_lea.vmem [#allocation6], %s390
          %s392 = smul.u32 2, %s24
          %s394 = ssub.s32 320, 320
          %395 = vsyncadd %s388, %s394
          %s396 = smul.addr %s392, 10
          %s397 = smul.addr %s396, 16
          %s398 = scalar_lea.hbm %s6, %s397
          %s399 = sshll.u32 %s391, 4
          %s400 = int_to_ptr.vmem [resolvable:$true] %s399
          %405 = dma.hbm_to_vmem [thread:$0]  %s398, 320, %s400, %s388, 32, 32, 2
        $region44: #{pose_generator_forward.3} parent=15 // pred_fallthru
          _
        // Predicated region
        $region45: #{pose_generator_forward.3} parent=15 // pred_check
          %p406 = pneg %p226
        $region46: #{pose_generator_forward.3} parent=15 // pred_check_branch
          %408 = sbr.rel (%p406) target = $region48
        $region47: #{pose_generator_forward.3} parent=15 // pred_region
          %s409 = sand.u32 %s216, 1
          %s410 = scalar_lea.sflag [#allocation8], %s409
          %s411 = sand.u32 %s216, 1
          %s412 = smul.addr %s411, 256
          %s413 = scalar_lea.vmem [#allocation7], %s412
          %s414 = smul.u32 2, %s24
          %s416 = ssub.s32 4096, 4096
          %417 = vsyncadd %s410, %s416
          %s418 = smul.addr %s414, 32
          %s419 = smul.addr %s418, 64
          %s420 = scalar_lea.hbm %s7, %s419
          %s421 = sshll.u32 %s413, 4
          %s422 = int_to_ptr.vmem [resolvable:$true] %s421
          %427 = dma.hbm_to_vmem [thread:$0]  %s420, 4096, %s422, %s410, 64, 64, 4
        $region48: #{pose_generator_forward.3} parent=15 // pred_fallthru
          _
        // Predicated region
        $region49: #{pose_generator_forward.3} parent=15 // pred_check
          %p428 = pneg %p252
        $region50: #{pose_generator_forward.3} parent=15 // pred_check_branch
          %430 = sbr.rel (%p428) target = $region52
        $region51: #{pose_generator_forward.3} parent=15 // pred_region
          %s431 = smul.u32 2, %s24
          %p432 = scmp.lt.s32.totalorder %s431, 3
          %s433 = scalar_select %p432, %s431, 3
          %s434 = scalar_lea.vmem %s8, %s433
          %s435 = smul.u32 2, %s24
        $region52: #{pose_generator_forward.3} parent=15 // pred_fallthru
          _
      $region16: #{pose_generator_forward.3} parent=5 // pred_fallthru
        _
      %p436 = scmp.le.s32.totalorder 1, %s24
      %p437 = scmp.lt.s32.totalorder %s24, 3
      %p438 = pnand %p436, %p437
      %p439 = pneg %p438
      // Predicated region
      $region53: #{pose_generator_forward.3} parent=5 // pred_check
        _
      $region54: #{pose_generator_forward.3} parent=5 // pred_check_branch
        %441 = sbr.rel (%p438) target = $region56
      $region55: #{pose_generator_forward.3} parent=5 // pred_region
        %s442 = ssub.s32 %s24, 1
        %s443 = sand.u32 %s63, 1
        %s444 = scalar_lea.sflag [#allocation3], %s443
        %s445 = sand.u32 %s63, 1
        %s446 = smul.addr %s445, 256
        %s447 = scalar_lea.vmem [#allocation2], %s446
        // Predicated region
        $region57: #{pose_generator_forward.3} parent=55 // pred_check
          %p448 = pneg %p76
        $region58: #{pose_generator_forward.3} parent=55 // pred_check_branch
          %450 = sbr.rel (%p448) target = $region60
        $region59: #{pose_generator_forward.3} parent=55 // pred_region
          %451 = dma.done %s444, 4096
        $region60: #{pose_generator_forward.3} parent=55 // pred_fallthru
          _
        %s452 = sand.u32 %s29, 1
        %s453 = scalar_lea.sflag [#allocation5], %s452
        %s454 = sand.u32 %s141, 1
        %s455 = smul.addr %s454, 16
        %s456 = scalar_lea.vmem [#allocation4], %s455
        // Predicated region
        $region61: #{pose_generator_forward.3} parent=55 // pred_check
          %p457 = pneg %p154
        $region62: #{pose_generator_forward.3} parent=55 // pred_check_branch
          %459 = sbr.rel (%p457) target = $region64
        $region63: #{pose_generator_forward.3} parent=55 // pred_region
          %460 = dma.done %s453, 256
        $region64: #{pose_generator_forward.3} parent=55 // pred_fallthru
          _
        %s461 = sand.u32 %s29, 1
        %s462 = scalar_lea.sflag [#allocation5], %s461
        %s463 = sand.u32 %s193, 1
        %s464 = smul.addr %s463, 20
        %s465 = scalar_lea.vmem [#allocation6], %s464
        // Predicated region
        $region65: #{pose_generator_forward.3} parent=55 // pred_check
          %p466 = pneg %p206
        $region66: #{pose_generator_forward.3} parent=55 // pred_check_branch
          %468 = sbr.rel (%p466) target = $region68
        $region67: #{pose_generator_forward.3} parent=55 // pred_region
          %469 = dma.done %s462, 320
        $region68: #{pose_generator_forward.3} parent=55 // pred_fallthru
          _
        %s470 = sand.u32 %s219, 1
        %s471 = scalar_lea.sflag [#allocation8], %s470
        %s472 = sand.u32 %s219, 1
        %s473 = smul.addr %s472, 256
        %s474 = scalar_lea.vmem [#allocation7], %s473
        // Predicated region
        $region69: #{pose_generator_forward.3} parent=55 // pred_check
          %p475 = pneg %p232
        $region70: #{pose_generator_forward.3} parent=55 // pred_check_branch
          %477 = sbr.rel (%p475) target = $region72
        $region71: #{pose_generator_forward.3} parent=55 // pred_region
          %478 = dma.done %s471, 4096
        $region72: #{pose_generator_forward.3} parent=55 // pred_fallthru
          _
        %s479 = smul.u32 2, %s29
        %p480 = scmp.lt.s32.totalorder %s479, 3
        %s481 = scalar_select %p480, %s479, 3
        %s482 = smul.addr %s481, 4
        %s483 = scalar_lea.vmem %s0, %s482
        %p484 = pneg %p50
        %p485 = pneg %p47
        %s486 = sand.u32 %s63, 1
        %s487 = scalar_lea.sflag [#allocation3], %s486
        %s488 = sand.u32 %s63, 1
        %s489 = smul.addr %s488, 256
        %s490 = scalar_lea.vmem [#allocation2], %s489
        %p491 = pneg %p76
        %p492 = pneg %p73
        %s493 = smul.u32 2, %s29
        %p494 = scmp.lt.s32.totalorder %s493, 3
        %s495 = scalar_select %p494, %s493, 3
        %s496 = smul.addr %s495, 2
        %s497 = scalar_lea.vmem %s2, %s496
        %p498 = pneg %p102
        %p499 = pneg %p99
        %s500 = smul.u32 2, %s29
        %p501 = scmp.lt.s32.totalorder %s500, 3
        %s502 = scalar_select %p501, %s500, 3
        %s503 = smul.addr %s502, 256
        %s504 = smul.addr %s503, 4
        %s505 = scalar_lea.vmem %s3, %s504
        %p506 = pneg %p128
        %p507 = pneg %p125
        %s508 = sand.u32 %s29, 1
        %s509 = scalar_lea.sflag [#allocation5], %s508
        %s510 = sand.u32 %s141, 1
        %s511 = smul.addr %s510, 16
        %s512 = scalar_lea.vmem [#allocation4], %s511
        %p513 = pneg %p154
        %p514 = pneg %p151
        %s515 = smul.u32 2, %s29
        %p516 = scmp.lt.s32.totalorder %s515, 3
        %s517 = scalar_select %p516, %s515, 3
        %s518 = smul.addr %s517, 10
        %s519 = scalar_lea.vmem %s5, %s518
        %p520 = pneg %p180
        %p521 = pneg %p177
        %s522 = sand.u32 %s29, 1
        %s523 = scalar_lea.sflag [#allocation5], %s522
        %s524 = sand.u32 %s193, 1
        %s525 = smul.addr %s524, 20
        %s526 = scalar_lea.vmem [#allocation6], %s525
        %p527 = pneg %p206
        %p528 = pneg %p203
        %s529 = sand.u32 %s219, 1
        %s530 = scalar_lea.sflag [#allocation8], %s529
        %s531 = sand.u32 %s219, 1
        %s532 = smul.addr %s531, 256
        %s533 = scalar_lea.vmem [#allocation7], %s532
        %p534 = pneg %p232
        %p535 = pneg %p229
        %s536 = smul.u32 2, %s29
        %p537 = scmp.lt.s32.totalorder %s536, 3
        %s538 = scalar_select %p537, %s536, 3
        %s539 = scalar_lea.vmem %s8, %s538
        %p540 = pneg %p258
        %p541 = pneg %p255
        %p542 = pneg %p284
        %p543 = pneg %p281
        %s544 = smul.u32 2, %s29
        %p545 = scmp.lt.s32.totalorder %s544, 3
        %s546 = scalar_select %p545, %s544, 3
        %s547 = smul.addr %s546, 4
        %s548 = scalar_lea.vmem %s9, %s547
        %s549 = smul.u32 2, %s29
        %p550 = scmp.lt.s32.totalorder %s549, 3
        %s551 = scalar_select %p550, %s549, 3
        %s552 = smul.addr %s551, 4
        %s553 = scalar_lea.vmem %s0, %s552
        %s554 = smul.u32 2, %s29
        %s555 = smul.u32 2, %s29
        %s556 = smul.u32 2, %s29
        %p557 = scmp.lt.s32.totalorder %s556, 3
        %s558 = scalar_select %p557, %s556, 3
        %s559 = smul.addr %s558, 2
        %s560 = scalar_lea.vmem %s2, %s559
        %s561 = smul.u32 2, %s29
        %s562 = smul.u32 2, %s29
        %p563 = scmp.lt.s32.totalorder %s562, 3
        %s564 = scalar_select %p563, %s562, 3
        %s565 = smul.addr %s564, 256
        %s566 = smul.addr %s565, 4
        %s567 = scalar_lea.vmem %s3, %s566
        %s568 = smul.u32 2, %s29
        %s569 = smul.u32 2, %s29
        %s570 = smul.u32 2, %s29
        %p571 = scmp.lt.s32.totalorder %s570, 3
        %s572 = scalar_select %p571, %s570, 3
        %s573 = smul.addr %s572, 10
        %s574 = scalar_lea.vmem %s5, %s573
        %s575 = smul.u32 2, %s29
        %s576 = smul.u32 2, %s29
        %s577 = smul.u32 2, %s29
        %s578 = smul.u32 2, %s29
        %p579 = scmp.lt.s32.totalorder %s578, 3
        %s580 = scalar_select %p579, %s578, 3
        %s581 = scalar_lea.vmem %s8, %s580
        %s582 = smul.u32 2, %s29
        %s583 = smul.u32 2, %s29
        %p584 = scmp.lt.s32.totalorder %s583, 3
        %s585 = scalar_select %p584, %s583, 3
        %s586 = smul.addr %s585, 4
        %s587 = scalar_lea.vmem %s9, %s586
        %s588 = smul.u32 2, %s29
        %v590 = vld [vmem:[%s553] sm:$0xf]
        %v591 = vpack.c.bf16 %v590, %v590
        %v592 = vld [vmem:[%s447] sm:$0xff]
        %v593 = vld [vmem:[%s447 + $0x8] sm:$0xff]
        %v594 = vld [vmem:[%s447 + $0x10] sm:$0xff]
        %v595 = vld [vmem:[%s447 + $0x18] sm:$0xff]
        %v596 = vld [vmem:[%s447 + $0x20] sm:$0xff]
        %v597 = vld [vmem:[%s447 + $0x28] sm:$0xff]
        %v598 = vld [vmem:[%s447 + $0x30] sm:$0xff]
        %v599 = vld [vmem:[%s447 + $0x38] sm:$0xff]
        %v600 = vld [vmem:[%s447 + $0x40] sm:$0xff]
        %v601 = vld [vmem:[%s447 + $0x48] sm:$0xff]
        %v602 = vld [vmem:[%s447 + $0x50] sm:$0xff]
        %v603 = vld [vmem:[%s447 + $0x58] sm:$0xff]
        %v604 = vld [vmem:[%s447 + $0x60] sm:$0xff]
        %v605 = vld [vmem:[%s447 + $0x68] sm:$0xff]
        %v606 = vld [vmem:[%s447 + $0x70] sm:$0xff]
        %v607 = vld [vmem:[%s447 + $0x78] sm:$0xff]
        %v608 = vld [vmem:[%s560] sm:$0x3]
        %v610 = vlaneseq
        %v611 = vshrl.u32 %v610, 7
        %v612 = vsub.s32 0, %v611
        %v613 = vrot.slane %v608, %v612
        %v614 = vlaneseq
        %v615 = vshrl.u32 %v614, 7
        %v616 = vsub.s32 1, %v615
        %v617 = vrot.slane %v608, %v616
        %v636 = vunpack.c.l.b16 %v592
        %v637 = vunpack.c.h.b16 %v592
        %v638 = vunpack.c.l.b16 %v593
        %v639 = vunpack.c.h.b16 %v593
        %v640 = vunpack.c.l.b16 %v594
        %v641 = vunpack.c.h.b16 %v594
        %v642 = vunpack.c.l.b16 %v595
        %v643 = vunpack.c.h.b16 %v595
        %v644 = vunpack.c.l.b16 %v596
        %v645 = vunpack.c.h.b16 %v596
        %v646 = vunpack.c.l.b16 %v597
        %v647 = vunpack.c.h.b16 %v597
        %v648 = vunpack.c.l.b16 %v598
        %v649 = vunpack.c.h.b16 %v598
        %v650 = vunpack.c.l.b16 %v599
        %v651 = vunpack.c.h.b16 %v599
        %v652 = vunpack.c.l.b16 %v600
        %v653 = vunpack.c.h.b16 %v600
        %v654 = vunpack.c.l.b16 %v601
        %v655 = vunpack.c.h.b16 %v601
        %v656 = vunpack.c.l.b16 %v602
        %v657 = vunpack.c.h.b16 %v602
        %v658 = vunpack.c.l.b16 %v603
        %v659 = vunpack.c.h.b16 %v603
        %v660 = vunpack.c.l.b16 %v604
        %v661 = vunpack.c.h.b16 %v604
        %v662 = vunpack.c.l.b16 %v605
        %v663 = vunpack.c.h.b16 %v605
        %v664 = vunpack.c.l.b16 %v606
        %v665 = vunpack.c.h.b16 %v606
        %v666 = vunpack.c.l.b16 %v607
        %v667 = vunpack.c.h.b16 %v607
        %v668 = vpack.c.b16 %v638, %v636
        %v669 = vpack.c.b16 %v639, %v637
        %v670 = vpack.c.b16 %v642, %v640
        %v671 = vpack.c.b16 %v643, %v641
        %v672 = vpack.c.b16 %v646, %v644
        %v673 = vpack.c.b16 %v647, %v645
        %v674 = vpack.c.b16 %v650, %v648
        %v675 = vpack.c.b16 %v651, %v649
        %v676 = vpack.c.b16 %v654, %v652
        %v677 = vpack.c.b16 %v655, %v653
        %v678 = vpack.c.b16 %v658, %v656
        %v679 = vpack.c.b16 %v659, %v657
        %v680 = vpack.c.b16 %v662, %v660
        %v681 = vpack.c.b16 %v663, %v661
        %v682 = vpack.c.b16 %v666, %v664
        %v683 = vpack.c.b16 %v667, %v665
        %700 = vmatprep.subr.bf16.mxu0 %v669
        %701 = vmatpush1.bf16.msra.mxu0 %v668
        %702 = vmatprep.subr.bf16.mxu0 %v671
        %703 = vmatpush1.bf16.msra.mxu0 %v670
        %704 = vmatprep.subr.bf16.mxu0 %v673
        %705 = vmatpush1.bf16.msra.mxu0 %v672
        %706 = vmatprep.subr.bf16.mxu0 %v675
        %707 = vmatpush1.bf16.msra.mxu0 %v674
        %708 = vmatprep.subr.bf16.mxu0 %v677
        %709 = vmatpush1.bf16.msra.mxu0 %v676
        %710 = vmatprep.subr.bf16.mxu0 %v679
        %711 = vmatpush1.bf16.msra.mxu0 %v678
        %712 = vmatprep.subr.bf16.mxu0 %v681
        %713 = vmatpush1.bf16.msra.mxu0 %v680
        %714 = vmatprep.subr.bf16.mxu0 %v683
        %715 = vmatpush1.bf16.msra.mxu0 %v682
        %716 = vmatprep.subr.bf16.mxu0 0
        %717 = vmatpush1.bf16.msra.mxu0 0
        %718 = vmatprep.subr.bf16.mxu0 0
        %719 = vmatpush1.bf16.msra.mxu0 0
        %720 = vmatprep.subr.bf16.mxu0 0
        %721 = vmatpush1.bf16.msra.mxu0 0
        %722 = vmatprep.subr.bf16.mxu0 0
        %723 = vmatpush1.bf16.msra.mxu0 0
        %724 = vmatprep.subr.bf16.mxu0 0
        %725 = vmatpush1.bf16.msra.mxu0 0
        %726 = vmatprep.subr.bf16.mxu0 0
        %727 = vmatpush1.bf16.msra.mxu0 0
        %728 = vmatprep.subr.bf16.mxu0 0
        %729 = vmatpush1.bf16.msra.mxu0 0
        %730 = vmatprep.subr.bf16.mxu0 0
        %731 = vmatpush1.bf16.msra.mxu0 0
        %732 = vmatprep.mubr.bf16.mxu0 0
        %733 = vmatmul.mubr.bf16.gmra.mrb[0].mxu0 %v591
        %v734 = vpop.f32.mrb[0].mxu0
        %v735 = vadd.f32 %v613, %v734
        %v736 = vpop.f32.mrb[0].mxu0
        %v737 = vadd.f32 %v617, %v736
        %v738 = vpop.f32.mrb[0].mxu0
        %v739 = vpop.f32.mrb[0].mxu0
        %740 = vdwg.mxu0
        %v741 = vld [vmem:[%s574] sm:$0x3]
        %v742 = vld [vmem:[%s465] sm:$0x3]
        %vm743 = vcmask 1043456
        %v744 = vsel %vm743, %v735, 0.0
        %v745 = vrot.slane %v744, 4
        %v746 = vadd.f32 %v744, %v745
        %v747 = vrot.slane %v746, 2
        %v748 = vadd.f32 %v746, %v747
        %v749 = vrot.slane %v748, 1
        %v750 = vadd.f32 %v748, %v749
        %v751 = vsel %vm743, %v737, 0.0
        %v752 = vrot.slane %v751, 4
        %v753 = vadd.f32 %v751, %v752
        %v754 = vrot.slane %v753, 2
        %v755 = vadd.f32 %v753, %v754
        %v756 = vrot.slane %v755, 1
        %v757 = vadd.f32 %v755, %v756
        %v758 = vrcp.pop 4.0
        %v759 = vmul.f32 %v750, %v758
        %v760 = vmul.f32 %v757, %v758
        %v761 = vmul.f32 %v735, %v735
        %v762 = vmul.f32 %v737, %v737
        %v763 = vsel %vm743, %v761, 0.0
        %v764 = vrot.slane %v763, 4
        %v765 = vadd.f32 %v763, %v764
        %v766 = vrot.slane %v765, 2
        %v767 = vadd.f32 %v765, %v766
        %v768 = vrot.slane %v767, 1
        %v769 = vadd.f32 %v767, %v768
        %v770 = vsel %vm743, %v762, 0.0
        %v771 = vrot.slane %v770, 4
        %v772 = vadd.f32 %v770, %v771
        %v773 = vrot.slane %v772, 2
        %v774 = vadd.f32 %v772, %v773
        %v775 = vrot.slane %v774, 1
        %v776 = vadd.f32 %v774, %v775
        %v777 = vmul.f32 %v769, %v758
        %v778 = vmul.f32 %v776, %v758
        %v779 = vmul.f32 %v759, %v759
        %v780 = vmul.f32 %v760, %v760
        %v781 = vsub.f32 %v777, %v779
        %v782 = vsub.f32 %v778, %v780
        %v783 = vmax.f32 %v781, 0.0
        %v784 = vmax.f32 %v782, 0.0
        %v785 = vadd.f32 %v783, 1e-05
        %v786 = vadd.f32 %v784, 1e-05
        %v787 = vrsqrt.pop %v785
        %v788 = vrsqrt.pop %v786
        %v791 = vcombine.low %v787, %v788
        %v793 = vunpack.c.l.s4 1966171168
        %v794 = vunpack.c.0.s8 %v793
        %v795 = vlaneseq
        %v796 = vshrl.u32 %v795, 7
        %v797 = vsub.s32 %v794, %v796
        %v798 = vrot.slane %v791, %v797
        %v800 = vunpack.c.l.s4 1966171168
        %v801 = vunpack.c.0.s8 %v800
        %v802 = vlaneseq
        %v803 = vshrl.u32 %v802, 7
        %v804 = vsub.s32 %v801, %v803
        %v805 = vrot.slane %v798, %v804
        %v807 = vmul.f32 %v741, %v805
        %v809 = vlaneseq
        %v810 = vshrl.u32 %v809, 7
        %v811 = vsub.s32 0, %v810
        %v812 = vrot.slane %v807, %v811
        %v813 = vlaneseq
        %v814 = vshrl.u32 %v813, 7
        %v815 = vsub.s32 1, %v814
        %v816 = vrot.slane %v807, %v815
        %v819 = vmul.f32 %v759, %v812
        %v820 = vmul.f32 %v760, %v816
        %v823 = vcombine.low %v819, %v820
        %v825 = vunpack.c.l.s4 1966171168
        %v826 = vunpack.c.0.s8 %v825
        %v827 = vlaneseq
        %v828 = vshrl.u32 %v827, 7
        %v829 = vsub.s32 %v826, %v828
        %v830 = vrot.slane %v823, %v829
        %v832 = vunpack.c.l.s4 1966171168
        %v833 = vunpack.c.0.s8 %v832
        %v834 = vlaneseq
        %v835 = vshrl.u32 %v834, 7
        %v836 = vsub.s32 %v833, %v835
        %v837 = vrot.slane %v830, %v836
        %v839 = vsub.f32 %v742, %v837
        %v840 = vmul.f32 %v735, %v812
        %v841 = vmul.f32 %v737, %v816
        %v843 = vlaneseq
        %v844 = vshrl.u32 %v843, 7
        %v845 = vsub.s32 0, %v844
        %v846 = vrot.slane %v839, %v845
        %v847 = vlaneseq
        %v848 = vshrl.u32 %v847, 7
        %v849 = vsub.s32 1, %v848
        %v850 = vrot.slane %v839, %v849
        %v853 = vadd.f32 %v840, %v846
        %v854 = vadd.f32 %v841, %v850
        %v855 = vmul.f32 %v853, 0.01
        %v856 = vmul.f32 %v854, 0.01
        %v857 = vmax.f32 %v853, %v855
        %v858 = vmax.f32 %v854, %v856
        %v859 = vpack.c.bf16 %v857, %v857
        %v860 = vpack.c.bf16 %v858, %v858
        %v861 = vld [vmem:[%s567] sm:$0xff]
        %v862 = vld [vmem:[%s567 + $0x8] sm:$0xff]
        %v863 = vld [vmem:[%s567 + $0x10] sm:$0xff]
        %v864 = vld [vmem:[%s567 + $0x18] sm:$0xff]
        %v865 = vld [vmem:[%s567 + $0x20] sm:$0xff]
        %v866 = vld [vmem:[%s567 + $0x28] sm:$0xff]
        %v867 = vld [vmem:[%s567 + $0x30] sm:$0xff]
        %v868 = vld [vmem:[%s567 + $0x38] sm:$0xff]
        %v869 = vld [vmem:[%s567 + $0x40] sm:$0xff]
        %v870 = vld [vmem:[%s567 + $0x48] sm:$0xff]
        %v871 = vld [vmem:[%s567 + $0x50] sm:$0xff]
        %v872 = vld [vmem:[%s567 + $0x58] sm:$0xff]
        %v873 = vld [vmem:[%s567 + $0x60] sm:$0xff]
        %v874 = vld [vmem:[%s567 + $0x68] sm:$0xff]
        %v875 = vld [vmem:[%s567 + $0x70] sm:$0xff]
        %v876 = vld [vmem:[%s567 + $0x78] sm:$0xff]
        %v877 = vld [vmem:[%s567 + $0x80] sm:$0xff]
        %v878 = vld [vmem:[%s567 + $0x88] sm:$0xff]
        %v879 = vld [vmem:[%s567 + $0x90] sm:$0xff]
        %v880 = vld [vmem:[%s567 + $0x98] sm:$0xff]
        %v881 = vld [vmem:[%s567 + $0xa0] sm:$0xff]
        %v882 = vld [vmem:[%s567 + $0xa8] sm:$0xff]
        %v883 = vld [vmem:[%s567 + $0xb0] sm:$0xff]
        %v884 = vld [vmem:[%s567 + $0xb8] sm:$0xff]
        %v885 = vld [vmem:[%s567 + $0xc0] sm:$0xff]
        %v886 = vld [vmem:[%s567 + $0xc8] sm:$0xff]
        %v887 = vld [vmem:[%s567 + $0xd0] sm:$0xff]
        %v888 = vld [vmem:[%s567 + $0xd8] sm:$0xff]
        %v889 = vld [vmem:[%s567 + $0xe0] sm:$0xff]
        %v890 = vld [vmem:[%s567 + $0xe8] sm:$0xff]
        %v891 = vld [vmem:[%s567 + $0xf0] sm:$0xff]
        %v892 = vld [vmem:[%s567 + $0xf8] sm:$0xff]
        %v893 = vld [vmem:[%s456] sm:$0x3]
        %v895 = vlaneseq
        %v896 = vshrl.u32 %v895, 7
        %v897 = vsub.s32 0, %v896
        %v898 = vrot.slane %v893, %v897
        %v899 = vlaneseq
        %v900 = vshrl.u32 %v899, 7
        %v901 = vsub.s32 1, %v900
        %v902 = vrot.slane %v893, %v901
        %v937 = vunpack.c.l.b16 %v861
        %v938 = vunpack.c.h.b16 %v861
        %v939 = vunpack.c.l.b16 %v862
        %v940 = vunpack.c.h.b16 %v862
        %v941 = vunpack.c.l.b16 %v863
        %v942 = vunpack.c.h.b16 %v863
        %v943 = vunpack.c.l.b16 %v864
        %v944 = vunpack.c.h.b16 %v864
        %v945 = vunpack.c.l.b16 %v865
        %v946 = vunpack.c.h.b16 %v865
        %v947 = vunpack.c.l.b16 %v866
        %v948 = vunpack.c.h.b16 %v866
        %v949 = vunpack.c.l.b16 %v867
        %v950 = vunpack.c.h.b16 %v867
        %v951 = vunpack.c.l.b16 %v868
        %v952 = vunpack.c.h.b16 %v868
        %v953 = vunpack.c.l.b16 %v869
        %v954 = vunpack.c.h.b16 %v869
        %v955 = vunpack.c.l.b16 %v870
        %v956 = vunpack.c.h.b16 %v870
        %v957 = vunpack.c.l.b16 %v871
        %v958 = vunpack.c.h.b16 %v871
        %v959 = vunpack.c.l.b16 %v872
        %v960 = vunpack.c.h.b16 %v872
        %v961 = vunpack.c.l.b16 %v873
        %v962 = vunpack.c.h.b16 %v873
        %v963 = vunpack.c.l.b16 %v874
        %v964 = vunpack.c.h.b16 %v874
        %v965 = vunpack.c.l.b16 %v875
        %v966 = vunpack.c.h.b16 %v875
        %v967 = vunpack.c.l.b16 %v876
        %v968 = vunpack.c.h.b16 %v876
        %v969 = vunpack.c.l.b16 %v877
        %v970 = vunpack.c.h.b16 %v877
        %v971 = vunpack.c.l.b16 %v878
        %v972 = vunpack.c.h.b16 %v878
        %v973 = vunpack.c.l.b16 %v879
        %v974 = vunpack.c.h.b16 %v879
        %v975 = vunpack.c.l.b16 %v880
        %v976 = vunpack.c.h.b16 %v880
        %v977 = vunpack.c.l.b16 %v881
        %v978 = vunpack.c.h.b16 %v881
        %v979 = vunpack.c.l.b16 %v882
        %v980 = vunpack.c.h.b16 %v882
        %v981 = vunpack.c.l.b16 %v883
        %v982 = vunpack.c.h.b16 %v883
        %v983 = vunpack.c.l.b16 %v884
        %v984 = vunpack.c.h.b16 %v884
        %v985 = vunpack.c.l.b16 %v885
        %v986 = vunpack.c.h.b16 %v885
        %v987 = vunpack.c.l.b16 %v886
        %v988 = vunpack.c.h.b16 %v886
        %v989 = vunpack.c.l.b16 %v887
        %v990 = vunpack.c.h.b16 %v887
        %v991 = vunpack.c.l.b16 %v888
        %v992 = vunpack.c.h.b16 %v888
        %v993 = vunpack.c.l.b16 %v889
        %v994 = vunpack.c.h.b16 %v889
        %v995 = vunpack.c.l.b16 %v890
        %v996 = vunpack.c.h.b16 %v890
        %v997 = vunpack.c.l.b16 %v891
        %v998 = vunpack.c.h.b16 %v891
        %v999 = vunpack.c.l.b16 %v892
        %v1000 = vunpack.c.h.b16 %v892
        %v1001 = vpack.c.b16 %v939, %v937
        %v1002 = vpack.c.b16 %v940, %v938
        %v1003 = vpack.c.b16 %v943, %v941
        %v1004 = vpack.c.b16 %v944, %v942
        %v1005 = vpack.c.b16 %v947, %v945
        %v1006 = vpack.c.b16 %v948, %v946
        %v1007 = vpack.c.b16 %v951, %v949
        %v1008 = vpack.c.b16 %v952, %v950
        %v1009 = vpack.c.b16 %v955, %v953
        %v1010 = vpack.c.b16 %v956, %v954
        %v1011 = vpack.c.b16 %v959, %v957
        %v1012 = vpack.c.b16 %v960, %v958
        %v1013 = vpack.c.b16 %v963, %v961
        %v1014 = vpack.c.b16 %v964, %v962
        %v1015 = vpack.c.b16 %v967, %v965
        %v1016 = vpack.c.b16 %v968, %v966
        %v1017 = vpack.c.b16 %v971, %v969
        %v1018 = vpack.c.b16 %v972, %v970
        %v1019 = vpack.c.b16 %v975, %v973
        %v1020 = vpack.c.b16 %v976, %v974
        %v1021 = vpack.c.b16 %v979, %v977
        %v1022 = vpack.c.b16 %v980, %v978
        %v1023 = vpack.c.b16 %v983, %v981
        %v1024 = vpack.c.b16 %v984, %v982
        %v1025 = vpack.c.b16 %v987, %v985
        %v1026 = vpack.c.b16 %v988, %v986
        %v1027 = vpack.c.b16 %v991, %v989
        %v1028 = vpack.c.b16 %v992, %v990
        %v1029 = vpack.c.b16 %v995, %v993
        %v1030 = vpack.c.b16 %v996, %v994
        %v1031 = vpack.c.b16 %v999, %v997
        %v1032 = vpack.c.b16 %v1000, %v998
        %1065 = vmatprep.subr.bf16.mxu0 %v1002
        %1066 = vmatpush1.bf16.msra.mxu0 %v1001
        %1067 = vmatprep.subr.bf16.mxu0 %v1004
        %1068 = vmatpush1.bf16.msra.mxu0 %v1003
        %1069 = vmatprep.subr.bf16.mxu0 %v1006
        %1070 = vmatpush1.bf16.msra.mxu0 %v1005
        %1071 = vmatprep.subr.bf16.mxu0 %v1008
        %1072 = vmatpush1.bf16.msra.mxu0 %v1007
        %1073 = vmatprep.subr.bf16.mxu0 %v1010
        %1074 = vmatpush1.bf16.msra.mxu0 %v1009
        %1075 = vmatprep.subr.bf16.mxu0 %v1012
        %1076 = vmatpush1.bf16.msra.mxu0 %v1011
        %1077 = vmatprep.subr.bf16.mxu0 %v1014
        %1078 = vmatpush1.bf16.msra.mxu0 %v1013
        %1079 = vmatprep.subr.bf16.mxu0 %v1016
        %1080 = vmatpush1.bf16.msra.mxu0 %v1015
        %1081 = vmatprep.subr.bf16.mxu0 %v1018
        %1082 = vmatpush1.bf16.msra.mxu0 %v1017
        %1083 = vmatprep.subr.bf16.mxu0 %v1020
        %1084 = vmatpush1.bf16.msra.mxu0 %v1019
        %1085 = vmatprep.subr.bf16.mxu0 %v1022
        %1086 = vmatpush1.bf16.msra.mxu0 %v1021
        %1087 = vmatprep.subr.bf16.mxu0 %v1024
        %1088 = vmatpush1.bf16.msra.mxu0 %v1023
        %1089 = vmatprep.subr.bf16.mxu0 %v1026
        %1090 = vmatpush1.bf16.msra.mxu0 %v1025
        %1091 = vmatprep.subr.bf16.mxu0 %v1028
        %1092 = vmatpush1.bf16.msra.mxu0 %v1027
        %1093 = vmatprep.subr.bf16.mxu0 %v1030
        %1094 = vmatpush1.bf16.msra.mxu0 %v1029
        %1095 = vmatprep.subr.bf16.mxu0 %v1032
        %1096 = vmatpush1.bf16.msra.mxu0 %v1031
        %1097 = vmatprep.mubr.bf16.mxu0 %v860
        %1098 = vmatmul.mubr.bf16.gmra.mrb[0].mxu0 %v859
        %v1099 = vpop.f32.mrb[0].mxu0
        %v1100 = vadd.f32 %v898, %v1099
        %v1101 = vpop.f32.mrb[0].mxu0
        %v1102 = vadd.f32 %v902, %v1101
        %v1103 = vpop.f32.mrb[0].mxu0
        %v1104 = vpop.f32.mrb[0].mxu0
        %1105 = vdwg.mxu0
        %s1106 = scalar_lea.vmem %s574, 2
        %v1107 = vld [vmem:[%s1106] sm:$0x3]
        %s1108 = scalar_lea.vmem %s465, 2 [#allocation6]
        %v1109 = vld [vmem:[%s1108] sm:$0x3]
        %v1110 = vsel %vm743, %v1100, 0.0
        %v1111 = vrot.slane %v1110, 4
        %v1112 = vadd.f32 %v1110, %v1111
        %v1113 = vrot.slane %v1112, 2
        %v1114 = vadd.f32 %v1112, %v1113
        %v1115 = vrot.slane %v1114, 1
        %v1116 = vadd.f32 %v1114, %v1115
        %v1117 = vsel %vm743, %v1102, 0.0
        %v1118 = vrot.slane %v1117, 4
        %v1119 = vadd.f32 %v1117, %v1118
        %v1120 = vrot.slane %v1119, 2
        %v1121 = vadd.f32 %v1119, %v1120
        %v1122 = vrot.slane %v1121, 1
        %v1123 = vadd.f32 %v1121, %v1122
        %v1124 = vmul.f32 %v1116, %v758
        %v1125 = vmul.f32 %v1123, %v758
        %v1126 = vmul.f32 %v1100, %v1100
        %v1127 = vmul.f32 %v1102, %v1102
        %v1128 = vsel %vm743, %v1126, 0.0
        %v1129 = vrot.slane %v1128, 4
        %v1130 = vadd.f32 %v1128, %v1129
        %v1131 = vrot.slane %v1130, 2
        %v1132 = vadd.f32 %v1130, %v1131
        %v1133 = vrot.slane %v1132, 1
        %v1134 = vadd.f32 %v1132, %v1133
        %v1135 = vsel %vm743, %v1127, 0.0
        %v1136 = vrot.slane %v1135, 4
        %v1137 = vadd.f32 %v1135, %v1136
        %v1138 = vrot.slane %v1137, 2
        %v1139 = vadd.f32 %v1137, %v1138
        %v1140 = vrot.slane %v1139, 1
        %v1141 = vadd.f32 %v1139, %v1140
        %v1142 = vmul.f32 %v1134, %v758
        %v1143 = vmul.f32 %v1141, %v758
        %v1144 = vmul.f32 %v1124, %v1124
        %v1145 = vmul.f32 %v1125, %v1125
        %v1146 = vsub.f32 %v1142, %v1144
        %v1147 = vsub.f32 %v1143, %v1145
        %v1148 = vmax.f32 %v1146, 0.0
        %v1149 = vmax.f32 %v1147, 0.0
        %v1150 = vadd.f32 %v1148, 1e-05
        %v1151 = vadd.f32 %v1149, 1e-05
        %v1152 = vrsqrt.pop %v1150
        %v1153 = vrsqrt.pop %v1151
        %v1156 = vcombine.low %v1152, %v1153
        %v1158 = vunpack.c.l.s4 1966171168
        %v1159 = vunpack.c.0.s8 %v1158
        %v1160 = vlaneseq
        %v1161 = vshrl.u32 %v1160, 7
        %v1162 = vsub.s32 %v1159, %v1161
        %v1163 = vrot.slane %v1156, %v1162
        %v1165 = vunpack.c.l.s4 1966171168
        %v1166 = vunpack.c.0.s8 %v1165
        %v1167 = vlaneseq
        %v1168 = vshrl.u32 %v1167, 7
        %v1169 = vsub.s32 %v1166, %v1168
        %v1170 = vrot.slane %v1163, %v1169
        %v1172 = vmul.f32 %v1107, %v1170
        %v1174 = vlaneseq
        %v1175 = vshrl.u32 %v1174, 7
        %v1176 = vsub.s32 0, %v1175
        %v1177 = vrot.slane %v1172, %v1176
        %v1178 = vlaneseq
        %v1179 = vshrl.u32 %v1178, 7
        %v1180 = vsub.s32 1, %v1179
        %v1181 = vrot.slane %v1172, %v1180
        %v1184 = vmul.f32 %v1124, %v1177
        %v1185 = vmul.f32 %v1125, %v1181
        %v1188 = vcombine.low %v1184, %v1185
        %v1190 = vunpack.c.l.s4 1966171168
        %v1191 = vunpack.c.0.s8 %v1190
        %v1192 = vlaneseq
        %v1193 = vshrl.u32 %v1192, 7
        %v1194 = vsub.s32 %v1191, %v1193
        %v1195 = vrot.slane %v1188, %v1194
        %v1197 = vunpack.c.l.s4 1966171168
        %v1198 = vunpack.c.0.s8 %v1197
        %v1199 = vlaneseq
        %v1200 = vshrl.u32 %v1199, 7
        %v1201 = vsub.s32 %v1198, %v1200
        %v1202 = vrot.slane %v1195, %v1201
        %v1204 = vsub.f32 %v1109, %v1202
        %v1205 = vmul.f32 %v1100, %v1177
        %v1206 = vmul.f32 %v1102, %v1181
        %v1208 = vlaneseq
        %v1209 = vshrl.u32 %v1208, 7
        %v1210 = vsub.s32 0, %v1209
        %v1211 = vrot.slane %v1204, %v1210
        %v1212 = vlaneseq
        %v1213 = vshrl.u32 %v1212, 7
        %v1214 = vsub.s32 1, %v1213
        %v1215 = vrot.slane %v1204, %v1214
        %v1218 = vadd.f32 %v1205, %v1211
        %v1219 = vadd.f32 %v1206, %v1215
        %v1220 = vmul.f32 %v1218, 0.01
        %v1221 = vmul.f32 %v1219, 0.01
        %v1222 = vmax.f32 %v1218, %v1220
        %v1223 = vmax.f32 %v1219, %v1221
        %v1224 = vpack.c.bf16 %v1222, %v1222
        %v1225 = vpack.c.bf16 %v1223, %v1223
        %s1226 = scalar_lea.vmem %s567, 256
        %v1227 = vld [vmem:[%s1226] sm:$0xff]
        %v1228 = vld [vmem:[%s1226 + $0x8] sm:$0xff]
        %v1229 = vld [vmem:[%s1226 + $0x10] sm:$0xff]
        %v1230 = vld [vmem:[%s1226 + $0x18] sm:$0xff]
        %v1231 = vld [vmem:[%s1226 + $0x20] sm:$0xff]
        %v1232 = vld [vmem:[%s1226 + $0x28] sm:$0xff]
        %v1233 = vld [vmem:[%s1226 + $0x30] sm:$0xff]
        %v1234 = vld [vmem:[%s1226 + $0x38] sm:$0xff]
        %v1235 = vld [vmem:[%s1226 + $0x40] sm:$0xff]
        %v1236 = vld [vmem:[%s1226 + $0x48] sm:$0xff]
        %v1237 = vld [vmem:[%s1226 + $0x50] sm:$0xff]
        %v1238 = vld [vmem:[%s1226 + $0x58] sm:$0xff]
        %v1239 = vld [vmem:[%s1226 + $0x60] sm:$0xff]
        %v1240 = vld [vmem:[%s1226 + $0x68] sm:$0xff]
        %v1241 = vld [vmem:[%s1226 + $0x70] sm:$0xff]
        %v1242 = vld [vmem:[%s1226 + $0x78] sm:$0xff]
        %v1243 = vld [vmem:[%s1226 + $0x80] sm:$0xff]
        %v1244 = vld [vmem:[%s1226 + $0x88] sm:$0xff]
        %v1245 = vld [vmem:[%s1226 + $0x90] sm:$0xff]
        %v1246 = vld [vmem:[%s1226 + $0x98] sm:$0xff]
        %v1247 = vld [vmem:[%s1226 + $0xa0] sm:$0xff]
        %v1248 = vld [vmem:[%s1226 + $0xa8] sm:$0xff]
        %v1249 = vld [vmem:[%s1226 + $0xb0] sm:$0xff]
        %v1250 = vld [vmem:[%s1226 + $0xb8] sm:$0xff]
        %v1251 = vld [vmem:[%s1226 + $0xc0] sm:$0xff]
        %v1252 = vld [vmem:[%s1226 + $0xc8] sm:$0xff]
        %v1253 = vld [vmem:[%s1226 + $0xd0] sm:$0xff]
        %v1254 = vld [vmem:[%s1226 + $0xd8] sm:$0xff]
        %v1255 = vld [vmem:[%s1226 + $0xe0] sm:$0xff]
        %v1256 = vld [vmem:[%s1226 + $0xe8] sm:$0xff]
        %v1257 = vld [vmem:[%s1226 + $0xf0] sm:$0xff]
        %v1258 = vld [vmem:[%s1226 + $0xf8] sm:$0xff]
        %s1259 = scalar_lea.vmem %s456, 2 [#allocation4]
        %v1260 = vld [vmem:[%s1259] sm:$0x3]
        %v1262 = vlaneseq
        %v1263 = vshrl.u32 %v1262, 7
        %v1264 = vsub.s32 0, %v1263
        %v1265 = vrot.slane %v1260, %v1264
        %v1266 = vlaneseq
        %v1267 = vshrl.u32 %v1266, 7
        %v1268 = vsub.s32 1, %v1267
        %v1269 = vrot.slane %v1260, %v1268
        %v1304 = vunpack.c.l.b16 %v1227
        %v1305 = vunpack.c.h.b16 %v1227
        %v1306 = vunpack.c.l.b16 %v1228
        %v1307 = vunpack.c.h.b16 %v1228
        %v1308 = vunpack.c.l.b16 %v1229
        %v1309 = vunpack.c.h.b16 %v1229
        %v1310 = vunpack.c.l.b16 %v1230
        %v1311 = vunpack.c.h.b16 %v1230
        %v1312 = vunpack.c.l.b16 %v1231
        %v1313 = vunpack.c.h.b16 %v1231
        %v1314 = vunpack.c.l.b16 %v1232
        %v1315 = vunpack.c.h.b16 %v1232
        %v1316 = vunpack.c.l.b16 %v1233
        %v1317 = vunpack.c.h.b16 %v1233
        %v1318 = vunpack.c.l.b16 %v1234
        %v1319 = vunpack.c.h.b16 %v1234
        %v1320 = vunpack.c.l.b16 %v1235
        %v1321 = vunpack.c.h.b16 %v1235
        %v1322 = vunpack.c.l.b16 %v1236
        %v1323 = vunpack.c.h.b16 %v1236
        %v1324 = vunpack.c.l.b16 %v1237
        %v1325 = vunpack.c.h.b16 %v1237
        %v1326 = vunpack.c.l.b16 %v1238
        %v1327 = vunpack.c.h.b16 %v1238
        %v1328 = vunpack.c.l.b16 %v1239
        %v1329 = vunpack.c.h.b16 %v1239
        %v1330 = vunpack.c.l.b16 %v1240
        %v1331 = vunpack.c.h.b16 %v1240
        %v1332 = vunpack.c.l.b16 %v1241
        %v1333 = vunpack.c.h.b16 %v1241
        %v1334 = vunpack.c.l.b16 %v1242
        %v1335 = vunpack.c.h.b16 %v1242
        %v1336 = vunpack.c.l.b16 %v1243
        %v1337 = vunpack.c.h.b16 %v1243
        %v1338 = vunpack.c.l.b16 %v1244
        %v1339 = vunpack.c.h.b16 %v1244
        %v1340 = vunpack.c.l.b16 %v1245
        %v1341 = vunpack.c.h.b16 %v1245
        %v1342 = vunpack.c.l.b16 %v1246
        %v1343 = vunpack.c.h.b16 %v1246
        %v1344 = vunpack.c.l.b16 %v1247
        %v1345 = vunpack.c.h.b16 %v1247
        %v1346 = vunpack.c.l.b16 %v1248
        %v1347 = vunpack.c.h.b16 %v1248
        %v1348 = vunpack.c.l.b16 %v1249
        %v1349 = vunpack.c.h.b16 %v1249
        %v1350 = vunpack.c.l.b16 %v1250
        %v1351 = vunpack.c.h.b16 %v1250
        %v1352 = vunpack.c.l.b16 %v1251
        %v1353 = vunpack.c.h.b16 %v1251
        %v1354 = vunpack.c.l.b16 %v1252
        %v1355 = vunpack.c.h.b16 %v1252
        %v1356 = vunpack.c.l.b16 %v1253
        %v1357 = vunpack.c.h.b16 %v1253
        %v1358 = vunpack.c.l.b16 %v1254
        %v1359 = vunpack.c.h.b16 %v1254
        %v1360 = vunpack.c.l.b16 %v1255
        %v1361 = vunpack.c.h.b16 %v1255
        %v1362 = vunpack.c.l.b16 %v1256
        %v1363 = vunpack.c.h.b16 %v1256
        %v1364 = vunpack.c.l.b16 %v1257
        %v1365 = vunpack.c.h.b16 %v1257
        %v1366 = vunpack.c.l.b16 %v1258
        %v1367 = vunpack.c.h.b16 %v1258
        %v1368 = vpack.c.b16 %v1306, %v1304
        %v1369 = vpack.c.b16 %v1307, %v1305
        %v1370 = vpack.c.b16 %v1310, %v1308
        %v1371 = vpack.c.b16 %v1311, %v1309
        %v1372 = vpack.c.b16 %v1314, %v1312
        %v1373 = vpack.c.b16 %v1315, %v1313
        %v1374 = vpack.c.b16 %v1318, %v1316
        %v1375 = vpack.c.b16 %v1319, %v1317
        %v1376 = vpack.c.b16 %v1322, %v1320
        %v1377 = vpack.c.b16 %v1323, %v1321
        %v1378 = vpack.c.b16 %v1326, %v1324
        %v1379 = vpack.c.b16 %v1327, %v1325
        %v1380 = vpack.c.b16 %v1330, %v1328
        %v1381 = vpack.c.b16 %v1331, %v1329
        %v1382 = vpack.c.b16 %v1334, %v1332
        %v1383 = vpack.c.b16 %v1335, %v1333
        %v1384 = vpack.c.b16 %v1338, %v1336
        %v1385 = vpack.c.b16 %v1339, %v1337
        %v1386 = vpack.c.b16 %v1342, %v1340
        %v1387 = vpack.c.b16 %v1343, %v1341
        %v1388 = vpack.c.b16 %v1346, %v1344
        %v1389 = vpack.c.b16 %v1347, %v1345
        %v1390 = vpack.c.b16 %v1350, %v1348
        %v1391 = vpack.c.b16 %v1351, %v1349
        %v1392 = vpack.c.b16 %v1354, %v1352
        %v1393 = vpack.c.b16 %v1355, %v1353
        %v1394 = vpack.c.b16 %v1358, %v1356
        %v1395 = vpack.c.b16 %v1359, %v1357
        %v1396 = vpack.c.b16 %v1362, %v1360
        %v1397 = vpack.c.b16 %v1363, %v1361
        %v1398 = vpack.c.b16 %v1366, %v1364
        %v1399 = vpack.c.b16 %v1367, %v1365
        %1432 = vmatprep.subr.bf16.mxu0 %v1369
        %1433 = vmatpush1.bf16.msra.mxu0 %v1368
        %1434 = vmatprep.subr.bf16.mxu0 %v1371
        %1435 = vmatpush1.bf16.msra.mxu0 %v1370
        %1436 = vmatprep.subr.bf16.mxu0 %v1373
        %1437 = vmatpush1.bf16.msra.mxu0 %v1372
        %1438 = vmatprep.subr.bf16.mxu0 %v1375
        %1439 = vmatpush1.bf16.msra.mxu0 %v1374
        %1440 = vmatprep.subr.bf16.mxu0 %v1377
        %1441 = vmatpush1.bf16.msra.mxu0 %v1376
        %1442 = vmatprep.subr.bf16.mxu0 %v1379
        %1443 = vmatpush1.bf16.msra.mxu0 %v1378
        %1444 = vmatprep.subr.bf16.mxu0 %v1381
        %1445 = vmatpush1.bf16.msra.mxu0 %v1380
        %1446 = vmatprep.subr.bf16.mxu0 %v1383
        %1447 = vmatpush1.bf16.msra.mxu0 %v1382
        %1448 = vmatprep.subr.bf16.mxu0 %v1385
        %1449 = vmatpush1.bf16.msra.mxu0 %v1384
        %1450 = vmatprep.subr.bf16.mxu0 %v1387
        %1451 = vmatpush1.bf16.msra.mxu0 %v1386
        %1452 = vmatprep.subr.bf16.mxu0 %v1389
        %1453 = vmatpush1.bf16.msra.mxu0 %v1388
        %1454 = vmatprep.subr.bf16.mxu0 %v1391
        %1455 = vmatpush1.bf16.msra.mxu0 %v1390
        %1456 = vmatprep.subr.bf16.mxu0 %v1393
        %1457 = vmatpush1.bf16.msra.mxu0 %v1392
        %1458 = vmatprep.subr.bf16.mxu0 %v1395
        %1459 = vmatpush1.bf16.msra.mxu0 %v1394
        %1460 = vmatprep.subr.bf16.mxu0 %v1397
        %1461 = vmatpush1.bf16.msra.mxu0 %v1396
        %1462 = vmatprep.subr.bf16.mxu0 %v1399
        %1463 = vmatpush1.bf16.msra.mxu0 %v1398
        %1464 = vmatprep.mubr.bf16.mxu0 %v1225
        %1465 = vmatmul.mubr.bf16.gmra.mrb[0].mxu0 %v1224
        %v1466 = vpop.f32.mrb[0].mxu0
        %v1467 = vadd.f32 %v1265, %v1466
        %v1468 = vpop.f32.mrb[0].mxu0
        %v1469 = vadd.f32 %v1269, %v1468
        %v1470 = vpop.f32.mrb[0].mxu0
        %v1471 = vpop.f32.mrb[0].mxu0
        %1472 = vdwg.mxu0
        %s1473 = scalar_lea.vmem %s574, 4
        %v1474 = vld [vmem:[%s1473] sm:$0x3]
        %s1475 = scalar_lea.vmem %s465, 4 [#allocation6]
        %v1476 = vld [vmem:[%s1475] sm:$0x3]
        %v1477 = vsel %vm743, %v1467, 0.0
        %v1478 = vrot.slane %v1477, 4
        %v1479 = vadd.f32 %v1477, %v1478
        %v1480 = vrot.slane %v1479, 2
        %v1481 = vadd.f32 %v1479, %v1480
        %v1482 = vrot.slane %v1481, 1
        %v1483 = vadd.f32 %v1481, %v1482
        %v1484 = vsel %vm743, %v1469, 0.0
        %v1485 = vrot.slane %v1484, 4
        %v1486 = vadd.f32 %v1484, %v1485
        %v1487 = vrot.slane %v1486, 2
        %v1488 = vadd.f32 %v1486, %v1487
        %v1489 = vrot.slane %v1488, 1
        %v1490 = vadd.f32 %v1488, %v1489
        %v1491 = vmul.f32 %v1483, %v758
        %v1492 = vmul.f32 %v1490, %v758
        %v1493 = vmul.f32 %v1467, %v1467
        %v1494 = vmul.f32 %v1469, %v1469
        %v1495 = vsel %vm743, %v1493, 0.0
        %v1496 = vrot.slane %v1495, 4
        %v1497 = vadd.f32 %v1495, %v1496
        %v1498 = vrot.slane %v1497, 2
        %v1499 = vadd.f32 %v1497, %v1498
        %v1500 = vrot.slane %v1499, 1
        %v1501 = vadd.f32 %v1499, %v1500
        %v1502 = vsel %vm743, %v1494, 0.0
        %v1503 = vrot.slane %v1502, 4
        %v1504 = vadd.f32 %v1502, %v1503
        %v1505 = vrot.slane %v1504, 2
        %v1506 = vadd.f32 %v1504, %v1505
        %v1507 = vrot.slane %v1506, 1
        %v1508 = vadd.f32 %v1506, %v1507
        %v1509 = vmul.f32 %v1501, %v758
        %v1510 = vmul.f32 %v1508, %v758
        %v1511 = vmul.f32 %v1491, %v1491
        %v1512 = vmul.f32 %v1492, %v1492
        %v1513 = vsub.f32 %v1509, %v1511
        %v1514 = vsub.f32 %v1510, %v1512
        %v1515 = vmax.f32 %v1513, 0.0
        %v1516 = vmax.f32 %v1514, 0.0
        %v1517 = vadd.f32 %v1515, 1e-05
        %v1518 = vadd.f32 %v1516, 1e-05
        %v1519 = vrsqrt.pop %v1517
        %v1520 = vrsqrt.pop %v1518
        %v1523 = vcombine.low %v1519, %v1520
        %v1525 = vunpack.c.l.s4 1966171168
        %v1526 = vunpack.c.0.s8 %v1525
        %v1527 = vlaneseq
        %v1528 = vshrl.u32 %v1527, 7
        %v1529 = vsub.s32 %v1526, %v1528
        %v1530 = vrot.slane %v1523, %v1529
        %v1532 = vunpack.c.l.s4 1966171168
        %v1533 = vunpack.c.0.s8 %v1532
        %v1534 = vlaneseq
        %v1535 = vshrl.u32 %v1534, 7
        %v1536 = vsub.s32 %v1533, %v1535
        %v1537 = vrot.slane %v1530, %v1536
        %v1539 = vmul.f32 %v1474, %v1537
        %v1541 = vlaneseq
        %v1542 = vshrl.u32 %v1541, 7
        %v1543 = vsub.s32 0, %v1542
        %v1544 = vrot.slane %v1539, %v1543
        %v1545 = vlaneseq
        %v1546 = vshrl.u32 %v1545, 7
        %v1547 = vsub.s32 1, %v1546
        %v1548 = vrot.slane %v1539, %v1547
        %v1551 = vmul.f32 %v1491, %v1544
        %v1552 = vmul.f32 %v1492, %v1548
        %v1555 = vcombine.low %v1551, %v1552
        %v1557 = vunpack.c.l.s4 1966171168
        %v1558 = vunpack.c.0.s8 %v1557
        %v1559 = vlaneseq
        %v1560 = vshrl.u32 %v1559, 7
        %v1561 = vsub.s32 %v1558, %v1560
        %v1562 = vrot.slane %v1555, %v1561
        %v1564 = vunpack.c.l.s4 1966171168
        %v1565 = vunpack.c.0.s8 %v1564
        %v1566 = vlaneseq
        %v1567 = vshrl.u32 %v1566, 7
        %v1568 = vsub.s32 %v1565, %v1567
        %v1569 = vrot.slane %v1562, %v1568
        %v1571 = vsub.f32 %v1476, %v1569
        %v1572 = vmul.f32 %v1467, %v1544
        %v1573 = vmul.f32 %v1469, %v1548
        %v1575 = vlaneseq
        %v1576 = vshrl.u32 %v1575, 7
        %v1577 = vsub.s32 0, %v1576
        %v1578 = vrot.slane %v1571, %v1577
        %v1579 = vlaneseq
        %v1580 = vshrl.u32 %v1579, 7
        %v1581 = vsub.s32 1, %v1580
        %v1582 = vrot.slane %v1571, %v1581
        %v1585 = vadd.f32 %v1572, %v1578
        %v1586 = vadd.f32 %v1573, %v1582
        %v1587 = vmul.f32 %v1585, 0.01
        %v1588 = vmul.f32 %v1586, 0.01
        %v1589 = vmax.f32 %v1585, %v1587
        %v1590 = vmax.f32 %v1586, %v1588
        %v1591 = vpack.c.bf16 %v1589, %v1589
        %v1592 = vpack.c.bf16 %v1590, %v1590
        %s1593 = scalar_lea.vmem %s567, 512
        %v1594 = vld [vmem:[%s1593] sm:$0xff]
        %v1595 = vld [vmem:[%s1593 + $0x8] sm:$0xff]
        %v1596 = vld [vmem:[%s1593 + $0x10] sm:$0xff]
        %v1597 = vld [vmem:[%s1593 + $0x18] sm:$0xff]
        %v1598 = vld [vmem:[%s1593 + $0x20] sm:$0xff]
        %v1599 = vld [vmem:[%s1593 + $0x28] sm:$0xff]
        %v1600 = vld [vmem:[%s1593 + $0x30] sm:$0xff]
        %v1601 = vld [vmem:[%s1593 + $0x38] sm:$0xff]
        %v1602 = vld [vmem:[%s1593 + $0x40] sm:$0xff]
        %v1603 = vld [vmem:[%s1593 + $0x48] sm:$0xff]
        %v1604 = vld [vmem:[%s1593 + $0x50] sm:$0xff]
        %v1605 = vld [vmem:[%s1593 + $0x58] sm:$0xff]
        %v1606 = vld [vmem:[%s1593 + $0x60] sm:$0xff]
        %v1607 = vld [vmem:[%s1593 + $0x68] sm:$0xff]
        %v1608 = vld [vmem:[%s1593 + $0x70] sm:$0xff]
        %v1609 = vld [vmem:[%s1593 + $0x78] sm:$0xff]
        %v1610 = vld [vmem:[%s1593 + $0x80] sm:$0xff]
        %v1611 = vld [vmem:[%s1593 + $0x88] sm:$0xff]
        %v1612 = vld [vmem:[%s1593 + $0x90] sm:$0xff]
        %v1613 = vld [vmem:[%s1593 + $0x98] sm:$0xff]
        %v1614 = vld [vmem:[%s1593 + $0xa0] sm:$0xff]
        %v1615 = vld [vmem:[%s1593 + $0xa8] sm:$0xff]
        %v1616 = vld [vmem:[%s1593 + $0xb0] sm:$0xff]
        %v1617 = vld [vmem:[%s1593 + $0xb8] sm:$0xff]
        %v1618 = vld [vmem:[%s1593 + $0xc0] sm:$0xff]
        %v1619 = vld [vmem:[%s1593 + $0xc8] sm:$0xff]
        %v1620 = vld [vmem:[%s1593 + $0xd0] sm:$0xff]
        %v1621 = vld [vmem:[%s1593 + $0xd8] sm:$0xff]
        %v1622 = vld [vmem:[%s1593 + $0xe0] sm:$0xff]
        %v1623 = vld [vmem:[%s1593 + $0xe8] sm:$0xff]
        %v1624 = vld [vmem:[%s1593 + $0xf0] sm:$0xff]
        %v1625 = vld [vmem:[%s1593 + $0xf8] sm:$0xff]
        %s1626 = scalar_lea.vmem %s456, 4 [#allocation4]
        %v1627 = vld [vmem:[%s1626] sm:$0x3]
        %v1629 = vlaneseq
        %v1630 = vshrl.u32 %v1629, 7
        %v1631 = vsub.s32 0, %v1630
        %v1632 = vrot.slane %v1627, %v1631
        %v1633 = vlaneseq
        %v1634 = vshrl.u32 %v1633, 7
        %v1635 = vsub.s32 1, %v1634
        %v1636 = vrot.slane %v1627, %v1635
        %v1671 = vunpack.c.l.b16 %v1594
        %v1672 = vunpack.c.h.b16 %v1594
        %v1673 = vunpack.c.l.b16 %v1595
        %v1674 = vunpack.c.h.b16 %v1595
        %v1675 = vunpack.c.l.b16 %v1596
        %v1676 = vunpack.c.h.b16 %v1596
        %v1677 = vunpack.c.l.b16 %v1597
        %v1678 = vunpack.c.h.b16 %v1597
        %v1679 = vunpack.c.l.b16 %v1598
        %v1680 = vunpack.c.h.b16 %v1598
        %v1681 = vunpack.c.l.b16 %v1599
        %v1682 = vunpack.c.h.b16 %v1599
        %v1683 = vunpack.c.l.b16 %v1600
        %v1684 = vunpack.c.h.b16 %v1600
        %v1685 = vunpack.c.l.b16 %v1601
        %v1686 = vunpack.c.h.b16 %v1601
        %v1687 = vunpack.c.l.b16 %v1602
        %v1688 = vunpack.c.h.b16 %v1602
        %v1689 = vunpack.c.l.b16 %v1603
        %v1690 = vunpack.c.h.b16 %v1603
        %v1691 = vunpack.c.l.b16 %v1604
        %v1692 = vunpack.c.h.b16 %v1604
        %v1693 = vunpack.c.l.b16 %v1605
        %v1694 = vunpack.c.h.b16 %v1605
        %v1695 = vunpack.c.l.b16 %v1606
        %v1696 = vunpack.c.h.b16 %v1606
        %v1697 = vunpack.c.l.b16 %v1607
        %v1698 = vunpack.c.h.b16 %v1607
        %v1699 = vunpack.c.l.b16 %v1608
        %v1700 = vunpack.c.h.b16 %v1608
        %v1701 = vunpack.c.l.b16 %v1609
        %v1702 = vunpack.c.h.b16 %v1609
        %v1703 = vunpack.c.l.b16 %v1610
        %v1704 = vunpack.c.h.b16 %v1610
        %v1705 = vunpack.c.l.b16 %v1611
        %v1706 = vunpack.c.h.b16 %v1611
        %v1707 = vunpack.c.l.b16 %v1612
        %v1708 = vunpack.c.h.b16 %v1612
        %v1709 = vunpack.c.l.b16 %v1613
        %v1710 = vunpack.c.h.b16 %v1613
        %v1711 = vunpack.c.l.b16 %v1614
        %v1712 = vunpack.c.h.b16 %v1614
        %v1713 = vunpack.c.l.b16 %v1615
        %v1714 = vunpack.c.h.b16 %v1615
        %v1715 = vunpack.c.l.b16 %v1616
        %v1716 = vunpack.c.h.b16 %v1616
        %v1717 = vunpack.c.l.b16 %v1617
        %v1718 = vunpack.c.h.b16 %v1617
        %v1719 = vunpack.c.l.b16 %v1618
        %v1720 = vunpack.c.h.b16 %v1618
        %v1721 = vunpack.c.l.b16 %v1619
        %v1722 = vunpack.c.h.b16 %v1619
        %v1723 = vunpack.c.l.b16 %v1620
        %v1724 = vunpack.c.h.b16 %v1620
        %v1725 = vunpack.c.l.b16 %v1621
        %v1726 = vunpack.c.h.b16 %v1621
        %v1727 = vunpack.c.l.b16 %v1622
        %v1728 = vunpack.c.h.b16 %v1622
        %v1729 = vunpack.c.l.b16 %v1623
        %v1730 = vunpack.c.h.b16 %v1623
        %v1731 = vunpack.c.l.b16 %v1624
        %v1732 = vunpack.c.h.b16 %v1624
        %v1733 = vunpack.c.l.b16 %v1625
        %v1734 = vunpack.c.h.b16 %v1625
        %v1735 = vpack.c.b16 %v1673, %v1671
        %v1736 = vpack.c.b16 %v1674, %v1672
        %v1737 = vpack.c.b16 %v1677, %v1675
        %v1738 = vpack.c.b16 %v1678, %v1676
        %v1739 = vpack.c.b16 %v1681, %v1679
        %v1740 = vpack.c.b16 %v1682, %v1680
        %v1741 = vpack.c.b16 %v1685, %v1683
        %v1742 = vpack.c.b16 %v1686, %v1684
        %v1743 = vpack.c.b16 %v1689, %v1687
        %v1744 = vpack.c.b16 %v1690, %v1688
        %v1745 = vpack.c.b16 %v1693, %v1691
        %v1746 = vpack.c.b16 %v1694, %v1692
        %v1747 = vpack.c.b16 %v1697, %v1695
        %v1748 = vpack.c.b16 %v1698, %v1696
        %v1749 = vpack.c.b16 %v1701, %v1699
        %v1750 = vpack.c.b16 %v1702, %v1700
        %v1751 = vpack.c.b16 %v1705, %v1703
        %v1752 = vpack.c.b16 %v1706, %v1704
        %v1753 = vpack.c.b16 %v1709, %v1707
        %v1754 = vpack.c.b16 %v1710, %v1708
        %v1755 = vpack.c.b16 %v1713, %v1711
        %v1756 = vpack.c.b16 %v1714, %v1712
        %v1757 = vpack.c.b16 %v1717, %v1715
        %v1758 = vpack.c.b16 %v1718, %v1716
        %v1759 = vpack.c.b16 %v1721, %v1719
        %v1760 = vpack.c.b16 %v1722, %v1720
        %v1761 = vpack.c.b16 %v1725, %v1723
        %v1762 = vpack.c.b16 %v1726, %v1724
        %v1763 = vpack.c.b16 %v1729, %v1727
        %v1764 = vpack.c.b16 %v1730, %v1728
        %v1765 = vpack.c.b16 %v1733, %v1731
        %v1766 = vpack.c.b16 %v1734, %v1732
        %1799 = vmatprep.subr.bf16.mxu0 %v1736
        %1800 = vmatpush1.bf16.msra.mxu0 %v1735
        %1801 = vmatprep.subr.bf16.mxu0 %v1738
        %1802 = vmatpush1.bf16.msra.mxu0 %v1737
        %1803 = vmatprep.subr.bf16.mxu0 %v1740
        %1804 = vmatpush1.bf16.msra.mxu0 %v1739
        %1805 = vmatprep.subr.bf16.mxu0 %v1742
        %1806 = vmatpush1.bf16.msra.mxu0 %v1741
        %1807 = vmatprep.subr.bf16.mxu0 %v1744
        %1808 = vmatpush1.bf16.msra.mxu0 %v1743
        %1809 = vmatprep.subr.bf16.mxu0 %v1746
        %1810 = vmatpush1.bf16.msra.mxu0 %v1745
        %1811 = vmatprep.subr.bf16.mxu0 %v1748
        %1812 = vmatpush1.bf16.msra.mxu0 %v1747
        %1813 = vmatprep.subr.bf16.mxu0 %v1750
        %1814 = vmatpush1.bf16.msra.mxu0 %v1749
        %1815 = vmatprep.subr.bf16.mxu0 %v1752
        %1816 = vmatpush1.bf16.msra.mxu0 %v1751
        %1817 = vmatprep.subr.bf16.mxu0 %v1754
        %1818 = vmatpush1.bf16.msra.mxu0 %v1753
        %1819 = vmatprep.subr.bf16.mxu0 %v1756
        %1820 = vmatpush1.bf16.msra.mxu0 %v1755
        %1821 = vmatprep.subr.bf16.mxu0 %v1758
        %1822 = vmatpush1.bf16.msra.mxu0 %v1757
        %1823 = vmatprep.subr.bf16.mxu0 %v1760
        %1824 = vmatpush1.bf16.msra.mxu0 %v1759
        %1825 = vmatprep.subr.bf16.mxu0 %v1762
        %1826 = vmatpush1.bf16.msra.mxu0 %v1761
        %1827 = vmatprep.subr.bf16.mxu0 %v1764
        %1828 = vmatpush1.bf16.msra.mxu0 %v1763
        %1829 = vmatprep.subr.bf16.mxu0 %v1766
        %1830 = vmatpush1.bf16.msra.mxu0 %v1765
        %1831 = vmatprep.mubr.bf16.mxu0 %v1592
        %1832 = vmatmul.mubr.bf16.gmra.mrb[0].mxu0 %v1591
        %v1833 = vpop.f32.mrb[0].mxu0
        %v1834 = vadd.f32 %v1632, %v1833
        %v1835 = vpop.f32.mrb[0].mxu0
        %v1836 = vadd.f32 %v1636, %v1835
        %v1837 = vpop.f32.mrb[0].mxu0
        %v1838 = vpop.f32.mrb[0].mxu0
        %1839 = vdwg.mxu0
        %s1840 = scalar_lea.vmem %s574, 6
        %v1841 = vld [vmem:[%s1840] sm:$0x3]
        %s1842 = scalar_lea.vmem %s465, 6 [#allocation6]
        %v1843 = vld [vmem:[%s1842] sm:$0x3]
        %v1844 = vsel %vm743, %v1834, 0.0
        %v1845 = vrot.slane %v1844, 4
        %v1846 = vadd.f32 %v1844, %v1845
        %v1847 = vrot.slane %v1846, 2
        %v1848 = vadd.f32 %v1846, %v1847
        %v1849 = vrot.slane %v1848, 1
        %v1850 = vadd.f32 %v1848, %v1849
        %v1851 = vsel %vm743, %v1836, 0.0
        %v1852 = vrot.slane %v1851, 4
        %v1853 = vadd.f32 %v1851, %v1852
        %v1854 = vrot.slane %v1853, 2
        %v1855 = vadd.f32 %v1853, %v1854
        %v1856 = vrot.slane %v1855, 1
        %v1857 = vadd.f32 %v1855, %v1856
        %v1858 = vmul.f32 %v1850, %v758
        %v1859 = vmul.f32 %v1857, %v758
        %v1860 = vmul.f32 %v1834, %v1834
        %v1861 = vmul.f32 %v1836, %v1836
        %v1862 = vsel %vm743, %v1860, 0.0
        %v1863 = vrot.slane %v1862, 4
        %v1864 = vadd.f32 %v1862, %v1863
        %v1865 = vrot.slane %v1864, 2
        %v1866 = vadd.f32 %v1864, %v1865
        %v1867 = vrot.slane %v1866, 1
        %v1868 = vadd.f32 %v1866, %v1867
        %v1869 = vsel %vm743, %v1861, 0.0
        %v1870 = vrot.slane %v1869, 4
        %v1871 = vadd.f32 %v1869, %v1870
        %v1872 = vrot.slane %v1871, 2
        %v1873 = vadd.f32 %v1871, %v1872
        %v1874 = vrot.slane %v1873, 1
        %v1875 = vadd.f32 %v1873, %v1874
        %v1876 = vmul.f32 %v1868, %v758
        %v1877 = vmul.f32 %v1875, %v758
        %v1878 = vmul.f32 %v1858, %v1858
        %v1879 = vmul.f32 %v1859, %v1859
        %v1880 = vsub.f32 %v1876, %v1878
        %v1881 = vsub.f32 %v1877, %v1879
        %v1882 = vmax.f32 %v1880, 0.0
        %v1883 = vmax.f32 %v1881, 0.0
        %v1884 = vadd.f32 %v1882, 1e-05
        %v1885 = vadd.f32 %v1883, 1e-05
        %v1886 = vrsqrt.pop %v1884
        %v1887 = vrsqrt.pop %v1885
        %v1890 = vcombine.low %v1886, %v1887
        %v1892 = vunpack.c.l.s4 1966171168
        %v1893 = vunpack.c.0.s8 %v1892
        %v1894 = vlaneseq
        %v1895 = vshrl.u32 %v1894, 7
        %v1896 = vsub.s32 %v1893, %v1895
        %v1897 = vrot.slane %v1890, %v1896
        %v1899 = vunpack.c.l.s4 1966171168
        %v1900 = vunpack.c.0.s8 %v1899
        %v1901 = vlaneseq
        %v1902 = vshrl.u32 %v1901, 7
        %v1903 = vsub.s32 %v1900, %v1902
        %v1904 = vrot.slane %v1897, %v1903
        %v1906 = vmul.f32 %v1841, %v1904
        %v1908 = vlaneseq
        %v1909 = vshrl.u32 %v1908, 7
        %v1910 = vsub.s32 0, %v1909
        %v1911 = vrot.slane %v1906, %v1910
        %v1912 = vlaneseq
        %v1913 = vshrl.u32 %v1912, 7
        %v1914 = vsub.s32 1, %v1913
        %v1915 = vrot.slane %v1906, %v1914
        %v1918 = vmul.f32 %v1858, %v1911
        %v1919 = vmul.f32 %v1859, %v1915
        %v1922 = vcombine.low %v1918, %v1919
        %v1924 = vunpack.c.l.s4 1966171168
        %v1925 = vunpack.c.0.s8 %v1924
        %v1926 = vlaneseq
        %v1927 = vshrl.u32 %v1926, 7
        %v1928 = vsub.s32 %v1925, %v1927
        %v1929 = vrot.slane %v1922, %v1928
        %v1931 = vunpack.c.l.s4 1966171168
        %v1932 = vunpack.c.0.s8 %v1931
        %v1933 = vlaneseq
        %v1934 = vshrl.u32 %v1933, 7
        %v1935 = vsub.s32 %v1932, %v1934
        %v1936 = vrot.slane %v1929, %v1935
        %v1938 = vsub.f32 %v1843, %v1936
        %v1939 = vmul.f32 %v1834, %v1911
        %v1940 = vmul.f32 %v1836, %v1915
        %v1942 = vlaneseq
        %v1943 = vshrl.u32 %v1942, 7
        %v1944 = vsub.s32 0, %v1943
        %v1945 = vrot.slane %v1938, %v1944
        %v1946 = vlaneseq
        %v1947 = vshrl.u32 %v1946, 7
        %v1948 = vsub.s32 1, %v1947
        %v1949 = vrot.slane %v1938, %v1948
        %v1952 = vadd.f32 %v1939, %v1945
        %v1953 = vadd.f32 %v1940, %v1949
        %v1954 = vmul.f32 %v1952, 0.01
        %v1955 = vmul.f32 %v1953, 0.01
        %v1956 = vmax.f32 %v1952, %v1954
        %v1957 = vmax.f32 %v1953, %v1955
        %v1958 = vpack.c.bf16 %v1956, %v1956
        %v1959 = vpack.c.bf16 %v1957, %v1957
        %s1960 = scalar_lea.vmem %s567, 768
        %v1961 = vld [vmem:[%s1960] sm:$0xff]
        %v1962 = vld [vmem:[%s1960 + $0x8] sm:$0xff]
        %v1963 = vld [vmem:[%s1960 + $0x10] sm:$0xff]
        %v1964 = vld [vmem:[%s1960 + $0x18] sm:$0xff]
        %v1965 = vld [vmem:[%s1960 + $0x20] sm:$0xff]
        %v1966 = vld [vmem:[%s1960 + $0x28] sm:$0xff]
        %v1967 = vld [vmem:[%s1960 + $0x30] sm:$0xff]
        %v1968 = vld [vmem:[%s1960 + $0x38] sm:$0xff]
        %v1969 = vld [vmem:[%s1960 + $0x40] sm:$0xff]
        %v1970 = vld [vmem:[%s1960 + $0x48] sm:$0xff]
        %v1971 = vld [vmem:[%s1960 + $0x50] sm:$0xff]
        %v1972 = vld [vmem:[%s1960 + $0x58] sm:$0xff]
        %v1973 = vld [vmem:[%s1960 + $0x60] sm:$0xff]
        %v1974 = vld [vmem:[%s1960 + $0x68] sm:$0xff]
        %v1975 = vld [vmem:[%s1960 + $0x70] sm:$0xff]
        %v1976 = vld [vmem:[%s1960 + $0x78] sm:$0xff]
        %v1977 = vld [vmem:[%s1960 + $0x80] sm:$0xff]
        %v1978 = vld [vmem:[%s1960 + $0x88] sm:$0xff]
        %v1979 = vld [vmem:[%s1960 + $0x90] sm:$0xff]
        %v1980 = vld [vmem:[%s1960 + $0x98] sm:$0xff]
        %v1981 = vld [vmem:[%s1960 + $0xa0] sm:$0xff]
        %v1982 = vld [vmem:[%s1960 + $0xa8] sm:$0xff]
        %v1983 = vld [vmem:[%s1960 + $0xb0] sm:$0xff]
        %v1984 = vld [vmem:[%s1960 + $0xb8] sm:$0xff]
        %v1985 = vld [vmem:[%s1960 + $0xc0] sm:$0xff]
        %v1986 = vld [vmem:[%s1960 + $0xc8] sm:$0xff]
        %v1987 = vld [vmem:[%s1960 + $0xd0] sm:$0xff]
        %v1988 = vld [vmem:[%s1960 + $0xd8] sm:$0xff]
        %v1989 = vld [vmem:[%s1960 + $0xe0] sm:$0xff]
        %v1990 = vld [vmem:[%s1960 + $0xe8] sm:$0xff]
        %v1991 = vld [vmem:[%s1960 + $0xf0] sm:$0xff]
        %v1992 = vld [vmem:[%s1960 + $0xf8] sm:$0xff]
        %s1993 = scalar_lea.vmem %s456, 6 [#allocation4]
        %v1994 = vld [vmem:[%s1993] sm:$0x3]
        %v1996 = vlaneseq
        %v1997 = vshrl.u32 %v1996, 7
        %v1998 = vsub.s32 0, %v1997
        %v1999 = vrot.slane %v1994, %v1998
        %v2000 = vlaneseq
        %v2001 = vshrl.u32 %v2000, 7
        %v2002 = vsub.s32 1, %v2001
        %v2003 = vrot.slane %v1994, %v2002
        %v2038 = vunpack.c.l.b16 %v1961
        %v2039 = vunpack.c.h.b16 %v1961
        %v2040 = vunpack.c.l.b16 %v1962
        %v2041 = vunpack.c.h.b16 %v1962
        %v2042 = vunpack.c.l.b16 %v1963
        %v2043 = vunpack.c.h.b16 %v1963
        %v2044 = vunpack.c.l.b16 %v1964
        %v2045 = vunpack.c.h.b16 %v1964
        %v2046 = vunpack.c.l.b16 %v1965
        %v2047 = vunpack.c.h.b16 %v1965
        %v2048 = vunpack.c.l.b16 %v1966
        %v2049 = vunpack.c.h.b16 %v1966
        %v2050 = vunpack.c.l.b16 %v1967
        %v2051 = vunpack.c.h.b16 %v1967
        %v2052 = vunpack.c.l.b16 %v1968
        %v2053 = vunpack.c.h.b16 %v1968
        %v2054 = vunpack.c.l.b16 %v1969
        %v2055 = vunpack.c.h.b16 %v1969
        %v2056 = vunpack.c.l.b16 %v1970
        %v2057 = vunpack.c.h.b16 %v1970
        %v2058 = vunpack.c.l.b16 %v1971
        %v2059 = vunpack.c.h.b16 %v1971
        %v2060 = vunpack.c.l.b16 %v1972
        %v2061 = vunpack.c.h.b16 %v1972
        %v2062 = vunpack.c.l.b16 %v1973
        %v2063 = vunpack.c.h.b16 %v1973
        %v2064 = vunpack.c.l.b16 %v1974
        %v2065 = vunpack.c.h.b16 %v1974
        %v2066 = vunpack.c.l.b16 %v1975
        %v2067 = vunpack.c.h.b16 %v1975
        %v2068 = vunpack.c.l.b16 %v1976
        %v2069 = vunpack.c.h.b16 %v1976
        %v2070 = vunpack.c.l.b16 %v1977
        %v2071 = vunpack.c.h.b16 %v1977
        %v2072 = vunpack.c.l.b16 %v1978
        %v2073 = vunpack.c.h.b16 %v1978
        %v2074 = vunpack.c.l.b16 %v1979
        %v2075 = vunpack.c.h.b16 %v1979
        %v2076 = vunpack.c.l.b16 %v1980
        %v2077 = vunpack.c.h.b16 %v1980
        %v2078 = vunpack.c.l.b16 %v1981
        %v2079 = vunpack.c.h.b16 %v1981
        %v2080 = vunpack.c.l.b16 %v1982
        %v2081 = vunpack.c.h.b16 %v1982
        %v2082 = vunpack.c.l.b16 %v1983
        %v2083 = vunpack.c.h.b16 %v1983
        %v2084 = vunpack.c.l.b16 %v1984
        %v2085 = vunpack.c.h.b16 %v1984
        %v2086 = vunpack.c.l.b16 %v1985
        %v2087 = vunpack.c.h.b16 %v1985
        %v2088 = vunpack.c.l.b16 %v1986
        %v2089 = vunpack.c.h.b16 %v1986
        %v2090 = vunpack.c.l.b16 %v1987
        %v2091 = vunpack.c.h.b16 %v1987
        %v2092 = vunpack.c.l.b16 %v1988
        %v2093 = vunpack.c.h.b16 %v1988
        %v2094 = vunpack.c.l.b16 %v1989
        %v2095 = vunpack.c.h.b16 %v1989
        %v2096 = vunpack.c.l.b16 %v1990
        %v2097 = vunpack.c.h.b16 %v1990
        %v2098 = vunpack.c.l.b16 %v1991
        %v2099 = vunpack.c.h.b16 %v1991
        %v2100 = vunpack.c.l.b16 %v1992
        %v2101 = vunpack.c.h.b16 %v1992
        %v2102 = vpack.c.b16 %v2040, %v2038
        %v2103 = vpack.c.b16 %v2041, %v2039
        %v2104 = vpack.c.b16 %v2044, %v2042
        %v2105 = vpack.c.b16 %v2045, %v2043
        %v2106 = vpack.c.b16 %v2048, %v2046
        %v2107 = vpack.c.b16 %v2049, %v2047
        %v2108 = vpack.c.b16 %v2052, %v2050
        %v2109 = vpack.c.b16 %v2053, %v2051
        %v2110 = vpack.c.b16 %v2056, %v2054
        %v2111 = vpack.c.b16 %v2057, %v2055
        %v2112 = vpack.c.b16 %v2060, %v2058
        %v2113 = vpack.c.b16 %v2061, %v2059
        %v2114 = vpack.c.b16 %v2064, %v2062
        %v2115 = vpack.c.b16 %v2065, %v2063
        %v2116 = vpack.c.b16 %v2068, %v2066
        %v2117 = vpack.c.b16 %v2069, %v2067
        %v2118 = vpack.c.b16 %v2072, %v2070
        %v2119 = vpack.c.b16 %v2073, %v2071
        %v2120 = vpack.c.b16 %v2076, %v2074
        %v2121 = vpack.c.b16 %v2077, %v2075
        %v2122 = vpack.c.b16 %v2080, %v2078
        %v2123 = vpack.c.b16 %v2081, %v2079
        %v2124 = vpack.c.b16 %v2084, %v2082
        %v2125 = vpack.c.b16 %v2085, %v2083
        %v2126 = vpack.c.b16 %v2088, %v2086
        %v2127 = vpack.c.b16 %v2089, %v2087
        %v2128 = vpack.c.b16 %v2092, %v2090
        %v2129 = vpack.c.b16 %v2093, %v2091
        %v2130 = vpack.c.b16 %v2096, %v2094
        %v2131 = vpack.c.b16 %v2097, %v2095
        %v2132 = vpack.c.b16 %v2100, %v2098
        %v2133 = vpack.c.b16 %v2101, %v2099
        %2166 = vmatprep.subr.bf16.mxu0 %v2103
        %2167 = vmatpush1.bf16.msra.mxu0 %v2102
        %2168 = vmatprep.subr.bf16.mxu0 %v2105
        %2169 = vmatpush1.bf16.msra.mxu0 %v2104
        %2170 = vmatprep.subr.bf16.mxu0 %v2107
        %2171 = vmatpush1.bf16.msra.mxu0 %v2106
        %2172 = vmatprep.subr.bf16.mxu0 %v2109
        %2173 = vmatpush1.bf16.msra.mxu0 %v2108
        %2174 = vmatprep.subr.bf16.mxu0 %v2111
        %2175 = vmatpush1.bf16.msra.mxu0 %v2110
        %2176 = vmatprep.subr.bf16.mxu0 %v2113
        %2177 = vmatpush1.bf16.msra.mxu0 %v2112
        %2178 = vmatprep.subr.bf16.mxu0 %v2115
        %2179 = vmatpush1.bf16.msra.mxu0 %v2114
        %2180 = vmatprep.subr.bf16.mxu0 %v2117
        %2181 = vmatpush1.bf16.msra.mxu0 %v2116
        %2182 = vmatprep.subr.bf16.mxu0 %v2119
        %2183 = vmatpush1.bf16.msra.mxu0 %v2118
        %2184 = vmatprep.subr.bf16.mxu0 %v2121
        %2185 = vmatpush1.bf16.msra.mxu0 %v2120
        %2186 = vmatprep.subr.bf16.mxu0 %v2123
        %2187 = vmatpush1.bf16.msra.mxu0 %v2122
        %2188 = vmatprep.subr.bf16.mxu0 %v2125
        %2189 = vmatpush1.bf16.msra.mxu0 %v2124
        %2190 = vmatprep.subr.bf16.mxu0 %v2127
        %2191 = vmatpush1.bf16.msra.mxu0 %v2126
        %2192 = vmatprep.subr.bf16.mxu0 %v2129
        %2193 = vmatpush1.bf16.msra.mxu0 %v2128
        %2194 = vmatprep.subr.bf16.mxu0 %v2131
        %2195 = vmatpush1.bf16.msra.mxu0 %v2130
        %2196 = vmatprep.subr.bf16.mxu0 %v2133
        %2197 = vmatpush1.bf16.msra.mxu0 %v2132
        %2198 = vmatprep.mubr.bf16.mxu0 %v1959
        %2199 = vmatmul.mubr.bf16.gmra.mrb[0].mxu0 %v1958
        %v2200 = vpop.f32.mrb[0].mxu0
        %v2201 = vadd.f32 %v1999, %v2200
        %v2202 = vpop.f32.mrb[0].mxu0
        %v2203 = vadd.f32 %v2003, %v2202
        %v2204 = vpop.f32.mrb[0].mxu0
        %v2205 = vpop.f32.mrb[0].mxu0
        %2206 = vdwg.mxu0
        %s2207 = scalar_lea.vmem %s574, 8
        %v2208 = vld [vmem:[%s2207] sm:$0x3]
        %s2209 = scalar_lea.vmem %s465, 8 [#allocation6]
        %v2210 = vld [vmem:[%s2209] sm:$0x3]
        %v2211 = vsel %vm743, %v2201, 0.0
        %v2212 = vrot.slane %v2211, 4
        %v2213 = vadd.f32 %v2211, %v2212
        %v2214 = vrot.slane %v2213, 2
        %v2215 = vadd.f32 %v2213, %v2214
        %v2216 = vrot.slane %v2215, 1
        %v2217 = vadd.f32 %v2215, %v2216
        %v2218 = vsel %vm743, %v2203, 0.0
        %v2219 = vrot.slane %v2218, 4
        %v2220 = vadd.f32 %v2218, %v2219
        %v2221 = vrot.slane %v2220, 2
        %v2222 = vadd.f32 %v2220, %v2221
        %v2223 = vrot.slane %v2222, 1
        %v2224 = vadd.f32 %v2222, %v2223
        %v2225 = vmul.f32 %v2217, %v758
        %v2226 = vmul.f32 %v2224, %v758
        %v2227 = vmul.f32 %v2201, %v2201
        %v2228 = vmul.f32 %v2203, %v2203
        %v2229 = vsel %vm743, %v2227, 0.0
        %v2230 = vrot.slane %v2229, 4
        %v2231 = vadd.f32 %v2229, %v2230
        %v2232 = vrot.slane %v2231, 2
        %v2233 = vadd.f32 %v2231, %v2232
        %v2234 = vrot.slane %v2233, 1
        %v2235 = vadd.f32 %v2233, %v2234
        %v2236 = vsel %vm743, %v2228, 0.0
        %v2237 = vrot.slane %v2236, 4
        %v2238 = vadd.f32 %v2236, %v2237
        %v2239 = vrot.slane %v2238, 2
        %v2240 = vadd.f32 %v2238, %v2239
        %v2241 = vrot.slane %v2240, 1
        %v2242 = vadd.f32 %v2240, %v2241
        %v2243 = vmul.f32 %v2235, %v758
        %v2244 = vmul.f32 %v2242, %v758
        %v2245 = vmul.f32 %v2225, %v2225
        %v2246 = vmul.f32 %v2226, %v2226
        %v2247 = vsub.f32 %v2243, %v2245
        %v2248 = vsub.f32 %v2244, %v2246
        %v2249 = vmax.f32 %v2247, 0.0
        %v2250 = vmax.f32 %v2248, 0.0
        %v2251 = vadd.f32 %v2249, 1e-05
        %v2252 = vadd.f32 %v2250, 1e-05
        %v2253 = vrsqrt.pop %v2251
        %v2254 = vrsqrt.pop %v2252
        %v2257 = vcombine.low %v2253, %v2254
        %v2259 = vunpack.c.l.s4 1966171168
        %v2260 = vunpack.c.0.s8 %v2259
        %v2261 = vlaneseq
        %v2262 = vshrl.u32 %v2261, 7
        %v2263 = vsub.s32 %v2260, %v2262
        %v2264 = vrot.slane %v2257, %v2263
        %v2266 = vunpack.c.l.s4 1966171168
        %v2267 = vunpack.c.0.s8 %v2266
        %v2268 = vlaneseq
        %v2269 = vshrl.u32 %v2268, 7
        %v2270 = vsub.s32 %v2267, %v2269
        %v2271 = vrot.slane %v2264, %v2270
        %v2273 = vmul.f32 %v2208, %v2271
        %v2275 = vlaneseq
        %v2276 = vshrl.u32 %v2275, 7
        %v2277 = vsub.s32 0, %v2276
        %v2278 = vrot.slane %v2273, %v2277
        %v2279 = vlaneseq
        %v2280 = vshrl.u32 %v2279, 7
        %v2281 = vsub.s32 1, %v2280
        %v2282 = vrot.slane %v2273, %v2281
        %v2285 = vmul.f32 %v2225, %v2278
        %v2286 = vmul.f32 %v2226, %v2282
        %v2289 = vcombine.low %v2285, %v2286
        %v2291 = vunpack.c.l.s4 1966171168
        %v2292 = vunpack.c.0.s8 %v2291
        %v2293 = vlaneseq
        %v2294 = vshrl.u32 %v2293, 7
        %v2295 = vsub.s32 %v2292, %v2294
        %v2296 = vrot.slane %v2289, %v2295
        %v2298 = vunpack.c.l.s4 1966171168
        %v2299 = vunpack.c.0.s8 %v2298
        %v2300 = vlaneseq
        %v2301 = vshrl.u32 %v2300, 7
        %v2302 = vsub.s32 %v2299, %v2301
        %v2303 = vrot.slane %v2296, %v2302
        %v2305 = vsub.f32 %v2210, %v2303
        %v2306 = vmul.f32 %v2201, %v2278
        %v2307 = vmul.f32 %v2203, %v2282
        %v2309 = vlaneseq
        %v2310 = vshrl.u32 %v2309, 7
        %v2311 = vsub.s32 0, %v2310
        %v2312 = vrot.slane %v2305, %v2311
        %v2313 = vlaneseq
        %v2314 = vshrl.u32 %v2313, 7
        %v2315 = vsub.s32 1, %v2314
        %v2316 = vrot.slane %v2305, %v2315
        %v2319 = vadd.f32 %v2306, %v2312
        %v2320 = vadd.f32 %v2307, %v2316
        %v2321 = vmul.f32 %v2319, 0.01
        %v2322 = vmul.f32 %v2320, 0.01
        %v2323 = vmax.f32 %v2319, %v2321
        %v2324 = vmax.f32 %v2320, %v2322
        %v2325 = vpack.c.bf16 %v2323, %v2323
        %v2326 = vpack.c.bf16 %v2324, %v2324
        %p2327 = scmp.eq.s32.totalorder %s29, 1
        // Predicated region
        $region73: #{pose_generator_forward.3} parent=55 // pred_check
          %p2328 = pneg %p2327
        $region74: #{pose_generator_forward.3} parent=55 // pred_check_branch
          %2330 = sbr.rel (%p2328) target = $region76
        $region75: #{pose_generator_forward.3} parent=55 // pred_region
          %v2331 = vunpack.c.l.bf16 %v2325
          %2332 = vst [vmem:[%s587] sm:$0xf] %v2331
        $region76: #{pose_generator_forward.3} parent=55 // pred_fallthru
          _
        %p2333 = scmp.ne.s32.totalorder %s29, 1
        // Predicated region
        $region77: #{pose_generator_forward.3} parent=55 // pred_check
          %p2334 = pneg %p2333
        $region78: #{pose_generator_forward.3} parent=55 // pred_check_branch
          %2336 = sbr.rel (%p2334) target = $region80
        $region79: #{pose_generator_forward.3} parent=55 // pred_region
          %v2337 = vld [vmem:[%s474] sm:$0xf]
          %v2338 = vld [vmem:[%s474 + $0x4] sm:$0xf]
          %v2339 = vld [vmem:[%s474 + $0x8] sm:$0xf]
          %v2340 = vld [vmem:[%s474 + $0xc] sm:$0xf]
          %v2341 = vld [vmem:[%s474 + $0x10] sm:$0xf]
          %v2342 = vld [vmem:[%s474 + $0x14] sm:$0xf]
          %v2343 = vld [vmem:[%s474 + $0x18] sm:$0xf]
          %v2344 = vld [vmem:[%s474 + $0x1c] sm:$0xf]
          %v2345 = vld [vmem:[%s474 + $0x20] sm:$0xf]
          %v2346 = vld [vmem:[%s474 + $0x24] sm:$0xf]
          %v2347 = vld [vmem:[%s474 + $0x28] sm:$0xf]
          %v2348 = vld [vmem:[%s474 + $0x2c] sm:$0xf]
          %v2349 = vld [vmem:[%s474 + $0x30] sm:$0xf]
          %v2350 = vld [vmem:[%s474 + $0x34] sm:$0xf]
          %v2351 = vld [vmem:[%s474 + $0x38] sm:$0xf]
          %v2352 = vld [vmem:[%s474 + $0x3c] sm:$0xf]
          %v2353 = vld [vmem:[%s474 + $0x40] sm:$0xf]
          %v2354 = vld [vmem:[%s474 + $0x44] sm:$0xf]
          %v2355 = vld [vmem:[%s474 + $0x48] sm:$0xf]
          %v2356 = vld [vmem:[%s474 + $0x4c] sm:$0xf]
          %v2357 = vld [vmem:[%s474 + $0x50] sm:$0xf]
          %v2358 = vld [vmem:[%s474 + $0x54] sm:$0xf]
          %v2359 = vld [vmem:[%s474 + $0x58] sm:$0xf]
          %v2360 = vld [vmem:[%s474 + $0x5c] sm:$0xf]
          %v2361 = vld [vmem:[%s474 + $0x60] sm:$0xf]
          %v2362 = vld [vmem:[%s474 + $0x64] sm:$0xf]
          %v2363 = vld [vmem:[%s474 + $0x68] sm:$0xf]
          %v2364 = vld [vmem:[%s474 + $0x6c] sm:$0xf]
          %v2365 = vld [vmem:[%s474 + $0x70] sm:$0xf]
          %v2366 = vld [vmem:[%s474 + $0x74] sm:$0xf]
          %v2367 = vld [vmem:[%s474 + $0x78] sm:$0xf]
          %v2368 = vld [vmem:[%s474 + $0x7c] sm:$0xf]
          %v2369 = vld [vmem:[%s581] sm:$0x1]
          %v2371 = vlaneseq
          %v2372 = vshrl.u32 %v2371, 7
          %v2373 = vsub.s32 0, %v2372
          %v2374 = vrot.slane %v2369, %v2373
          %v2408 = vunpack.c.l.b16 %v2337
          %v2409 = vunpack.c.l.b16 %v2338
          %v2410 = vunpack.c.l.b16 %v2339
          %v2411 = vunpack.c.l.b16 %v2340
          %v2412 = vunpack.c.l.b16 %v2341
          %v2413 = vunpack.c.l.b16 %v2342
          %v2414 = vunpack.c.l.b16 %v2343
          %v2415 = vunpack.c.l.b16 %v2344
          %v2416 = vunpack.c.l.b16 %v2345
          %v2417 = vunpack.c.l.b16 %v2346
          %v2418 = vunpack.c.l.b16 %v2347
          %v2419 = vunpack.c.l.b16 %v2348
          %v2420 = vunpack.c.l.b16 %v2349
          %v2421 = vunpack.c.l.b16 %v2350
          %v2422 = vunpack.c.l.b16 %v2351
          %v2423 = vunpack.c.l.b16 %v2352
          %v2424 = vunpack.c.l.b16 %v2353
          %v2425 = vunpack.c.l.b16 %v2354
          %v2426 = vunpack.c.l.b16 %v2355
          %v2427 = vunpack.c.l.b16 %v2356
          %v2428 = vunpack.c.l.b16 %v2357
          %v2429 = vunpack.c.l.b16 %v2358
          %v2430 = vunpack.c.l.b16 %v2359
          %v2431 = vunpack.c.l.b16 %v2360
          %v2432 = vunpack.c.l.b16 %v2361
          %v2433 = vunpack.c.l.b16 %v2362
          %v2434 = vunpack.c.l.b16 %v2363
          %v2435 = vunpack.c.l.b16 %v2364
          %v2436 = vunpack.c.l.b16 %v2365
          %v2437 = vunpack.c.l.b16 %v2366
          %v2438 = vunpack.c.l.b16 %v2367
          %v2439 = vunpack.c.l.b16 %v2368
          %v2440 = vpack.c.b16 %v2409, %v2408
          %v2441 = vpack.c.b16 %v2411, %v2410
          %v2442 = vpack.c.b16 %v2413, %v2412
          %v2443 = vpack.c.b16 %v2415, %v2414
          %v2444 = vpack.c.b16 %v2417, %v2416
          %v2445 = vpack.c.b16 %v2419, %v2418
          %v2446 = vpack.c.b16 %v2421, %v2420
          %v2447 = vpack.c.b16 %v2423, %v2422
          %v2448 = vpack.c.b16 %v2425, %v2424
          %v2449 = vpack.c.b16 %v2427, %v2426
          %v2450 = vpack.c.b16 %v2429, %v2428
          %v2451 = vpack.c.b16 %v2431, %v2430
          %v2452 = vpack.c.b16 %v2433, %v2432
          %v2453 = vpack.c.b16 %v2435, %v2434
          %v2454 = vpack.c.b16 %v2437, %v2436
          %v2455 = vpack.c.b16 %v2439, %v2438
          %2472 = vmatprep.subr.bf16.mxu0 0
          %2473 = vmatpush1.bf16.msra.mxu0 %v2440
          %2474 = vmatprep.subr.bf16.mxu0 0
          %2475 = vmatpush1.bf16.msra.mxu0 %v2441
          %2476 = vmatprep.subr.bf16.mxu0 0
          %2477 = vmatpush1.bf16.msra.mxu0 %v2442
          %2478 = vmatprep.subr.bf16.mxu0 0
          %2479 = vmatpush1.bf16.msra.mxu0 %v2443
          %2480 = vmatprep.subr.bf16.mxu0 0
          %2481 = vmatpush1.bf16.msra.mxu0 %v2444
          %2482 = vmatprep.subr.bf16.mxu0 0
          %2483 = vmatpush1.bf16.msra.mxu0 %v2445
          %2484 = vmatprep.subr.bf16.mxu0 0
          %2485 = vmatpush1.bf16.msra.mxu0 %v2446
          %2486 = vmatprep.subr.bf16.mxu0 0
          %2487 = vmatpush1.bf16.msra.mxu0 %v2447
          %2488 = vmatprep.subr.bf16.mxu0 0
          %2489 = vmatpush1.bf16.msra.mxu0 %v2448
          %2490 = vmatprep.subr.bf16.mxu0 0
          %2491 = vmatpush1.bf16.msra.mxu0 %v2449
          %2492 = vmatprep.subr.bf16.mxu0 0
          %2493 = vmatpush1.bf16.msra.mxu0 %v2450
          %2494 = vmatprep.subr.bf16.mxu0 0
          %2495 = vmatpush1.bf16.msra.mxu0 %v2451
          %2496 = vmatprep.subr.bf16.mxu0 0
          %2497 = vmatpush1.bf16.msra.mxu0 %v2452
          %2498 = vmatprep.subr.bf16.mxu0 0
          %2499 = vmatpush1.bf16.msra.mxu0 %v2453
          %2500 = vmatprep.subr.bf16.mxu0 0
          %2501 = vmatpush1.bf16.msra.mxu0 %v2454
          %2502 = vmatprep.subr.bf16.mxu0 0
          %2503 = vmatpush1.bf16.msra.mxu0 %v2455
          %2504 = vmatprep.mubr.bf16.mxu0 %v2326
          %2505 = vmatmul.mubr.bf16.gmra.mrb[0].mxu0 %v2325
          %v2506 = vpop.f32.mrb[0].mxu0
          %v2507 = vadd.f32 %v2374, %v2506
          %v2508 = vpop.f32.mrb[0].mxu0
          %v2509 = vpop.f32.mrb[0].mxu0
          %v2510 = vpop.f32.mrb[0].mxu0
          %2511 = vdwg.mxu0
          %2512 = vst [vmem:[%s587] sm:$0xf] %v2507
        $region80: #{pose_generator_forward.3} parent=55 // pred_fallthru
          _
        %s2513 = scalar_lea.vmem %s553, 4
        %v2514 = vld [vmem:[%s2513] sm:$0xf]
        %v2515 = vpack.c.bf16 %v2514, %v2514
        %s2516 = scalar_lea.vmem %s447, 128 [#allocation2]
        %v2517 = vld [vmem:[%s2516] sm:$0xff]
        %v2518 = vld [vmem:[%s2516 + $0x8] sm:$0xff]
        %v2519 = vld [vmem:[%s2516 + $0x10] sm:$0xff]
        %v2520 = vld [vmem:[%s2516 + $0x18] sm:$0xff]
        %v2521 = vld [vmem:[%s2516 + $0x20] sm:$0xff]
        %v2522 = vld [vmem:[%s2516 + $0x28] sm:$0xff]
        %v2523 = vld [vmem:[%s2516 + $0x30] sm:$0xff]
        %v2524 = vld [vmem:[%s2516 + $0x38] sm:$0xff]
        %v2525 = vld [vmem:[%s2516 + $0x40] sm:$0xff]
        %v2526 = vld [vmem:[%s2516 + $0x48] sm:$0xff]
        %v2527 = vld [vmem:[%s2516 + $0x50] sm:$0xff]
        %v2528 = vld [vmem:[%s2516 + $0x58] sm:$0xff]
        %v2529 = vld [vmem:[%s2516 + $0x60] sm:$0xff]
        %v2530 = vld [vmem:[%s2516 + $0x68] sm:$0xff]
        %v2531 = vld [vmem:[%s2516 + $0x70] sm:$0xff]
        %v2532 = vld [vmem:[%s2516 + $0x78] sm:$0xff]
        %s2533 = scalar_lea.vmem %s560, 2
        %v2534 = vld [vmem:[%s2533] sm:$0x3]
        %v2536 = vlaneseq
        %v2537 = vshrl.u32 %v2536, 7
        %v2538 = vsub.s32 0, %v2537
        %v2539 = vrot.slane %v2534, %v2538
        %v2540 = vlaneseq
        %v2541 = vshrl.u32 %v2540, 7
        %v2542 = vsub.s32 1, %v2541
        %v2543 = vrot.slane %v2534, %v2542
        %v2562 = vunpack.c.l.b16 %v2517
        %v2563 = vunpack.c.h.b16 %v2517
        %v2564 = vunpack.c.l.b16 %v2518
        %v2565 = vunpack.c.h.b16 %v2518
        %v2566 = vunpack.c.l.b16 %v2519
        %v2567 = vunpack.c.h.b16 %v2519
        %v2568 = vunpack.c.l.b16 %v2520
        %v2569 = vunpack.c.h.b16 %v2520
        %v2570 = vunpack.c.l.b16 %v2521
        %v2571 = vunpack.c.h.b16 %v2521
        %v2572 = vunpack.c.l.b16 %v2522
        %v2573 = vunpack.c.h.b16 %v2522
        %v2574 = vunpack.c.l.b16 %v2523
        %v2575 = vunpack.c.h.b16 %v2523
        %v2576 = vunpack.c.l.b16 %v2524
        %v2577 = vunpack.c.h.b16 %v2524
        %v2578 = vunpack.c.l.b16 %v2525
        %v2579 = vunpack.c.h.b16 %v2525
        %v2580 = vunpack.c.l.b16 %v2526
        %v2581 = vunpack.c.h.b16 %v2526
        %v2582 = vunpack.c.l.b16 %v2527
        %v2583 = vunpack.c.h.b16 %v2527
        %v2584 = vunpack.c.l.b16 %v2528
        %v2585 = vunpack.c.h.b16 %v2528
        %v2586 = vunpack.c.l.b16 %v2529
        %v2587 = vunpack.c.h.b16 %v2529
        %v2588 = vunpack.c.l.b16 %v2530
        %v2589 = vunpack.c.h.b16 %v2530
        %v2590 = vunpack.c.l.b16 %v2531
        %v2591 = vunpack.c.h.b16 %v2531
        %v2592 = vunpack.c.l.b16 %v2532
        %v2593 = vunpack.c.h.b16 %v2532
        %v2594 = vpack.c.b16 %v2564, %v2562
        %v2595 = vpack.c.b16 %v2565, %v2563
        %v2596 = vpack.c.b16 %v2568, %v2566
        %v2597 = vpack.c.b16 %v2569, %v2567
        %v2598 = vpack.c.b16 %v2572, %v2570
        %v2599 = vpack.c.b16 %v2573, %v2571
        %v2600 = vpack.c.b16 %v2576, %v2574
        %v2601 = vpack.c.b16 %v2577, %v2575
        %v2602 = vpack.c.b16 %v2580, %v2578
        %v2603 = vpack.c.b16 %v2581, %v2579
        %v2604 = vpack.c.b16 %v2584, %v2582
        %v2605 = vpack.c.b16 %v2585, %v2583
        %v2606 = vpack.c.b16 %v2588, %v2586
        %v2607 = vpack.c.b16 %v2589, %v2587
        %v2608 = vpack.c.b16 %v2592, %v2590
        %v2609 = vpack.c.b16 %v2593, %v2591
        %2626 = vmatprep.subr.bf16.mxu0 %v2595
        %2627 = vmatpush1.bf16.msra.mxu0 %v2594
        %2628 = vmatprep.subr.bf16.mxu0 %v2597
        %2629 = vmatpush1.bf16.msra.mxu0 %v2596
        %2630 = vmatprep.subr.bf16.mxu0 %v2599
        %2631 = vmatpush1.bf16.msra.mxu0 %v2598
        %2632 = vmatprep.subr.bf16.mxu0 %v2601
        %2633 = vmatpush1.bf16.msra.mxu0 %v2600
        %2634 = vmatprep.subr.bf16.mxu0 %v2603
        %2635 = vmatpush1.bf16.msra.mxu0 %v2602
        %2636 = vmatprep.subr.bf16.mxu0 %v2605
        %2637 = vmatpush1.bf16.msra.mxu0 %v2604
        %2638 = vmatprep.subr.bf16.mxu0 %v2607
        %2639 = vmatpush1.bf16.msra.mxu0 %v2606
        %2640 = vmatprep.subr.bf16.mxu0 %v2609
        %2641 = vmatpush1.bf16.msra.mxu0 %v2608
        %2642 = vmatprep.subr.bf16.mxu0 0
        %2643 = vmatpush1.bf16.msra.mxu0 0
        %2644 = vmatprep.subr.bf16.mxu0 0
        %2645 = vmatpush1.bf16.msra.mxu0 0
        %2646 = vmatprep.subr.bf16.mxu0 0
        %2647 = vmatpush1.bf16.msra.mxu0 0
        %2648 = vmatprep.subr.bf16.mxu0 0
        %2649 = vmatpush1.bf16.msra.mxu0 0
        %2650 = vmatprep.subr.bf16.mxu0 0
        %2651 = vmatpush1.bf16.msra.mxu0 0
        %2652 = vmatprep.subr.bf16.mxu0 0
        %2653 = vmatpush1.bf16.msra.mxu0 0
        %2654 = vmatprep.subr.bf16.mxu0 0
        %2655 = vmatpush1.bf16.msra.mxu0 0
        %2656 = vmatprep.subr.bf16.mxu0 0
        %2657 = vmatpush1.bf16.msra.mxu0 0
        %2658 = vmatprep.mubr.bf16.mxu0 0
        %2659 = vmatmul.mubr.bf16.gmra.mrb[0].mxu0 %v2515
        %v2660 = vpop.f32.mrb[0].mxu0
        %v2661 = vadd.f32 %v2539, %v2660
        %v2662 = vpop.f32.mrb[0].mxu0
        %v2663 = vadd.f32 %v2543, %v2662
        %v2664 = vpop.f32.mrb[0].mxu0
        %v2665 = vpop.f32.mrb[0].mxu0
        %2666 = vdwg.mxu0
        %s2667 = scalar_lea.vmem %s574, 10
        %v2668 = vld [vmem:[%s2667] sm:$0x3]
        %s2669 = scalar_lea.vmem %s465, 10 [#allocation6]
        %v2670 = vld [vmem:[%s2669] sm:$0x3]
        %v2671 = vsel %vm743, %v2661, 0.0
        %v2672 = vrot.slane %v2671, 4
        %v2673 = vadd.f32 %v2671, %v2672
        %v2674 = vrot.slane %v2673, 2
        %v2675 = vadd.f32 %v2673, %v2674
        %v2676 = vrot.slane %v2675, 1
        %v2677 = vadd.f32 %v2675, %v2676
        %v2678 = vsel %vm743, %v2663, 0.0
        %v2679 = vrot.slane %v2678, 4
        %v2680 = vadd.f32 %v2678, %v2679
        %v2681 = vrot.slane %v2680, 2
        %v2682 = vadd.f32 %v2680, %v2681
        %v2683 = vrot.slane %v2682, 1
        %v2684 = vadd.f32 %v2682, %v2683
        %v2685 = vmul.f32 %v2677, %v758
        %v2686 = vmul.f32 %v2684, %v758
        %v2687 = vmul.f32 %v2661, %v2661
        %v2688 = vmul.f32 %v2663, %v2663
        %v2689 = vsel %vm743, %v2687, 0.0
        %v2690 = vrot.slane %v2689, 4
        %v2691 = vadd.f32 %v2689, %v2690
        %v2692 = vrot.slane %v2691, 2
        %v2693 = vadd.f32 %v2691, %v2692
        %v2694 = vrot.slane %v2693, 1
        %v2695 = vadd.f32 %v2693, %v2694
        %v2696 = vsel %vm743, %v2688, 0.0
        %v2697 = vrot.slane %v2696, 4
        %v2698 = vadd.f32 %v2696, %v2697
        %v2699 = vrot.slane %v2698, 2
        %v2700 = vadd.f32 %v2698, %v2699
        %v2701 = vrot.slane %v2700, 1
        %v2702 = vadd.f32 %v2700, %v2701
        %v2703 = vmul.f32 %v2695, %v758
        %v2704 = vmul.f32 %v2702, %v758
        %v2705 = vmul.f32 %v2685, %v2685
        %v2706 = vmul.f32 %v2686, %v2686
        %v2707 = vsub.f32 %v2703, %v2705
        %v2708 = vsub.f32 %v2704, %v2706
        %v2709 = vmax.f32 %v2707, 0.0
        %v2710 = vmax.f32 %v2708, 0.0
        %v2711 = vadd.f32 %v2709, 1e-05
        %v2712 = vadd.f32 %v2710, 1e-05
        %v2713 = vrsqrt.pop %v2711
        %v2714 = vrsqrt.pop %v2712
        %v2717 = vcombine.low %v2713, %v2714
        %v2719 = vunpack.c.l.s4 1966171168
        %v2720 = vunpack.c.0.s8 %v2719
        %v2721 = vlaneseq
        %v2722 = vshrl.u32 %v2721, 7
        %v2723 = vsub.s32 %v2720, %v2722
        %v2724 = vrot.slane %v2717, %v2723
        %v2726 = vunpack.c.l.s4 1966171168
        %v2727 = vunpack.c.0.s8 %v2726
        %v2728 = vlaneseq
        %v2729 = vshrl.u32 %v2728, 7
        %v2730 = vsub.s32 %v2727, %v2729
        %v2731 = vrot.slane %v2724, %v2730
        %v2733 = vmul.f32 %v2668, %v2731
        %v2735 = vlaneseq
        %v2736 = vshrl.u32 %v2735, 7
        %v2737 = vsub.s32 0, %v2736
        %v2738 = vrot.slane %v2733, %v2737
        %v2739 = vlaneseq
        %v2740 = vshrl.u32 %v2739, 7
        %v2741 = vsub.s32 1, %v2740
        %v2742 = vrot.slane %v2733, %v2741
        %v2745 = vmul.f32 %v2685, %v2738
        %v2746 = vmul.f32 %v2686, %v2742
        %v2749 = vcombine.low %v2745, %v2746
        %v2751 = vunpack.c.l.s4 1966171168
        %v2752 = vunpack.c.0.s8 %v2751
        %v2753 = vlaneseq
        %v2754 = vshrl.u32 %v2753, 7
        %v2755 = vsub.s32 %v2752, %v2754
        %v2756 = vrot.slane %v2749, %v2755
        %v2758 = vunpack.c.l.s4 1966171168
        %v2759 = vunpack.c.0.s8 %v2758
        %v2760 = vlaneseq
        %v2761 = vshrl.u32 %v2760, 7
        %v2762 = vsub.s32 %v2759, %v2761
        %v2763 = vrot.slane %v2756, %v2762
        %v2765 = vsub.f32 %v2670, %v2763
        %v2766 = vmul.f32 %v2661, %v2738
        %v2767 = vmul.f32 %v2663, %v2742
        %v2769 = vlaneseq
        %v2770 = vshrl.u32 %v2769, 7
        %v2771 = vsub.s32 0, %v2770
        %v2772 = vrot.slane %v2765, %v2771
        %v2773 = vlaneseq
        %v2774 = vshrl.u32 %v2773, 7
        %v2775 = vsub.s32 1, %v2774
        %v2776 = vrot.slane %v2765, %v2775
        %v2779 = vadd.f32 %v2766, %v2772
        %v2780 = vadd.f32 %v2767, %v2776
        %v2781 = vmul.f32 %v2779, 0.01
        %v2782 = vmul.f32 %v2780, 0.01
        %v2783 = vmax.f32 %v2779, %v2781
        %v2784 = vmax.f32 %v2780, %v2782
        %v2785 = vpack.c.bf16 %v2783, %v2783
        %v2786 = vpack.c.bf16 %v2784, %v2784
        %s2787 = scalar_lea.vmem %s567, 1024
        %v2788 = vld [vmem:[%s2787] sm:$0xff]
        %v2789 = vld [vmem:[%s2787 + $0x8] sm:$0xff]
        %v2790 = vld [vmem:[%s2787 + $0x10] sm:$0xff]
        %v2791 = vld [vmem:[%s2787 + $0x18] sm:$0xff]
        %v2792 = vld [vmem:[%s2787 + $0x20] sm:$0xff]
        %v2793 = vld [vmem:[%s2787 + $0x28] sm:$0xff]
        %v2794 = vld [vmem:[%s2787 + $0x30] sm:$0xff]
        %v2795 = vld [vmem:[%s2787 + $0x38] sm:$0xff]
        %v2796 = vld [vmem:[%s2787 + $0x40] sm:$0xff]
        %v2797 = vld [vmem:[%s2787 + $0x48] sm:$0xff]
        %v2798 = vld [vmem:[%s2787 + $0x50] sm:$0xff]
        %v2799 = vld [vmem:[%s2787 + $0x58] sm:$0xff]
        %v2800 = vld [vmem:[%s2787 + $0x60] sm:$0xff]
        %v2801 = vld [vmem:[%s2787 + $0x68] sm:$0xff]
        %v2802 = vld [vmem:[%s2787 + $0x70] sm:$0xff]
        %v2803 = vld [vmem:[%s2787 + $0x78] sm:$0xff]
        %v2804 = vld [vmem:[%s2787 + $0x80] sm:$0xff]
        %v2805 = vld [vmem:[%s2787 + $0x88] sm:$0xff]
        %v2806 = vld [vmem:[%s2787 + $0x90] sm:$0xff]
        %v2807 = vld [vmem:[%s2787 + $0x98] sm:$0xff]
        %v2808 = vld [vmem:[%s2787 + $0xa0] sm:$0xff]
        %v2809 = vld [vmem:[%s2787 + $0xa8] sm:$0xff]
        %v2810 = vld [vmem:[%s2787 + $0xb0] sm:$0xff]
        %v2811 = vld [vmem:[%s2787 + $0xb8] sm:$0xff]
        %v2812 = vld [vmem:[%s2787 + $0xc0] sm:$0xff]
        %v2813 = vld [vmem:[%s2787 + $0xc8] sm:$0xff]
        %v2814 = vld [vmem:[%s2787 + $0xd0] sm:$0xff]
        %v2815 = vld [vmem:[%s2787 + $0xd8] sm:$0xff]
        %v2816 = vld [vmem:[%s2787 + $0xe0] sm:$0xff]
        %v2817 = vld [vmem:[%s2787 + $0xe8] sm:$0xff]
        %v2818 = vld [vmem:[%s2787 + $0xf0] sm:$0xff]
        %v2819 = vld [vmem:[%s2787 + $0xf8] sm:$0xff]
        %s2820 = scalar_lea.vmem %s456, 8 [#allocation4]
        %v2821 = vld [vmem:[%s2820] sm:$0x3]
        %v2823 = vlaneseq
        %v2824 = vshrl.u32 %v2823, 7
        %v2825 = vsub.s32 0, %v2824
        %v2826 = vrot.slane %v2821, %v2825
        %v2827 = vlaneseq
        %v2828 = vshrl.u32 %v2827, 7
        %v2829 = vsub.s32 1, %v2828
        %v2830 = vrot.slane %v2821, %v2829
        %v2865 = vunpack.c.l.b16 %v2788
        %v2866 = vunpack.c.h.b16 %v2788
        %v2867 = vunpack.c.l.b16 %v2789
        %v2868 = vunpack.c.h.b16 %v2789
        %v2869 = vunpack.c.l.b16 %v2790
        %v2870 = vunpack.c.h.b16 %v2790
        %v2871 = vunpack.c.l.b16 %v2791
        %v2872 = vunpack.c.h.b16 %v2791
        %v2873 = vunpack.c.l.b16 %v2792
        %v2874 = vunpack.c.h.b16 %v2792
        %v2875 = vunpack.c.l.b16 %v2793
        %v2876 = vunpack.c.h.b16 %v2793
        %v2877 = vunpack.c.l.b16 %v2794
        %v2878 = vunpack.c.h.b16 %v2794
        %v2879 = vunpack.c.l.b16 %v2795
        %v2880 = vunpack.c.h.b16 %v2795
        %v2881 = vunpack.c.l.b16 %v2796
        %v2882 = vunpack.c.h.b16 %v2796
        %v2883 = vunpack.c.l.b16 %v2797
        %v2884 = vunpack.c.h.b16 %v2797
        %v2885 = vunpack.c.l.b16 %v2798
        %v2886 = vunpack.c.h.b16 %v2798
        %v2887 = vunpack.c.l.b16 %v2799
        %v2888 = vunpack.c.h.b16 %v2799
        %v2889 = vunpack.c.l.b16 %v2800
        %v2890 = vunpack.c.h.b16 %v2800
        %v2891 = vunpack.c.l.b16 %v2801
        %v2892 = vunpack.c.h.b16 %v2801
        %v2893 = vunpack.c.l.b16 %v2802
        %v2894 = vunpack.c.h.b16 %v2802
        %v2895 = vunpack.c.l.b16 %v2803
        %v2896 = vunpack.c.h.b16 %v2803
        %v2897 = vunpack.c.l.b16 %v2804
        %v2898 = vunpack.c.h.b16 %v2804
        %v2899 = vunpack.c.l.b16 %v2805
        %v2900 = vunpack.c.h.b16 %v2805
        %v2901 = vunpack.c.l.b16 %v2806
        %v2902 = vunpack.c.h.b16 %v2806
        %v2903 = vunpack.c.l.b16 %v2807
        %v2904 = vunpack.c.h.b16 %v2807
        %v2905 = vunpack.c.l.b16 %v2808
        %v2906 = vunpack.c.h.b16 %v2808
        %v2907 = vunpack.c.l.b16 %v2809
        %v2908 = vunpack.c.h.b16 %v2809
        %v2909 = vunpack.c.l.b16 %v2810
        %v2910 = vunpack.c.h.b16 %v2810
        %v2911 = vunpack.c.l.b16 %v2811
        %v2912 = vunpack.c.h.b16 %v2811
        %v2913 = vunpack.c.l.b16 %v2812
        %v2914 = vunpack.c.h.b16 %v2812
        %v2915 = vunpack.c.l.b16 %v2813
        %v2916 = vunpack.c.h.b16 %v2813
        %v2917 = vunpack.c.l.b16 %v2814
        %v2918 = vunpack.c.h.b16 %v2814
        %v2919 = vunpack.c.l.b16 %v2815
        %v2920 = vunpack.c.h.b16 %v2815
        %v2921 = vunpack.c.l.b16 %v2816
        %v2922 = vunpack.c.h.b16 %v2816
        %v2923 = vunpack.c.l.b16 %v2817
        %v2924 = vunpack.c.h.b16 %v2817
        %v2925 = vunpack.c.l.b16 %v2818
        %v2926 = vunpack.c.h.b16 %v2818
        %v2927 = vunpack.c.l.b16 %v2819
        %v2928 = vunpack.c.h.b16 %v2819
        %v2929 = vpack.c.b16 %v2867, %v2865
        %v2930 = vpack.c.b16 %v2868, %v2866
        %v2931 = vpack.c.b16 %v2871, %v2869
        %v2932 = vpack.c.b16 %v2872, %v2870
        %v2933 = vpack.c.b16 %v2875, %v2873
        %v2934 = vpack.c.b16 %v2876, %v2874
        %v2935 = vpack.c.b16 %v2879, %v2877
        %v2936 = vpack.c.b16 %v2880, %v2878
        %v2937 = vpack.c.b16 %v2883, %v2881
        %v2938 = vpack.c.b16 %v2884, %v2882
        %v2939 = vpack.c.b16 %v2887, %v2885
        %v2940 = vpack.c.b16 %v2888, %v2886
        %v2941 = vpack.c.b16 %v2891, %v2889
        %v2942 = vpack.c.b16 %v2892, %v2890
        %v2943 = vpack.c.b16 %v2895, %v2893
        %v2944 = vpack.c.b16 %v2896, %v2894
        %v2945 = vpack.c.b16 %v2899, %v2897
        %v2946 = vpack.c.b16 %v2900, %v2898
        %v2947 = vpack.c.b16 %v2903, %v2901
        %v2948 = vpack.c.b16 %v2904, %v2902
        %v2949 = vpack.c.b16 %v2907, %v2905
        %v2950 = vpack.c.b16 %v2908, %v2906
        %v2951 = vpack.c.b16 %v2911, %v2909
        %v2952 = vpack.c.b16 %v2912, %v2910
        %v2953 = vpack.c.b16 %v2915, %v2913
        %v2954 = vpack.c.b16 %v2916, %v2914
        %v2955 = vpack.c.b16 %v2919, %v2917
        %v2956 = vpack.c.b16 %v2920, %v2918
        %v2957 = vpack.c.b16 %v2923, %v2921
        %v2958 = vpack.c.b16 %v2924, %v2922
        %v2959 = vpack.c.b16 %v2927, %v2925
        %v2960 = vpack.c.b16 %v2928, %v2926
        %2993 = vmatprep.subr.bf16.mxu0 %v2930
        %2994 = vmatpush1.bf16.msra.mxu0 %v2929
        %2995 = vmatprep.subr.bf16.mxu0 %v2932
        %2996 = vmatpush1.bf16.msra.mxu0 %v2931
        %2997 = vmatprep.subr.bf16.mxu0 %v2934
        %2998 = vmatpush1.bf16.msra.mxu0 %v2933
        %2999 = vmatprep.subr.bf16.mxu0 %v2936
        %3000 = vmatpush1.bf16.msra.mxu0 %v2935
        %3001 = vmatprep.subr.bf16.mxu0 %v2938
        %3002 = vmatpush1.bf16.msra.mxu0 %v2937
        %3003 = vmatprep.subr.bf16.mxu0 %v2940
        %3004 = vmatpush1.bf16.msra.mxu0 %v2939
        %3005 = vmatprep.subr.bf16.mxu0 %v2942
        %3006 = vmatpush1.bf16.msra.mxu0 %v2941
        %3007 = vmatprep.subr.bf16.mxu0 %v2944
        %3008 = vmatpush1.bf16.msra.mxu0 %v2943
        %3009 = vmatprep.subr.bf16.mxu0 %v2946
        %3010 = vmatpush1.bf16.msra.mxu0 %v2945
        %3011 = vmatprep.subr.bf16.mxu0 %v2948
        %3012 = vmatpush1.bf16.msra.mxu0 %v2947
        %3013 = vmatprep.subr.bf16.mxu0 %v2950
        %3014 = vmatpush1.bf16.msra.mxu0 %v2949
        %3015 = vmatprep.subr.bf16.mxu0 %v2952
        %3016 = vmatpush1.bf16.msra.mxu0 %v2951
        %3017 = vmatprep.subr.bf16.mxu0 %v2954
        %3018 = vmatpush1.bf16.msra.mxu0 %v2953
        %3019 = vmatprep.subr.bf16.mxu0 %v2956
        %3020 = vmatpush1.bf16.msra.mxu0 %v2955
        %3021 = vmatprep.subr.bf16.mxu0 %v2958
        %3022 = vmatpush1.bf16.msra.mxu0 %v2957
        %3023 = vmatprep.subr.bf16.mxu0 %v2960
        %3024 = vmatpush1.bf16.msra.mxu0 %v2959
        %3025 = vmatprep.mubr.bf16.mxu0 %v2786
        %3026 = vmatmul.mubr.bf16.gmra.mrb[0].mxu0 %v2785
        %v3027 = vpop.f32.mrb[0].mxu0
        %v3028 = vadd.f32 %v2826, %v3027
        %v3029 = vpop.f32.mrb[0].mxu0
        %v3030 = vadd.f32 %v2830, %v3029
        %v3031 = vpop.f32.mrb[0].mxu0
        %v3032 = vpop.f32.mrb[0].mxu0
        %3033 = vdwg.mxu0
        %s3034 = scalar_lea.vmem %s574, 12
        %v3035 = vld [vmem:[%s3034] sm:$0x3]
        %s3036 = scalar_lea.vmem %s465, 12 [#allocation6]
        %v3037 = vld [vmem:[%s3036] sm:$0x3]
        %v3038 = vsel %vm743, %v3028, 0.0
        %v3039 = vrot.slane %v3038, 4
        %v3040 = vadd.f32 %v3038, %v3039
        %v3041 = vrot.slane %v3040, 2
        %v3042 = vadd.f32 %v3040, %v3041
        %v3043 = vrot.slane %v3042, 1
        %v3044 = vadd.f32 %v3042, %v3043
        %v3045 = vsel %vm743, %v3030, 0.0
        %v3046 = vrot.slane %v3045, 4
        %v3047 = vadd.f32 %v3045, %v3046
        %v3048 = vrot.slane %v3047, 2
        %v3049 = vadd.f32 %v3047, %v3048
        %v3050 = vrot.slane %v3049, 1
        %v3051 = vadd.f32 %v3049, %v3050
        %v3052 = vmul.f32 %v3044, %v758
        %v3053 = vmul.f32 %v3051, %v758
        %v3054 = vmul.f32 %v3028, %v3028
        %v3055 = vmul.f32 %v3030, %v3030
        %v3056 = vsel %vm743, %v3054, 0.0
        %v3057 = vrot.slane %v3056, 4
        %v3058 = vadd.f32 %v3056, %v3057
        %v3059 = vrot.slane %v3058, 2
        %v3060 = vadd.f32 %v3058, %v3059
        %v3061 = vrot.slane %v3060, 1
        %v3062 = vadd.f32 %v3060, %v3061
        %v3063 = vsel %vm743, %v3055, 0.0
        %v3064 = vrot.slane %v3063, 4
        %v3065 = vadd.f32 %v3063, %v3064
        %v3066 = vrot.slane %v3065, 2
        %v3067 = vadd.f32 %v3065, %v3066
        %v3068 = vrot.slane %v3067, 1
        %v3069 = vadd.f32 %v3067, %v3068
        %v3070 = vmul.f32 %v3062, %v758
        %v3071 = vmul.f32 %v3069, %v758
        %v3072 = vmul.f32 %v3052, %v3052
        %v3073 = vmul.f32 %v3053, %v3053
        %v3074 = vsub.f32 %v3070, %v3072
        %v3075 = vsub.f32 %v3071, %v3073
        %v3076 = vmax.f32 %v3074, 0.0
        %v3077 = vmax.f32 %v3075, 0.0
        %v3078 = vadd.f32 %v3076, 1e-05
        %v3079 = vadd.f32 %v3077, 1e-05
        %v3080 = vrsqrt.pop %v3078
        %v3081 = vrsqrt.pop %v3079
        %v3084 = vcombine.low %v3080, %v3081
        %v3086 = vunpack.c.l.s4 1966171168
        %v3087 = vunpack.c.0.s8 %v3086
        %v3088 = vlaneseq
        %v3089 = vshrl.u32 %v3088, 7
        %v3090 = vsub.s32 %v3087, %v3089
        %v3091 = vrot.slane %v3084, %v3090
        %v3093 = vunpack.c.l.s4 1966171168
        %v3094 = vunpack.c.0.s8 %v3093
        %v3095 = vlaneseq
        %v3096 = vshrl.u32 %v3095, 7
        %v3097 = vsub.s32 %v3094, %v3096
        %v3098 = vrot.slane %v3091, %v3097
        %v3100 = vmul.f32 %v3035, %v3098
        %v3102 = vlaneseq
        %v3103 = vshrl.u32 %v3102, 7
        %v3104 = vsub.s32 0, %v3103
        %v3105 = vrot.slane %v3100, %v3104
        %v3106 = vlaneseq
        %v3107 = vshrl.u32 %v3106, 7
        %v3108 = vsub.s32 1, %v3107
        %v3109 = vrot.slane %v3100, %v3108
        %v3112 = vmul.f32 %v3052, %v3105
        %v3113 = vmul.f32 %v3053, %v3109
        %v3116 = vcombine.low %v3112, %v3113
        %v3118 = vunpack.c.l.s4 1966171168
        %v3119 = vunpack.c.0.s8 %v3118
        %v3120 = vlaneseq
        %v3121 = vshrl.u32 %v3120, 7
        %v3122 = vsub.s32 %v3119, %v3121
        %v3123 = vrot.slane %v3116, %v3122
        %v3125 = vunpack.c.l.s4 1966171168
        %v3126 = vunpack.c.0.s8 %v3125
        %v3127 = vlaneseq
        %v3128 = vshrl.u32 %v3127, 7
        %v3129 = vsub.s32 %v3126, %v3128
        %v3130 = vrot.slane %v3123, %v3129
        %v3132 = vsub.f32 %v3037, %v3130
        %v3133 = vmul.f32 %v3028, %v3105
        %v3134 = vmul.f32 %v3030, %v3109
        %v3136 = vlaneseq
        %v3137 = vshrl.u32 %v3136, 7
        %v3138 = vsub.s32 0, %v3137
        %v3139 = vrot.slane %v3132, %v3138
        %v3140 = vlaneseq
        %v3141 = vshrl.u32 %v3140, 7
        %v3142 = vsub.s32 1, %v3141
        %v3143 = vrot.slane %v3132, %v3142
        %v3146 = vadd.f32 %v3133, %v3139
        %v3147 = vadd.f32 %v3134, %v3143
        %v3148 = vmul.f32 %v3146, 0.01
        %v3149 = vmul.f32 %v3147, 0.01
        %v3150 = vmax.f32 %v3146, %v3148
        %v3151 = vmax.f32 %v3147, %v3149
        %v3152 = vpack.c.bf16 %v3150, %v3150
        %v3153 = vpack.c.bf16 %v3151, %v3151
        %s3154 = scalar_lea.vmem %s567, 1280
        %v3155 = vld [vmem:[%s3154] sm:$0xff]
        %v3156 = vld [vmem:[%s3154 + $0x8] sm:$0xff]
        %v3157 = vld [vmem:[%s3154 + $0x10] sm:$0xff]
        %v3158 = vld [vmem:[%s3154 + $0x18] sm:$0xff]
        %v3159 = vld [vmem:[%s3154 + $0x20] sm:$0xff]
        %v3160 = vld [vmem:[%s3154 + $0x28] sm:$0xff]
        %v3161 = vld [vmem:[%s3154 + $0x30] sm:$0xff]
        %v3162 = vld [vmem:[%s3154 + $0x38] sm:$0xff]
        %v3163 = vld [vmem:[%s3154 + $0x40] sm:$0xff]
        %v3164 = vld [vmem:[%s3154 + $0x48] sm:$0xff]
        %v3165 = vld [vmem:[%s3154 + $0x50] sm:$0xff]
        %v3166 = vld [vmem:[%s3154 + $0x58] sm:$0xff]
        %v3167 = vld [vmem:[%s3154 + $0x60] sm:$0xff]
        %v3168 = vld [vmem:[%s3154 + $0x68] sm:$0xff]
        %v3169 = vld [vmem:[%s3154 + $0x70] sm:$0xff]
        %v3170 = vld [vmem:[%s3154 + $0x78] sm:$0xff]
        %v3171 = vld [vmem:[%s3154 + $0x80] sm:$0xff]
        %v3172 = vld [vmem:[%s3154 + $0x88] sm:$0xff]
        %v3173 = vld [vmem:[%s3154 + $0x90] sm:$0xff]
        %v3174 = vld [vmem:[%s3154 + $0x98] sm:$0xff]
        %v3175 = vld [vmem:[%s3154 + $0xa0] sm:$0xff]
        %v3176 = vld [vmem:[%s3154 + $0xa8] sm:$0xff]
        %v3177 = vld [vmem:[%s3154 + $0xb0] sm:$0xff]
        %v3178 = vld [vmem:[%s3154 + $0xb8] sm:$0xff]
        %v3179 = vld [vmem:[%s3154 + $0xc0] sm:$0xff]
        %v3180 = vld [vmem:[%s3154 + $0xc8] sm:$0xff]
        %v3181 = vld [vmem:[%s3154 + $0xd0] sm:$0xff]
        %v3182 = vld [vmem:[%s3154 + $0xd8] sm:$0xff]
        %v3183 = vld [vmem:[%s3154 + $0xe0] sm:$0xff]
        %v3184 = vld [vmem:[%s3154 + $0xe8] sm:$0xff]
        %v3185 = vld [vmem:[%s3154 + $0xf0] sm:$0xff]
        %v3186 = vld [vmem:[%s3154 + $0xf8] sm:$0xff]
        %s3187 = scalar_lea.vmem %s456, 10 [#allocation4]
        %v3188 = vld [vmem:[%s3187] sm:$0x3]
        %v3190 = vlaneseq
        %v3191 = vshrl.u32 %v3190, 7
        %v3192 = vsub.s32 0, %v3191
        %v3193 = vrot.slane %v3188, %v3192
        %v3194 = vlaneseq
        %v3195 = vshrl.u32 %v3194, 7
        %v3196 = vsub.s32 1, %v3195
        %v3197 = vrot.slane %v3188, %v3196
        %v3232 = vunpack.c.l.b16 %v3155
        %v3233 = vunpack.c.h.b16 %v3155
        %v3234 = vunpack.c.l.b16 %v3156
        %v3235 = vunpack.c.h.b16 %v3156
        %v3236 = vunpack.c.l.b16 %v3157
        %v3237 = vunpack.c.h.b16 %v3157
        %v3238 = vunpack.c.l.b16 %v3158
        %v3239 = vunpack.c.h.b16 %v3158
        %v3240 = vunpack.c.l.b16 %v3159
        %v3241 = vunpack.c.h.b16 %v3159
        %v3242 = vunpack.c.l.b16 %v3160
        %v3243 = vunpack.c.h.b16 %v3160
        %v3244 = vunpack.c.l.b16 %v3161
        %v3245 = vunpack.c.h.b16 %v3161
        %v3246 = vunpack.c.l.b16 %v3162
        %v3247 = vunpack.c.h.b16 %v3162
        %v3248 = vunpack.c.l.b16 %v3163
        %v3249 = vunpack.c.h.b16 %v3163
        %v3250 = vunpack.c.l.b16 %v3164
        %v3251 = vunpack.c.h.b16 %v3164
        %v3252 = vunpack.c.l.b16 %v3165
        %v3253 = vunpack.c.h.b16 %v3165
        %v3254 = vunpack.c.l.b16 %v3166
        %v3255 = vunpack.c.h.b16 %v3166
        %v3256 = vunpack.c.l.b16 %v3167
        %v3257 = vunpack.c.h.b16 %v3167
        %v3258 = vunpack.c.l.b16 %v3168
        %v3259 = vunpack.c.h.b16 %v3168
        %v3260 = vunpack.c.l.b16 %v3169
        %v3261 = vunpack.c.h.b16 %v3169
        %v3262 = vunpack.c.l.b16 %v3170
        %v3263 = vunpack.c.h.b16 %v3170
        %v3264 = vunpack.c.l.b16 %v3171
        %v3265 = vunpack.c.h.b16 %v3171
        %v3266 = vunpack.c.l.b16 %v3172
        %v3267 = vunpack.c.h.b16 %v3172
        %v3268 = vunpack.c.l.b16 %v3173
        %v3269 = vunpack.c.h.b16 %v3173
        %v3270 = vunpack.c.l.b16 %v3174
        %v3271 = vunpack.c.h.b16 %v3174
        %v3272 = vunpack.c.l.b16 %v3175
        %v3273 = vunpack.c.h.b16 %v3175
        %v3274 = vunpack.c.l.b16 %v3176
        %v3275 = vunpack.c.h.b16 %v3176
        %v3276 = vunpack.c.l.b16 %v3177
        %v3277 = vunpack.c.h.b16 %v3177
        %v3278 = vunpack.c.l.b16 %v3178
        %v3279 = vunpack.c.h.b16 %v3178
        %v3280 = vunpack.c.l.b16 %v3179
        %v3281 = vunpack.c.h.b16 %v3179
        %v3282 = vunpack.c.l.b16 %v3180
        %v3283 = vunpack.c.h.b16 %v3180
        %v3284 = vunpack.c.l.b16 %v3181
        %v3285 = vunpack.c.h.b16 %v3181
        %v3286 = vunpack.c.l.b16 %v3182
        %v3287 = vunpack.c.h.b16 %v3182
        %v3288 = vunpack.c.l.b16 %v3183
        %v3289 = vunpack.c.h.b16 %v3183
        %v3290 = vunpack.c.l.b16 %v3184
        %v3291 = vunpack.c.h.b16 %v3184
        %v3292 = vunpack.c.l.b16 %v3185
        %v3293 = vunpack.c.h.b16 %v3185
        %v3294 = vunpack.c.l.b16 %v3186
        %v3295 = vunpack.c.h.b16 %v3186
        %v3296 = vpack.c.b16 %v3234, %v3232
        %v3297 = vpack.c.b16 %v3235, %v3233
        %v3298 = vpack.c.b16 %v3238, %v3236
        %v3299 = vpack.c.b16 %v3239, %v3237
        %v3300 = vpack.c.b16 %v3242, %v3240
        %v3301 = vpack.c.b16 %v3243, %v3241
        %v3302 = vpack.c.b16 %v3246, %v3244
        %v3303 = vpack.c.b16 %v3247, %v3245
        %v3304 = vpack.c.b16 %v3250, %v3248
        %v3305 = vpack.c.b16 %v3251, %v3249
        %v3306 = vpack.c.b16 %v3254, %v3252
        %v3307 = vpack.c.b16 %v3255, %v3253
        %v3308 = vpack.c.b16 %v3258, %v3256
        %v3309 = vpack.c.b16 %v3259, %v3257
        %v3310 = vpack.c.b16 %v3262, %v3260
        %v3311 = vpack.c.b16 %v3263, %v3261
        %v3312 = vpack.c.b16 %v3266, %v3264
        %v3313 = vpack.c.b16 %v3267, %v3265
        %v3314 = vpack.c.b16 %v3270, %v3268
        %v3315 = vpack.c.b16 %v3271, %v3269
        %v3316 = vpack.c.b16 %v3274, %v3272
        %v3317 = vpack.c.b16 %v3275, %v3273
        %v3318 = vpack.c.b16 %v3278, %v3276
        %v3319 = vpack.c.b16 %v3279, %v3277
        %v3320 = vpack.c.b16 %v3282, %v3280
        %v3321 = vpack.c.b16 %v3283, %v3281
        %v3322 = vpack.c.b16 %v3286, %v3284
        %v3323 = vpack.c.b16 %v3287, %v3285
        %v3324 = vpack.c.b16 %v3290, %v3288
        %v3325 = vpack.c.b16 %v3291, %v3289
        %v3326 = vpack.c.b16 %v3294, %v3292
        %v3327 = vpack.c.b16 %v3295, %v3293
        %3360 = vmatprep.subr.bf16.mxu0 %v3297
        %3361 = vmatpush1.bf16.msra.mxu0 %v3296
        %3362 = vmatprep.subr.bf16.mxu0 %v3299
        %3363 = vmatpush1.bf16.msra.mxu0 %v3298
        %3364 = vmatprep.subr.bf16.mxu0 %v3301
        %3365 = vmatpush1.bf16.msra.mxu0 %v3300
        %3366 = vmatprep.subr.bf16.mxu0 %v3303
        %3367 = vmatpush1.bf16.msra.mxu0 %v3302
        %3368 = vmatprep.subr.bf16.mxu0 %v3305
        %3369 = vmatpush1.bf16.msra.mxu0 %v3304
        %3370 = vmatprep.subr.bf16.mxu0 %v3307
        %3371 = vmatpush1.bf16.msra.mxu0 %v3306
        %3372 = vmatprep.subr.bf16.mxu0 %v3309
        %3373 = vmatpush1.bf16.msra.mxu0 %v3308
        %3374 = vmatprep.subr.bf16.mxu0 %v3311
        %3375 = vmatpush1.bf16.msra.mxu0 %v3310
        %3376 = vmatprep.subr.bf16.mxu0 %v3313
        %3377 = vmatpush1.bf16.msra.mxu0 %v3312
        %3378 = vmatprep.subr.bf16.mxu0 %v3315
        %3379 = vmatpush1.bf16.msra.mxu0 %v3314
        %3380 = vmatprep.subr.bf16.mxu0 %v3317
        %3381 = vmatpush1.bf16.msra.mxu0 %v3316
        %3382 = vmatprep.subr.bf16.mxu0 %v3319
        %3383 = vmatpush1.bf16.msra.mxu0 %v3318
        %3384 = vmatprep.subr.bf16.mxu0 %v3321
        %3385 = vmatpush1.bf16.msra.mxu0 %v3320
        %3386 = vmatprep.subr.bf16.mxu0 %v3323
        %3387 = vmatpush1.bf16.msra.mxu0 %v3322
        %3388 = vmatprep.subr.bf16.mxu0 %v3325
        %3389 = vmatpush1.bf16.msra.mxu0 %v3324
        %3390 = vmatprep.subr.bf16.mxu0 %v3327
        %3391 = vmatpush1.bf16.msra.mxu0 %v3326
        %3392 = vmatprep.mubr.bf16.mxu0 %v3153
        %3393 = vmatmul.mubr.bf16.gmra.mrb[0].mxu0 %v3152
        %v3394 = vpop.f32.mrb[0].mxu0
        %v3395 = vadd.f32 %v3193, %v3394
        %v3396 = vpop.f32.mrb[0].mxu0
        %v3397 = vadd.f32 %v3197, %v3396
        %v3398 = vpop.f32.mrb[0].mxu0
        %v3399 = vpop.f32.mrb[0].mxu0
        %3400 = vdwg.mxu0
        %s3401 = scalar_lea.vmem %s574, 14
        %v3402 = vld [vmem:[%s3401] sm:$0x3]
        %s3403 = scalar_lea.vmem %s465, 14 [#allocation6]
        %v3404 = vld [vmem:[%s3403] sm:$0x3]
        %v3405 = vsel %vm743, %v3395, 0.0
        %v3406 = vrot.slane %v3405, 4
        %v3407 = vadd.f32 %v3405, %v3406
        %v3408 = vrot.slane %v3407, 2
        %v3409 = vadd.f32 %v3407, %v3408
        %v3410 = vrot.slane %v3409, 1
        %v3411 = vadd.f32 %v3409, %v3410
        %v3412 = vsel %vm743, %v3397, 0.0
        %v3413 = vrot.slane %v3412, 4
        %v3414 = vadd.f32 %v3412, %v3413
        %v3415 = vrot.slane %v3414, 2
        %v3416 = vadd.f32 %v3414, %v3415
        %v3417 = vrot.slane %v3416, 1
        %v3418 = vadd.f32 %v3416, %v3417
        %v3419 = vmul.f32 %v3411, %v758
        %v3420 = vmul.f32 %v3418, %v758
        %v3421 = vmul.f32 %v3395, %v3395
        %v3422 = vmul.f32 %v3397, %v3397
        %v3423 = vsel %vm743, %v3421, 0.0
        %v3424 = vrot.slane %v3423, 4
        %v3425 = vadd.f32 %v3423, %v3424
        %v3426 = vrot.slane %v3425, 2
        %v3427 = vadd.f32 %v3425, %v3426
        %v3428 = vrot.slane %v3427, 1
        %v3429 = vadd.f32 %v3427, %v3428
        %v3430 = vsel %vm743, %v3422, 0.0
        %v3431 = vrot.slane %v3430, 4
        %v3432 = vadd.f32 %v3430, %v3431
        %v3433 = vrot.slane %v3432, 2
        %v3434 = vadd.f32 %v3432, %v3433
        %v3435 = vrot.slane %v3434, 1
        %v3436 = vadd.f32 %v3434, %v3435
        %v3437 = vmul.f32 %v3429, %v758
        %v3438 = vmul.f32 %v3436, %v758
        %v3439 = vmul.f32 %v3419, %v3419
        %v3440 = vmul.f32 %v3420, %v3420
        %v3441 = vsub.f32 %v3437, %v3439
        %v3442 = vsub.f32 %v3438, %v3440
        %v3443 = vmax.f32 %v3441, 0.0
        %v3444 = vmax.f32 %v3442, 0.0
        %v3445 = vadd.f32 %v3443, 1e-05
        %v3446 = vadd.f32 %v3444, 1e-05
        %v3447 = vrsqrt.pop %v3445
        %v3448 = vrsqrt.pop %v3446
        %v3451 = vcombine.low %v3447, %v3448
        %v3453 = vunpack.c.l.s4 1966171168
        %v3454 = vunpack.c.0.s8 %v3453
        %v3455 = vlaneseq
        %v3456 = vshrl.u32 %v3455, 7
        %v3457 = vsub.s32 %v3454, %v3456
        %v3458 = vrot.slane %v3451, %v3457
        %v3460 = vunpack.c.l.s4 1966171168
        %v3461 = vunpack.c.0.s8 %v3460
        %v3462 = vlaneseq
        %v3463 = vshrl.u32 %v3462, 7
        %v3464 = vsub.s32 %v3461, %v3463
        %v3465 = vrot.slane %v3458, %v3464
        %v3467 = vmul.f32 %v3402, %v3465
        %v3469 = vlaneseq
        %v3470 = vshrl.u32 %v3469, 7
        %v3471 = vsub.s32 0, %v3470
        %v3472 = vrot.slane %v3467, %v3471
        %v3473 = vlaneseq
        %v3474 = vshrl.u32 %v3473, 7
        %v3475 = vsub.s32 1, %v3474
        %v3476 = vrot.slane %v3467, %v3475
        %v3479 = vmul.f32 %v3419, %v3472
        %v3480 = vmul.f32 %v3420, %v3476
        %v3483 = vcombine.low %v3479, %v3480
        %v3485 = vunpack.c.l.s4 1966171168
        %v3486 = vunpack.c.0.s8 %v3485
        %v3487 = vlaneseq
        %v3488 = vshrl.u32 %v3487, 7
        %v3489 = vsub.s32 %v3486, %v3488
        %v3490 = vrot.slane %v3483, %v3489
        %v3492 = vunpack.c.l.s4 1966171168
        %v3493 = vunpack.c.0.s8 %v3492
        %v3494 = vlaneseq
        %v3495 = vshrl.u32 %v3494, 7
        %v3496 = vsub.s32 %v3493, %v3495
        %v3497 = vrot.slane %v3490, %v3496
        %v3499 = vsub.f32 %v3404, %v3497
        %v3500 = vmul.f32 %v3395, %v3472
        %v3501 = vmul.f32 %v3397, %v3476
        %v3503 = vlaneseq
        %v3504 = vshrl.u32 %v3503, 7
        %v3505 = vsub.s32 0, %v3504
        %v3506 = vrot.slane %v3499, %v3505
        %v3507 = vlaneseq
        %v3508 = vshrl.u32 %v3507, 7
        %v3509 = vsub.s32 1, %v3508
        %v3510 = vrot.slane %v3499, %v3509
        %v3513 = vadd.f32 %v3500, %v3506
        %v3514 = vadd.f32 %v3501, %v3510
        %v3515 = vmul.f32 %v3513, 0.01
        %v3516 = vmul.f32 %v3514, 0.01
        %v3517 = vmax.f32 %v3513, %v3515
        %v3518 = vmax.f32 %v3514, %v3516
        %v3519 = vpack.c.bf16 %v3517, %v3517
        %v3520 = vpack.c.bf16 %v3518, %v3518
        %s3521 = scalar_lea.vmem %s567, 1536
        %v3522 = vld [vmem:[%s3521] sm:$0xff]
        %v3523 = vld [vmem:[%s3521 + $0x8] sm:$0xff]
        %v3524 = vld [vmem:[%s3521 + $0x10] sm:$0xff]
        %v3525 = vld [vmem:[%s3521 + $0x18] sm:$0xff]
        %v3526 = vld [vmem:[%s3521 + $0x20] sm:$0xff]
        %v3527 = vld [vmem:[%s3521 + $0x28] sm:$0xff]
        %v3528 = vld [vmem:[%s3521 + $0x30] sm:$0xff]
        %v3529 = vld [vmem:[%s3521 + $0x38] sm:$0xff]
        %v3530 = vld [vmem:[%s3521 + $0x40] sm:$0xff]
        %v3531 = vld [vmem:[%s3521 + $0x48] sm:$0xff]
        %v3532 = vld [vmem:[%s3521 + $0x50] sm:$0xff]
        %v3533 = vld [vmem:[%s3521 + $0x58] sm:$0xff]
        %v3534 = vld [vmem:[%s3521 + $0x60] sm:$0xff]
        %v3535 = vld [vmem:[%s3521 + $0x68] sm:$0xff]
        %v3536 = vld [vmem:[%s3521 + $0x70] sm:$0xff]
        %v3537 = vld [vmem:[%s3521 + $0x78] sm:$0xff]
        %v3538 = vld [vmem:[%s3521 + $0x80] sm:$0xff]
        %v3539 = vld [vmem:[%s3521 + $0x88] sm:$0xff]
        %v3540 = vld [vmem:[%s3521 + $0x90] sm:$0xff]
        %v3541 = vld [vmem:[%s3521 + $0x98] sm:$0xff]
        %v3542 = vld [vmem:[%s3521 + $0xa0] sm:$0xff]
        %v3543 = vld [vmem:[%s3521 + $0xa8] sm:$0xff]
        %v3544 = vld [vmem:[%s3521 + $0xb0] sm:$0xff]
        %v3545 = vld [vmem:[%s3521 + $0xb8] sm:$0xff]
        %v3546 = vld [vmem:[%s3521 + $0xc0] sm:$0xff]
        %v3547 = vld [vmem:[%s3521 + $0xc8] sm:$0xff]
        %v3548 = vld [vmem:[%s3521 + $0xd0] sm:$0xff]
        %v3549 = vld [vmem:[%s3521 + $0xd8] sm:$0xff]
        %v3550 = vld [vmem:[%s3521 + $0xe0] sm:$0xff]
        %v3551 = vld [vmem:[%s3521 + $0xe8] sm:$0xff]
        %v3552 = vld [vmem:[%s3521 + $0xf0] sm:$0xff]
        %v3553 = vld [vmem:[%s3521 + $0xf8] sm:$0xff]
        %s3554 = scalar_lea.vmem %s456, 12 [#allocation4]
        %v3555 = vld [vmem:[%s3554] sm:$0x3]
        %v3557 = vlaneseq
        %v3558 = vshrl.u32 %v3557, 7
        %v3559 = vsub.s32 0, %v3558
        %v3560 = vrot.slane %v3555, %v3559
        %v3561 = vlaneseq
        %v3562 = vshrl.u32 %v3561, 7
        %v3563 = vsub.s32 1, %v3562
        %v3564 = vrot.slane %v3555, %v3563
        %v3599 = vunpack.c.l.b16 %v3522
        %v3600 = vunpack.c.h.b16 %v3522
        %v3601 = vunpack.c.l.b16 %v3523
        %v3602 = vunpack.c.h.b16 %v3523
        %v3603 = vunpack.c.l.b16 %v3524
        %v3604 = vunpack.c.h.b16 %v3524
        %v3605 = vunpack.c.l.b16 %v3525
        %v3606 = vunpack.c.h.b16 %v3525
        %v3607 = vunpack.c.l.b16 %v3526
        %v3608 = vunpack.c.h.b16 %v3526
        %v3609 = vunpack.c.l.b16 %v3527
        %v3610 = vunpack.c.h.b16 %v3527
        %v3611 = vunpack.c.l.b16 %v3528
        %v3612 = vunpack.c.h.b16 %v3528
        %v3613 = vunpack.c.l.b16 %v3529
        %v3614 = vunpack.c.h.b16 %v3529
        %v3615 = vunpack.c.l.b16 %v3530
        %v3616 = vunpack.c.h.b16 %v3530
        %v3617 = vunpack.c.l.b16 %v3531
        %v3618 = vunpack.c.h.b16 %v3531
        %v3619 = vunpack.c.l.b16 %v3532
        %v3620 = vunpack.c.h.b16 %v3532
        %v3621 = vunpack.c.l.b16 %v3533
        %v3622 = vunpack.c.h.b16 %v3533
        %v3623 = vunpack.c.l.b16 %v3534
        %v3624 = vunpack.c.h.b16 %v3534
        %v3625 = vunpack.c.l.b16 %v3535
        %v3626 = vunpack.c.h.b16 %v3535
        %v3627 = vunpack.c.l.b16 %v3536
        %v3628 = vunpack.c.h.b16 %v3536
        %v3629 = vunpack.c.l.b16 %v3537
        %v3630 = vunpack.c.h.b16 %v3537
        %v3631 = vunpack.c.l.b16 %v3538
        %v3632 = vunpack.c.h.b16 %v3538
        %v3633 = vunpack.c.l.b16 %v3539
        %v3634 = vunpack.c.h.b16 %v3539
        %v3635 = vunpack.c.l.b16 %v3540
        %v3636 = vunpack.c.h.b16 %v3540
        %v3637 = vunpack.c.l.b16 %v3541
        %v3638 = vunpack.c.h.b16 %v3541
        %v3639 = vunpack.c.l.b16 %v3542
        %v3640 = vunpack.c.h.b16 %v3542
        %v3641 = vunpack.c.l.b16 %v3543
        %v3642 = vunpack.c.h.b16 %v3543
        %v3643 = vunpack.c.l.b16 %v3544
        %v3644 = vunpack.c.h.b16 %v3544
        %v3645 = vunpack.c.l.b16 %v3545
        %v3646 = vunpack.c.h.b16 %v3545
        %v3647 = vunpack.c.l.b16 %v3546
        %v3648 = vunpack.c.h.b16 %v3546
        %v3649 = vunpack.c.l.b16 %v3547
        %v3650 = vunpack.c.h.b16 %v3547
        %v3651 = vunpack.c.l.b16 %v3548
        %v3652 = vunpack.c.h.b16 %v3548
        %v3653 = vunpack.c.l.b16 %v3549
        %v3654 = vunpack.c.h.b16 %v3549
        %v3655 = vunpack.c.l.b16 %v3550
        %v3656 = vunpack.c.h.b16 %v3550
        %v3657 = vunpack.c.l.b16 %v3551
        %v3658 = vunpack.c.h.b16 %v3551
        %v3659 = vunpack.c.l.b16 %v3552
        %v3660 = vunpack.c.h.b16 %v3552
        %v3661 = vunpack.c.l.b16 %v3553
        %v3662 = vunpack.c.h.b16 %v3553
        %v3663 = vpack.c.b16 %v3601, %v3599
        %v3664 = vpack.c.b16 %v3602, %v3600
        %v3665 = vpack.c.b16 %v3605, %v3603
        %v3666 = vpack.c.b16 %v3606, %v3604
        %v3667 = vpack.c.b16 %v3609, %v3607
        %v3668 = vpack.c.b16 %v3610, %v3608
        %v3669 = vpack.c.b16 %v3613, %v3611
        %v3670 = vpack.c.b16 %v3614, %v3612
        %v3671 = vpack.c.b16 %v3617, %v3615
        %v3672 = vpack.c.b16 %v3618, %v3616
        %v3673 = vpack.c.b16 %v3621, %v3619
        %v3674 = vpack.c.b16 %v3622, %v3620
        %v3675 = vpack.c.b16 %v3625, %v3623
        %v3676 = vpack.c.b16 %v3626, %v3624
        %v3677 = vpack.c.b16 %v3629, %v3627
        %v3678 = vpack.c.b16 %v3630, %v3628
        %v3679 = vpack.c.b16 %v3633, %v3631
        %v3680 = vpack.c.b16 %v3634, %v3632
        %v3681 = vpack.c.b16 %v3637, %v3635
        %v3682 = vpack.c.b16 %v3638, %v3636
        %v3683 = vpack.c.b16 %v3641, %v3639
        %v3684 = vpack.c.b16 %v3642, %v3640
        %v3685 = vpack.c.b16 %v3645, %v3643
        %v3686 = vpack.c.b16 %v3646, %v3644
        %v3687 = vpack.c.b16 %v3649, %v3647
        %v3688 = vpack.c.b16 %v3650, %v3648
        %v3689 = vpack.c.b16 %v3653, %v3651
        %v3690 = vpack.c.b16 %v3654, %v3652
        %v3691 = vpack.c.b16 %v3657, %v3655
        %v3692 = vpack.c.b16 %v3658, %v3656
        %v3693 = vpack.c.b16 %v3661, %v3659
        %v3694 = vpack.c.b16 %v3662, %v3660
        %3727 = vmatprep.subr.bf16.mxu0 %v3664
        %3728 = vmatpush1.bf16.msra.mxu0 %v3663
        %3729 = vmatprep.subr.bf16.mxu0 %v3666
        %3730 = vmatpush1.bf16.msra.mxu0 %v3665
        %3731 = vmatprep.subr.bf16.mxu0 %v3668
        %3732 = vmatpush1.bf16.msra.mxu0 %v3667
        %3733 = vmatprep.subr.bf16.mxu0 %v3670
        %3734 = vmatpush1.bf16.msra.mxu0 %v3669
        %3735 = vmatprep.subr.bf16.mxu0 %v3672
        %3736 = vmatpush1.bf16.msra.mxu0 %v3671
        %3737 = vmatprep.subr.bf16.mxu0 %v3674
        %3738 = vmatpush1.bf16.msra.mxu0 %v3673
        %3739 = vmatprep.subr.bf16.mxu0 %v3676
        %3740 = vmatpush1.bf16.msra.mxu0 %v3675
        %3741 = vmatprep.subr.bf16.mxu0 %v3678
        %3742 = vmatpush1.bf16.msra.mxu0 %v3677
        %3743 = vmatprep.subr.bf16.mxu0 %v3680
        %3744 = vmatpush1.bf16.msra.mxu0 %v3679
        %3745 = vmatprep.subr.bf16.mxu0 %v3682
        %3746 = vmatpush1.bf16.msra.mxu0 %v3681
        %3747 = vmatprep.subr.bf16.mxu0 %v3684
        %3748 = vmatpush1.bf16.msra.mxu0 %v3683
        %3749 = vmatprep.subr.bf16.mxu0 %v3686
        %3750 = vmatpush1.bf16.msra.mxu0 %v3685
        %3751 = vmatprep.subr.bf16.mxu0 %v3688
        %3752 = vmatpush1.bf16.msra.mxu0 %v3687
        %3753 = vmatprep.subr.bf16.mxu0 %v3690
        %3754 = vmatpush1.bf16.msra.mxu0 %v3689
        %3755 = vmatprep.subr.bf16.mxu0 %v3692
        %3756 = vmatpush1.bf16.msra.mxu0 %v3691
        %3757 = vmatprep.subr.bf16.mxu0 %v3694
        %3758 = vmatpush1.bf16.msra.mxu0 %v3693
        %3759 = vmatprep.mubr.bf16.mxu0 %v3520
        %3760 = vmatmul.mubr.bf16.gmra.mrb[0].mxu0 %v3519
        %v3761 = vpop.f32.mrb[0].mxu0
        %v3762 = vadd.f32 %v3560, %v3761
        %v3763 = vpop.f32.mrb[0].mxu0
        %v3764 = vadd.f32 %v3564, %v3763
        %v3765 = vpop.f32.mrb[0].mxu0
        %v3766 = vpop.f32.mrb[0].mxu0
        %3767 = vdwg.mxu0
        %s3768 = scalar_lea.vmem %s574, 16
        %v3769 = vld [vmem:[%s3768] sm:$0x3]
        %s3770 = scalar_lea.vmem %s465, 16 [#allocation6]
        %v3771 = vld [vmem:[%s3770] sm:$0x3]
        %v3772 = vsel %vm743, %v3762, 0.0
        %v3773 = vrot.slane %v3772, 4
        %v3774 = vadd.f32 %v3772, %v3773
        %v3775 = vrot.slane %v3774, 2
        %v3776 = vadd.f32 %v3774, %v3775
        %v3777 = vrot.slane %v3776, 1
        %v3778 = vadd.f32 %v3776, %v3777
        %v3779 = vsel %vm743, %v3764, 0.0
        %v3780 = vrot.slane %v3779, 4
        %v3781 = vadd.f32 %v3779, %v3780
        %v3782 = vrot.slane %v3781, 2
        %v3783 = vadd.f32 %v3781, %v3782
        %v3784 = vrot.slane %v3783, 1
        %v3785 = vadd.f32 %v3783, %v3784
        %v3786 = vmul.f32 %v3778, %v758
        %v3787 = vmul.f32 %v3785, %v758
        %v3788 = vmul.f32 %v3762, %v3762
        %v3789 = vmul.f32 %v3764, %v3764
        %v3790 = vsel %vm743, %v3788, 0.0
        %v3791 = vrot.slane %v3790, 4
        %v3792 = vadd.f32 %v3790, %v3791
        %v3793 = vrot.slane %v3792, 2
        %v3794 = vadd.f32 %v3792, %v3793
        %v3795 = vrot.slane %v3794, 1
        %v3796 = vadd.f32 %v3794, %v3795
        %v3797 = vsel %vm743, %v3789, 0.0
        %v3798 = vrot.slane %v3797, 4
        %v3799 = vadd.f32 %v3797, %v3798
        %v3800 = vrot.slane %v3799, 2
        %v3801 = vadd.f32 %v3799, %v3800
        %v3802 = vrot.slane %v3801, 1
        %v3803 = vadd.f32 %v3801, %v3802
        %v3804 = vmul.f32 %v3796, %v758
        %v3805 = vmul.f32 %v3803, %v758
        %v3806 = vmul.f32 %v3786, %v3786
        %v3807 = vmul.f32 %v3787, %v3787
        %v3808 = vsub.f32 %v3804, %v3806
        %v3809 = vsub.f32 %v3805, %v3807
        %v3810 = vmax.f32 %v3808, 0.0
        %v3811 = vmax.f32 %v3809, 0.0
        %v3812 = vadd.f32 %v3810, 1e-05
        %v3813 = vadd.f32 %v3811, 1e-05
        %v3814 = vrsqrt.pop %v3812
        %v3815 = vrsqrt.pop %v3813
        %v3818 = vcombine.low %v3814, %v3815
        %v3820 = vunpack.c.l.s4 1966171168
        %v3821 = vunpack.c.0.s8 %v3820
        %v3822 = vlaneseq
        %v3823 = vshrl.u32 %v3822, 7
        %v3824 = vsub.s32 %v3821, %v3823
        %v3825 = vrot.slane %v3818, %v3824
        %v3827 = vunpack.c.l.s4 1966171168
        %v3828 = vunpack.c.0.s8 %v3827
        %v3829 = vlaneseq
        %v3830 = vshrl.u32 %v3829, 7
        %v3831 = vsub.s32 %v3828, %v3830
        %v3832 = vrot.slane %v3825, %v3831
        %v3834 = vmul.f32 %v3769, %v3832
        %v3836 = vlaneseq
        %v3837 = vshrl.u32 %v3836, 7
        %v3838 = vsub.s32 0, %v3837
        %v3839 = vrot.slane %v3834, %v3838
        %v3840 = vlaneseq
        %v3841 = vshrl.u32 %v3840, 7
        %v3842 = vsub.s32 1, %v3841
        %v3843 = vrot.slane %v3834, %v3842
        %v3846 = vmul.f32 %v3786, %v3839
        %v3847 = vmul.f32 %v3787, %v3843
        %v3850 = vcombine.low %v3846, %v3847
        %v3852 = vunpack.c.l.s4 1966171168
        %v3853 = vunpack.c.0.s8 %v3852
        %v3854 = vlaneseq
        %v3855 = vshrl.u32 %v3854, 7
        %v3856 = vsub.s32 %v3853, %v3855
        %v3857 = vrot.slane %v3850, %v3856
        %v3859 = vunpack.c.l.s4 1966171168
        %v3860 = vunpack.c.0.s8 %v3859
        %v3861 = vlaneseq
        %v3862 = vshrl.u32 %v3861, 7
        %v3863 = vsub.s32 %v3860, %v3862
        %v3864 = vrot.slane %v3857, %v3863
        %v3866 = vsub.f32 %v3771, %v3864
        %v3867 = vmul.f32 %v3762, %v3839
        %v3868 = vmul.f32 %v3764, %v3843
        %v3870 = vlaneseq
        %v3871 = vshrl.u32 %v3870, 7
        %v3872 = vsub.s32 0, %v3871
        %v3873 = vrot.slane %v3866, %v3872
        %v3874 = vlaneseq
        %v3875 = vshrl.u32 %v3874, 7
        %v3876 = vsub.s32 1, %v3875
        %v3877 = vrot.slane %v3866, %v3876
        %v3880 = vadd.f32 %v3867, %v3873
        %v3881 = vadd.f32 %v3868, %v3877
        %v3882 = vmul.f32 %v3880, 0.01
        %v3883 = vmul.f32 %v3881, 0.01
        %v3884 = vmax.f32 %v3880, %v3882
        %v3885 = vmax.f32 %v3881, %v3883
        %v3886 = vpack.c.bf16 %v3884, %v3884
        %v3887 = vpack.c.bf16 %v3885, %v3885
        %s3888 = scalar_lea.vmem %s567, 1792
        %v3889 = vld [vmem:[%s3888] sm:$0xff]
        %v3890 = vld [vmem:[%s3888 + $0x8] sm:$0xff]
        %v3891 = vld [vmem:[%s3888 + $0x10] sm:$0xff]
        %v3892 = vld [vmem:[%s3888 + $0x18] sm:$0xff]
        %v3893 = vld [vmem:[%s3888 + $0x20] sm:$0xff]
        %v3894 = vld [vmem:[%s3888 + $0x28] sm:$0xff]
        %v3895 = vld [vmem:[%s3888 + $0x30] sm:$0xff]
        %v3896 = vld [vmem:[%s3888 + $0x38] sm:$0xff]
        %v3897 = vld [vmem:[%s3888 + $0x40] sm:$0xff]
        %v3898 = vld [vmem:[%s3888 + $0x48] sm:$0xff]
        %v3899 = vld [vmem:[%s3888 + $0x50] sm:$0xff]
        %v3900 = vld [vmem:[%s3888 + $0x58] sm:$0xff]
        %v3901 = vld [vmem:[%s3888 + $0x60] sm:$0xff]
        %v3902 = vld [vmem:[%s3888 + $0x68] sm:$0xff]
        %v3903 = vld [vmem:[%s3888 + $0x70] sm:$0xff]
        %v3904 = vld [vmem:[%s3888 + $0x78] sm:$0xff]
        %v3905 = vld [vmem:[%s3888 + $0x80] sm:$0xff]
        %v3906 = vld [vmem:[%s3888 + $0x88] sm:$0xff]
        %v3907 = vld [vmem:[%s3888 + $0x90] sm:$0xff]
        %v3908 = vld [vmem:[%s3888 + $0x98] sm:$0xff]
        %v3909 = vld [vmem:[%s3888 + $0xa0] sm:$0xff]
        %v3910 = vld [vmem:[%s3888 + $0xa8] sm:$0xff]
        %v3911 = vld [vmem:[%s3888 + $0xb0] sm:$0xff]
        %v3912 = vld [vmem:[%s3888 + $0xb8] sm:$0xff]
        %v3913 = vld [vmem:[%s3888 + $0xc0] sm:$0xff]
        %v3914 = vld [vmem:[%s3888 + $0xc8] sm:$0xff]
        %v3915 = vld [vmem:[%s3888 + $0xd0] sm:$0xff]
        %v3916 = vld [vmem:[%s3888 + $0xd8] sm:$0xff]
        %v3917 = vld [vmem:[%s3888 + $0xe0] sm:$0xff]
        %v3918 = vld [vmem:[%s3888 + $0xe8] sm:$0xff]
        %v3919 = vld [vmem:[%s3888 + $0xf0] sm:$0xff]
        %v3920 = vld [vmem:[%s3888 + $0xf8] sm:$0xff]
        %s3921 = scalar_lea.vmem %s456, 14 [#allocation4]
        %v3922 = vld [vmem:[%s3921] sm:$0x3]
        %v3924 = vlaneseq
        %v3925 = vshrl.u32 %v3924, 7
        %v3926 = vsub.s32 0, %v3925
        %v3927 = vrot.slane %v3922, %v3926
        %v3928 = vlaneseq
        %v3929 = vshrl.u32 %v3928, 7
        %v3930 = vsub.s32 1, %v3929
        %v3931 = vrot.slane %v3922, %v3930
        %v3966 = vunpack.c.l.b16 %v3889
        %v3967 = vunpack.c.h.b16 %v3889
        %v3968 = vunpack.c.l.b16 %v3890
        %v3969 = vunpack.c.h.b16 %v3890
        %v3970 = vunpack.c.l.b16 %v3891
        %v3971 = vunpack.c.h.b16 %v3891
        %v3972 = vunpack.c.l.b16 %v3892
        %v3973 = vunpack.c.h.b16 %v3892
        %v3974 = vunpack.c.l.b16 %v3893
        %v3975 = vunpack.c.h.b16 %v3893
        %v3976 = vunpack.c.l.b16 %v3894
        %v3977 = vunpack.c.h.b16 %v3894
        %v3978 = vunpack.c.l.b16 %v3895
        %v3979 = vunpack.c.h.b16 %v3895
        %v3980 = vunpack.c.l.b16 %v3896
        %v3981 = vunpack.c.h.b16 %v3896
        %v3982 = vunpack.c.l.b16 %v3897
        %v3983 = vunpack.c.h.b16 %v3897
        %v3984 = vunpack.c.l.b16 %v3898
        %v3985 = vunpack.c.h.b16 %v3898
        %v3986 = vunpack.c.l.b16 %v3899
        %v3987 = vunpack.c.h.b16 %v3899
        %v3988 = vunpack.c.l.b16 %v3900
        %v3989 = vunpack.c.h.b16 %v3900
        %v3990 = vunpack.c.l.b16 %v3901
        %v3991 = vunpack.c.h.b16 %v3901
        %v3992 = vunpack.c.l.b16 %v3902
        %v3993 = vunpack.c.h.b16 %v3902
        %v3994 = vunpack.c.l.b16 %v3903
        %v3995 = vunpack.c.h.b16 %v3903
        %v3996 = vunpack.c.l.b16 %v3904
        %v3997 = vunpack.c.h.b16 %v3904
        %v3998 = vunpack.c.l.b16 %v3905
        %v3999 = vunpack.c.h.b16 %v3905
        %v4000 = vunpack.c.l.b16 %v3906
        %v4001 = vunpack.c.h.b16 %v3906
        %v4002 = vunpack.c.l.b16 %v3907
        %v4003 = vunpack.c.h.b16 %v3907
        %v4004 = vunpack.c.l.b16 %v3908
        %v4005 = vunpack.c.h.b16 %v3908
        %v4006 = vunpack.c.l.b16 %v3909
        %v4007 = vunpack.c.h.b16 %v3909
        %v4008 = vunpack.c.l.b16 %v3910
        %v4009 = vunpack.c.h.b16 %v3910
        %v4010 = vunpack.c.l.b16 %v3911
        %v4011 = vunpack.c.h.b16 %v3911
        %v4012 = vunpack.c.l.b16 %v3912
        %v4013 = vunpack.c.h.b16 %v3912
        %v4014 = vunpack.c.l.b16 %v3913
        %v4015 = vunpack.c.h.b16 %v3913
        %v4016 = vunpack.c.l.b16 %v3914
        %v4017 = vunpack.c.h.b16 %v3914
        %v4018 = vunpack.c.l.b16 %v3915
        %v4019 = vunpack.c.h.b16 %v3915
        %v4020 = vunpack.c.l.b16 %v3916
        %v4021 = vunpack.c.h.b16 %v3916
        %v4022 = vunpack.c.l.b16 %v3917
        %v4023 = vunpack.c.h.b16 %v3917
        %v4024 = vunpack.c.l.b16 %v3918
        %v4025 = vunpack.c.h.b16 %v3918
        %v4026 = vunpack.c.l.b16 %v3919
        %v4027 = vunpack.c.h.b16 %v3919
        %v4028 = vunpack.c.l.b16 %v3920
        %v4029 = vunpack.c.h.b16 %v3920
        %v4030 = vpack.c.b16 %v3968, %v3966
        %v4031 = vpack.c.b16 %v3969, %v3967
        %v4032 = vpack.c.b16 %v3972, %v3970
        %v4033 = vpack.c.b16 %v3973, %v3971
        %v4034 = vpack.c.b16 %v3976, %v3974
        %v4035 = vpack.c.b16 %v3977, %v3975
        %v4036 = vpack.c.b16 %v3980, %v3978
        %v4037 = vpack.c.b16 %v3981, %v3979
        %v4038 = vpack.c.b16 %v3984, %v3982
        %v4039 = vpack.c.b16 %v3985, %v3983
        %v4040 = vpack.c.b16 %v3988, %v3986
        %v4041 = vpack.c.b16 %v3989, %v3987
        %v4042 = vpack.c.b16 %v3992, %v3990
        %v4043 = vpack.c.b16 %v3993, %v3991
        %v4044 = vpack.c.b16 %v3996, %v3994
        %v4045 = vpack.c.b16 %v3997, %v3995
        %v4046 = vpack.c.b16 %v4000, %v3998
        %v4047 = vpack.c.b16 %v4001, %v3999
        %v4048 = vpack.c.b16 %v4004, %v4002
        %v4049 = vpack.c.b16 %v4005, %v4003
        %v4050 = vpack.c.b16 %v4008, %v4006
        %v4051 = vpack.c.b16 %v4009, %v4007
        %v4052 = vpack.c.b16 %v4012, %v4010
        %v4053 = vpack.c.b16 %v4013, %v4011
        %v4054 = vpack.c.b16 %v4016, %v4014
        %v4055 = vpack.c.b16 %v4017, %v4015
        %v4056 = vpack.c.b16 %v4020, %v4018
        %v4057 = vpack.c.b16 %v4021, %v4019
        %v4058 = vpack.c.b16 %v4024, %v4022
        %v4059 = vpack.c.b16 %v4025, %v4023
        %v4060 = vpack.c.b16 %v4028, %v4026
        %v4061 = vpack.c.b16 %v4029, %v4027
        %4094 = vmatprep.subr.bf16.mxu0 %v4031
        %4095 = vmatpush1.bf16.msra.mxu0 %v4030
        %4096 = vmatprep.subr.bf16.mxu0 %v4033
        %4097 = vmatpush1.bf16.msra.mxu0 %v4032
        %4098 = vmatprep.subr.bf16.mxu0 %v4035
        %4099 = vmatpush1.bf16.msra.mxu0 %v4034
        %4100 = vmatprep.subr.bf16.mxu0 %v4037
        %4101 = vmatpush1.bf16.msra.mxu0 %v4036
        %4102 = vmatprep.subr.bf16.mxu0 %v4039
        %4103 = vmatpush1.bf16.msra.mxu0 %v4038
        %4104 = vmatprep.subr.bf16.mxu0 %v4041
        %4105 = vmatpush1.bf16.msra.mxu0 %v4040
        %4106 = vmatprep.subr.bf16.mxu0 %v4043
        %4107 = vmatpush1.bf16.msra.mxu0 %v4042
        %4108 = vmatprep.subr.bf16.mxu0 %v4045
        %4109 = vmatpush1.bf16.msra.mxu0 %v4044
        %4110 = vmatprep.subr.bf16.mxu0 %v4047
        %4111 = vmatpush1.bf16.msra.mxu0 %v4046
        %4112 = vmatprep.subr.bf16.mxu0 %v4049
        %4113 = vmatpush1.bf16.msra.mxu0 %v4048
        %4114 = vmatprep.subr.bf16.mxu0 %v4051
        %4115 = vmatpush1.bf16.msra.mxu0 %v4050
        %4116 = vmatprep.subr.bf16.mxu0 %v4053
        %4117 = vmatpush1.bf16.msra.mxu0 %v4052
        %4118 = vmatprep.subr.bf16.mxu0 %v4055
        %4119 = vmatpush1.bf16.msra.mxu0 %v4054
        %4120 = vmatprep.subr.bf16.mxu0 %v4057
        %4121 = vmatpush1.bf16.msra.mxu0 %v4056
        %4122 = vmatprep.subr.bf16.mxu0 %v4059
        %4123 = vmatpush1.bf16.msra.mxu0 %v4058
        %4124 = vmatprep.subr.bf16.mxu0 %v4061
        %4125 = vmatpush1.bf16.msra.mxu0 %v4060
        %4126 = vmatprep.mubr.bf16.mxu0 %v3887
        %4127 = vmatmul.mubr.bf16.gmra.mrb[0].mxu0 %v3886
        %v4128 = vpop.f32.mrb[0].mxu0
        %v4129 = vadd.f32 %v3927, %v4128
        %v4130 = vpop.f32.mrb[0].mxu0
        %v4131 = vadd.f32 %v3931, %v4130
        %v4132 = vpop.f32.mrb[0].mxu0
        %v4133 = vpop.f32.mrb[0].mxu0
        %4134 = vdwg.mxu0
        %s4135 = scalar_lea.vmem %s574, 18
        %v4136 = vld [vmem:[%s4135] sm:$0x3]
        %s4137 = scalar_lea.vmem %s465, 18 [#allocation6]
        %v4138 = vld [vmem:[%s4137] sm:$0x3]
        %v4139 = vsel %vm743, %v4129, 0.0
        %v4140 = vrot.slane %v4139, 4
        %v4141 = vadd.f32 %v4139, %v4140
        %v4142 = vrot.slane %v4141, 2
        %v4143 = vadd.f32 %v4141, %v4142
        %v4144 = vrot.slane %v4143, 1
        %v4145 = vadd.f32 %v4143, %v4144
        %v4146 = vsel %vm743, %v4131, 0.0
        %v4147 = vrot.slane %v4146, 4
        %v4148 = vadd.f32 %v4146, %v4147
        %v4149 = vrot.slane %v4148, 2
        %v4150 = vadd.f32 %v4148, %v4149
        %v4151 = vrot.slane %v4150, 1
        %v4152 = vadd.f32 %v4150, %v4151
        %v4153 = vmul.f32 %v4145, %v758
        %v4154 = vmul.f32 %v4152, %v758
        %v4155 = vmul.f32 %v4129, %v4129
        %v4156 = vmul.f32 %v4131, %v4131
        %v4157 = vsel %vm743, %v4155, 0.0
        %v4158 = vrot.slane %v4157, 4
        %v4159 = vadd.f32 %v4157, %v4158
        %v4160 = vrot.slane %v4159, 2
        %v4161 = vadd.f32 %v4159, %v4160
        %v4162 = vrot.slane %v4161, 1
        %v4163 = vadd.f32 %v4161, %v4162
        %v4164 = vsel %vm743, %v4156, 0.0
        %v4165 = vrot.slane %v4164, 4
        %v4166 = vadd.f32 %v4164, %v4165
        %v4167 = vrot.slane %v4166, 2
        %v4168 = vadd.f32 %v4166, %v4167
        %v4169 = vrot.slane %v4168, 1
        %v4170 = vadd.f32 %v4168, %v4169
        %v4171 = vmul.f32 %v4163, %v758
        %v4172 = vmul.f32 %v4170, %v758
        %v4173 = vmul.f32 %v4153, %v4153
        %v4174 = vmul.f32 %v4154, %v4154
        %v4175 = vsub.f32 %v4171, %v4173
        %v4176 = vsub.f32 %v4172, %v4174
        %v4177 = vmax.f32 %v4175, 0.0
        %v4178 = vmax.f32 %v4176, 0.0
        %v4179 = vadd.f32 %v4177, 1e-05
        %v4180 = vadd.f32 %v4178, 1e-05
        %v4181 = vrsqrt.pop %v4179
        %v4182 = vrsqrt.pop %v4180
        %v4185 = vcombine.low %v4181, %v4182
        %v4187 = vunpack.c.l.s4 1966171168
        %v4188 = vunpack.c.0.s8 %v4187
        %v4189 = vlaneseq
        %v4190 = vshrl.u32 %v4189, 7
        %v4191 = vsub.s32 %v4188, %v4190
        %v4192 = vrot.slane %v4185, %v4191
        %v4194 = vunpack.c.l.s4 1966171168
        %v4195 = vunpack.c.0.s8 %v4194
        %v4196 = vlaneseq
        %v4197 = vshrl.u32 %v4196, 7
        %v4198 = vsub.s32 %v4195, %v4197
        %v4199 = vrot.slane %v4192, %v4198
        %v4201 = vmul.f32 %v4136, %v4199
        %v4203 = vlaneseq
        %v4204 = vshrl.u32 %v4203, 7
        %v4205 = vsub.s32 0, %v4204
        %v4206 = vrot.slane %v4201, %v4205
        %v4207 = vlaneseq
        %v4208 = vshrl.u32 %v4207, 7
        %v4209 = vsub.s32 1, %v4208
        %v4210 = vrot.slane %v4201, %v4209
        %v4213 = vmul.f32 %v4153, %v4206
        %v4214 = vmul.f32 %v4154, %v4210
        %v4217 = vcombine.low %v4213, %v4214
        %v4219 = vunpack.c.l.s4 1966171168
        %v4220 = vunpack.c.0.s8 %v4219
        %v4221 = vlaneseq
        %v4222 = vshrl.u32 %v4221, 7
        %v4223 = vsub.s32 %v4220, %v4222
        %v4224 = vrot.slane %v4217, %v4223
        %v4226 = vunpack.c.l.s4 1966171168
        %v4227 = vunpack.c.0.s8 %v4226
        %v4228 = vlaneseq
        %v4229 = vshrl.u32 %v4228, 7
        %v4230 = vsub.s32 %v4227, %v4229
        %v4231 = vrot.slane %v4224, %v4230
        %v4233 = vsub.f32 %v4138, %v4231
        %v4234 = vmul.f32 %v4129, %v4206
        %v4235 = vmul.f32 %v4131, %v4210
        %v4237 = vlaneseq
        %v4238 = vshrl.u32 %v4237, 7
        %v4239 = vsub.s32 0, %v4238
        %v4240 = vrot.slane %v4233, %v4239
        %v4241 = vlaneseq
        %v4242 = vshrl.u32 %v4241, 7
        %v4243 = vsub.s32 1, %v4242
        %v4244 = vrot.slane %v4233, %v4243
        %v4247 = vadd.f32 %v4234, %v4240
        %v4248 = vadd.f32 %v4235, %v4244
        %v4249 = vmul.f32 %v4247, 0.01
        %v4250 = vmul.f32 %v4248, 0.01
        %v4251 = vmax.f32 %v4247, %v4249
        %v4252 = vmax.f32 %v4248, %v4250
        %v4253 = vpack.c.bf16 %v4251, %v4251
        %v4254 = vpack.c.bf16 %v4252, %v4252
        %s4255 = scalar_lea.vmem %s474, 128 [#allocation7]
        %v4256 = vld [vmem:[%s4255] sm:$0xf]
        %v4257 = vld [vmem:[%s4255 + $0x4] sm:$0xf]
        %v4258 = vld [vmem:[%s4255 + $0x8] sm:$0xf]
        %v4259 = vld [vmem:[%s4255 + $0xc] sm:$0xf]
        %v4260 = vld [vmem:[%s4255 + $0x10] sm:$0xf]
        %v4261 = vld [vmem:[%s4255 + $0x14] sm:$0xf]
        %v4262 = vld [vmem:[%s4255 + $0x18] sm:$0xf]
        %v4263 = vld [vmem:[%s4255 + $0x1c] sm:$0xf]
        %v4264 = vld [vmem:[%s4255 + $0x20] sm:$0xf]
        %v4265 = vld [vmem:[%s4255 + $0x24] sm:$0xf]
        %v4266 = vld [vmem:[%s4255 + $0x28] sm:$0xf]
        %v4267 = vld [vmem:[%s4255 + $0x2c] sm:$0xf]
        %v4268 = vld [vmem:[%s4255 + $0x30] sm:$0xf]
        %v4269 = vld [vmem:[%s4255 + $0x34] sm:$0xf]
        %v4270 = vld [vmem:[%s4255 + $0x38] sm:$0xf]
        %v4271 = vld [vmem:[%s4255 + $0x3c] sm:$0xf]
        %v4272 = vld [vmem:[%s4255 + $0x40] sm:$0xf]
        %v4273 = vld [vmem:[%s4255 + $0x44] sm:$0xf]
        %v4274 = vld [vmem:[%s4255 + $0x48] sm:$0xf]
        %v4275 = vld [vmem:[%s4255 + $0x4c] sm:$0xf]
        %v4276 = vld [vmem:[%s4255 + $0x50] sm:$0xf]
        %v4277 = vld [vmem:[%s4255 + $0x54] sm:$0xf]
        %v4278 = vld [vmem:[%s4255 + $0x58] sm:$0xf]
        %v4279 = vld [vmem:[%s4255 + $0x5c] sm:$0xf]
        %v4280 = vld [vmem:[%s4255 + $0x60] sm:$0xf]
        %v4281 = vld [vmem:[%s4255 + $0x64] sm:$0xf]
        %v4282 = vld [vmem:[%s4255 + $0x68] sm:$0xf]
        %v4283 = vld [vmem:[%s4255 + $0x6c] sm:$0xf]
        %v4284 = vld [vmem:[%s4255 + $0x70] sm:$0xf]
        %v4285 = vld [vmem:[%s4255 + $0x74] sm:$0xf]
        %v4286 = vld [vmem:[%s4255 + $0x78] sm:$0xf]
        %v4287 = vld [vmem:[%s4255 + $0x7c] sm:$0xf]
        %s4288 = scalar_lea.vmem %s581, 1
        %v4289 = vld [vmem:[%s4288] sm:$0x1]
        %v4291 = vlaneseq
        %v4292 = vshrl.u32 %v4291, 7
        %v4293 = vsub.s32 0, %v4292
        %v4294 = vrot.slane %v4289, %v4293
        %v4328 = vunpack.c.l.b16 %v4256
        %v4329 = vunpack.c.l.b16 %v4257
        %v4330 = vunpack.c.l.b16 %v4258
        %v4331 = vunpack.c.l.b16 %v4259
        %v4332 = vunpack.c.l.b16 %v4260
        %v4333 = vunpack.c.l.b16 %v4261
        %v4334 = vunpack.c.l.b16 %v4262
        %v4335 = vunpack.c.l.b16 %v4263
        %v4336 = vunpack.c.l.b16 %v4264
        %v4337 = vunpack.c.l.b16 %v4265
        %v4338 = vunpack.c.l.b16 %v4266
        %v4339 = vunpack.c.l.b16 %v4267
        %v4340 = vunpack.c.l.b16 %v4268
        %v4341 = vunpack.c.l.b16 %v4269
        %v4342 = vunpack.c.l.b16 %v4270
        %v4343 = vunpack.c.l.b16 %v4271
        %v4344 = vunpack.c.l.b16 %v4272
        %v4345 = vunpack.c.l.b16 %v4273
        %v4346 = vunpack.c.l.b16 %v4274
        %v4347 = vunpack.c.l.b16 %v4275
        %v4348 = vunpack.c.l.b16 %v4276
        %v4349 = vunpack.c.l.b16 %v4277
        %v4350 = vunpack.c.l.b16 %v4278
        %v4351 = vunpack.c.l.b16 %v4279
        %v4352 = vunpack.c.l.b16 %v4280
        %v4353 = vunpack.c.l.b16 %v4281
        %v4354 = vunpack.c.l.b16 %v4282
        %v4355 = vunpack.c.l.b16 %v4283
        %v4356 = vunpack.c.l.b16 %v4284
        %v4357 = vunpack.c.l.b16 %v4285
        %v4358 = vunpack.c.l.b16 %v4286
        %v4359 = vunpack.c.l.b16 %v4287
        %v4360 = vpack.c.b16 %v4329, %v4328
        %v4361 = vpack.c.b16 %v4331, %v4330
        %v4362 = vpack.c.b16 %v4333, %v4332
        %v4363 = vpack.c.b16 %v4335, %v4334
        %v4364 = vpack.c.b16 %v4337, %v4336
        %v4365 = vpack.c.b16 %v4339, %v4338
        %v4366 = vpack.c.b16 %v4341, %v4340
        %v4367 = vpack.c.b16 %v4343, %v4342
        %v4368 = vpack.c.b16 %v4345, %v4344
        %v4369 = vpack.c.b16 %v4347, %v4346
        %v4370 = vpack.c.b16 %v4349, %v4348
        %v4371 = vpack.c.b16 %v4351, %v4350
        %v4372 = vpack.c.b16 %v4353, %v4352
        %v4373 = vpack.c.b16 %v4355, %v4354
        %v4374 = vpack.c.b16 %v4357, %v4356
        %v4375 = vpack.c.b16 %v4359, %v4358
        %4392 = vmatprep.subr.bf16.mxu0 0
        %4393 = vmatpush1.bf16.msra.mxu0 %v4360
        %4394 = vmatprep.subr.bf16.mxu0 0
        %4395 = vmatpush1.bf16.msra.mxu0 %v4361
        %4396 = vmatprep.subr.bf16.mxu0 0
        %4397 = vmatpush1.bf16.msra.mxu0 %v4362
        %4398 = vmatprep.subr.bf16.mxu0 0
        %4399 = vmatpush1.bf16.msra.mxu0 %v4363
        %4400 = vmatprep.subr.bf16.mxu0 0
        %4401 = vmatpush1.bf16.msra.mxu0 %v4364
        %4402 = vmatprep.subr.bf16.mxu0 0
        %4403 = vmatpush1.bf16.msra.mxu0 %v4365
        %4404 = vmatprep.subr.bf16.mxu0 0
        %4405 = vmatpush1.bf16.msra.mxu0 %v4366
        %4406 = vmatprep.subr.bf16.mxu0 0
        %4407 = vmatpush1.bf16.msra.mxu0 %v4367
        %4408 = vmatprep.subr.bf16.mxu0 0
        %4409 = vmatpush1.bf16.msra.mxu0 %v4368
        %4410 = vmatprep.subr.bf16.mxu0 0
        %4411 = vmatpush1.bf16.msra.mxu0 %v4369
        %4412 = vmatprep.subr.bf16.mxu0 0
        %4413 = vmatpush1.bf16.msra.mxu0 %v4370
        %4414 = vmatprep.subr.bf16.mxu0 0
        %4415 = vmatpush1.bf16.msra.mxu0 %v4371
        %4416 = vmatprep.subr.bf16.mxu0 0
        %4417 = vmatpush1.bf16.msra.mxu0 %v4372
        %4418 = vmatprep.subr.bf16.mxu0 0
        %4419 = vmatpush1.bf16.msra.mxu0 %v4373
        %4420 = vmatprep.subr.bf16.mxu0 0
        %4421 = vmatpush1.bf16.msra.mxu0 %v4374
        %4422 = vmatprep.subr.bf16.mxu0 0
        %4423 = vmatpush1.bf16.msra.mxu0 %v4375
        %4424 = vmatprep.mubr.bf16.mxu0 %v4254
        %4425 = vmatmul.mubr.bf16.gmra.mrb[0].mxu0 %v4253
        %v4426 = vpop.f32.mrb[0].mxu0
        %v4427 = vadd.f32 %v4294, %v4426
        %v4428 = vpop.f32.mrb[0].mxu0
        %v4429 = vpop.f32.mrb[0].mxu0
        %v4430 = vpop.f32.mrb[0].mxu0
        %4431 = vdwg.mxu0
        %s4432 = scalar_lea.vmem %s587, 4
        %4433 = vst [vmem:[%s4432] sm:$0xf] %v4427
        %s4434 = smul.u32 2, %s29
        %p4435 = scmp.lt.s32.totalorder %s4434, 3
        %s4436 = scalar_select %p4435, %s4434, 3
        %s4437 = smul.addr %s4436, 4
        %s4438 = scalar_lea.vmem %s9, %s4437
        // Predicated region
        $region81: #{pose_generator_forward.3} parent=55 // pred_check
          %p4439 = pneg %p281
        $region82: #{pose_generator_forward.3} parent=55 // pred_check_branch
          %4441 = sbr.rel (%p4439) target = $region84
        $region83: #{pose_generator_forward.3} parent=55 // pred_region
          %s4442 = smul.u32 2, %s29
        $region84: #{pose_generator_forward.3} parent=55 // pred_fallthru
          _
      $region56: #{pose_generator_forward.3} parent=5 // pred_fallthru
        _
      %p4443 = scmp.le.s32.totalorder 2, %s24
      // Predicated region
      $region85: #{pose_generator_forward.3} parent=5 // pred_check
        %p4444 = pneg %p4443
      $region86: #{pose_generator_forward.3} parent=5 // pred_check_branch
        %4446 = sbr.rel (%p4444) target = $region88
      $region87: #{pose_generator_forward.3} parent=5 // pred_region
        %s4447 = ssub.s32 %s24, 2
        // Predicated region
        $region89: #{pose_generator_forward.3} parent=87 // pred_check
          %p4448 = pneg %p287
        $region90: #{pose_generator_forward.3} parent=87 // pred_check_branch
          %4450 = sbr.rel (%p4448) target = $region92
        $region91: #{pose_generator_forward.3} parent=87 // pred_region
          %s4451 = smul.u32 2, %s30
          %p4452 = scmp.lt.s32.totalorder %s4451, 3
          %s4453 = scalar_select %p4452, %s4451, 3
          %s4454 = smul.addr %s4453, 4
          %s4455 = scalar_lea.vmem %s9, %s4454
        $region92: #{pose_generator_forward.3} parent=87 // pred_fallthru
          _
      $region88: #{pose_generator_forward.3} parent=5 // pred_fallthru
        _
    $region6: #{pose_generator_forward.3} parent=1 // loop_footer
      %s28 = sadd.s32 1, %s24
    $region7: #{pose_generator_forward.3} parent=1 // loop_footer_branch
      %23 = sbr.rel target = $region3
    $region8: #{pose_generator_forward.3} parent=1 // loop_exit
      _
    %4456 = vsyncpa [#allocation3], 1
    %s4457 = scalar_lea.sflag [#allocation3], 1
    %4458 = vsyncpa %s4457, 1
    %4459 = vsyncpa [#allocation5], 1
    %s4460 = scalar_lea.sflag [#allocation5], 1
    %4461 = vsyncpa %s4460, 1
    %4462 = vsyncpa [#allocation8], 1
    %s4463 = scalar_lea.sflag [#allocation8], 1
    %4464 = vsyncpa %s4463, 1

</llo_original>
